<compile_context>
chip_gen: v6e
topology: v6e:2x2x1
jax: 0.10.0
libtpu: 0.0.40
codegen_flags: <defaults>
</compile_context>

<pallas_src>
import functools

import jax
import jax.numpy as jnp
from jax import lax
from jax.experimental import pallas as pl
from jax.experimental.pallas import tpu as pltpu


def transformer_block_kernel(
    xq_ref,                             # (1, TQ, D)  query-row tile (residual/LN/FFN rows)
    xkv_ref,                            # (1, S, D)   full sequence of this batch element (K/V source)
    wq_ref, wk_ref, wv_ref, wo_ref,     # (D, D) bf16 each, already transposed
    g1_ref, b1n_ref,                    # (1, D) f32 layer_norm1 gamma / beta
    w1_ref, b1_ref,                     # (D, H) bf16, (1, H) f32 ffnn first linear
    w2_ref, b2_ref,                     # (H, D) bf16, (1, D) f32 ffnn second linear
    g2_ref, b2n_ref,                    # (1, D) f32 layer_norm2 gamma / beta
    o_ref,                              # (1, TQ, D)
    *, heads, key_dim,
):
    f32 = jnp.float32
    bf16 = jnp.bfloat16

    x = xq_ref[0].astype(f32)                 # (TQ, D)  residual / LN path in f32
    x_bf = x.astype(bf16)
    xkv_bf = xkv_ref[0].astype(bf16)          # (S, D)

    # ---- QKV projections: bf16 MXU operands, f32 accumulation -----------
    q = jnp.dot(x_bf, wq_ref[...], preferred_element_type=f32)     # (TQ, D)
    k = jnp.dot(xkv_bf, wk_ref[...], preferred_element_type=f32)   # (S, D)
    v = jnp.dot(xkv_bf, wv_ref[...], preferred_element_type=f32)   # (S, D)

    # Fold 1/sqrt(key_dim) into q once (one (TQ,D) multiply) instead of
    # scaling every per-head (TQ,S) score matrix.
    q = q * (1.0 / jnp.sqrt(f32(key_dim)))
    q_bf = q.astype(bf16)
    k_bf = k.astype(bf16)
    v_bf = v.astype(bf16)

    # ---- Multi-head attention: per-head loop, output accumulated through
    #      wo slices (sublane-axis slicing) -> no lane-axis concatenate.
    # TODO(synk): for heads > 8 switch to a batched (heads,...) einsum /
    # fori_loop to bound vreg live ranges instead of this static unroll.
    attn = jnp.zeros(x.shape, f32)            # (TQ, D), lane-dense accumulator
    for h in range(heads):                    # heads is static -> unrolled
        lo = h * key_dim
        qh = q_bf[:, lo:lo + key_dim]         # (TQ, kd)
        kh = k_bf[:, lo:lo + key_dim]         # (S,  kd)
        vh = v_bf[:, lo:lo + key_dim]         # (S,  kd)
        # contract over kd of both operands -> no explicit transpose of kh
        s = lax.dot_general(qh, kh, (((1,), (1,)), ((), ())),
                            preferred_element_type=f32)            # (TQ, S)
        s = s - jnp.max(s, axis=-1, keepdims=True)
        p = jnp.exp(s)
        p = p * pl.reciprocal(jnp.sum(p, axis=-1, keepdims=True), approx=True)
        oh = jnp.dot(p.astype(bf16), vh, preferred_element_type=f32)  # (TQ, kd)
        attn = attn + jnp.dot(oh.astype(bf16), wo_ref[lo:lo + key_dim, :],
                              preferred_element_type=f32)             # (TQ, D)

    # ---- Residual + LayerNorm 1 (f32 VPU math) ---------------------------
    y = x + attn
    mu = jnp.mean(y, axis=-1, keepdims=True)
    var = jnp.mean((y - mu) * (y - mu), axis=-1, keepdims=True)
    y = (y - mu) * lax.rsqrt(var + 1e-5)
    y = y * g1_ref[0] + b1n_ref[0]

    # ---- Position-wise FFNN (dropout = identity in eval) -----------------
    h1 = jnp.dot(y.astype(bf16), w1_ref[...], preferred_element_type=f32) + b1_ref[0]
    h1 = jnp.maximum(h1, 0.0)
    z = jnp.dot(h1.astype(bf16), w2_ref[...], preferred_element_type=f32) + b2_ref[0]

    # ---- Residual + LayerNorm 2 -------------------------------------------
    y2 = y + z
    mu2 = jnp.mean(y2, axis=-1, keepdims=True)
    var2 = jnp.mean((y2 - mu2) * (y2 - mu2), axis=-1, keepdims=True)
    y2 = (y2 - mu2) * lax.rsqrt(var2 + 1e-5)
    y2 = y2 * g2_ref[0] + b2n_ref[0]

    o_ref[0] = y2.astype(o_ref.dtype)


def _pick_q_tile(S, target=256):
    """Largest multiple-of-8 divisor of S that is <= target (or S itself)."""
    if S <= target:
        return S
    for t in range(target, 7, -8):
        if S % t == 0:
            return t
    return S


def transformer_block(x, params, *, heads, q_tile=None):
    """x: (B, S, D) float32. params: dict of weights (see init_params)."""
    B, S, D = x.shape
    assert D % heads == 0, "dmodel must be divisible by heads"
    key_dim = D // heads
    TQ = _pick_q_tile(S) if q_tile is None else q_tile
    assert S % TQ == 0 and (TQ % 8 == 0 or TQ == S)
    n_qt = S // TQ

    kernel = functools.partial(transformer_block_kernel, heads=heads, key_dim=key_dim)

    param_order = ["wq", "wk", "wv", "wo", "g1", "b1n", "w1", "b1", "w2", "b2", "g2", "b2n"]
    param_arrays = [params[name] for name in param_order]

    def full_spec(arr):
        nd = arr.ndim
        return pl.BlockSpec(arr.shape, lambda b, qi, _nd=nd: (0,) * _nd)

    # Grid: (batch, query-row tiles) — both parallel so a single batch element
    # still splits across v7x's two TensorCores; query tiling bounds the
    # per-invocation (TQ,S) score and (TQ,H) FFN-hidden VMEM footprint and
    # restores double-buffered DMA overlap of x against compute.
    # (K/V are recomputed per query tile from the full-sequence x block; for
    # large S/TQ ratios a separate K/V projection pass would amortize that.)
    return pl.pallas_call(
        kernel,
        out_shape=jax.ShapeDtypeStruct((B, S, D), jnp.float32),
        grid=(B, n_qt),
        in_specs=[
            pl.BlockSpec((1, TQ, D), lambda b, qi: (b, qi, 0)),   # query-row tile
            pl.BlockSpec((1, S, D), lambda b, qi: (b, 0, 0)),     # full seq for K/V
        ] + [full_spec(p) for p in param_arrays],
        out_specs=pl.BlockSpec((1, TQ, D), lambda b, qi: (b, qi, 0)),
        compiler_params=pltpu.CompilerParams(
            dimension_semantics=("parallel", "parallel"),
            # above the 16/32 MiB scoped defaults, below v7x's 64 MiB physical
            vmem_limit_bytes=48 * 1024 * 1024,
        ),
    )(x, x, *param_arrays)


def init_params(key, dmodel, ffnn_hidden_size):
    """Deterministic synthetic parameters.  Linear weights are stored
    transposed (in_features, out_features) and in bfloat16 (MXU-native,
    halves HBM->VMEM DMA bytes); biases / LayerNorm affine stay f32."""
    ks = jax.random.split(key, 8)
    s = 0.02
    bf = jnp.bfloat16
    return {
        # attention projections (D, D), pre-transposed, bf16
        "wq": (s * jax.random.normal(ks[0], (dmodel, dmodel), jnp.float32)).astype(bf),
        "wk": (s * jax.random.normal(ks[1], (dmodel, dmodel), jnp.float32)).astype(bf),
        "wv": (s * jax.random.normal(ks[2], (dmodel, dmodel), jnp.float32)).astype(bf),
        "wo": (s * jax.random.normal(ks[3], (dmodel, dmodel), jnp.float32)).astype(bf),
        # layer norm 1
        "g1": jnp.ones((1, dmodel), jnp.float32),
        "b1n": jnp.zeros((1, dmodel), jnp.float32),
        # ffnn
        "w1": (s * jax.random.normal(ks[4], (dmodel, ffnn_hidden_size), jnp.float32)).astype(bf),
        "b1": s * jax.random.normal(ks[5], (1, ffnn_hidden_size), jnp.float32),
        "w2": (s * jax.random.normal(ks[6], (ffnn_hidden_size, dmodel), jnp.float32)).astype(bf),
        "b2": s * jax.random.normal(ks[7], (1, dmodel), jnp.float32),
        # layer norm 2
        "g2": jnp.ones((1, dmodel), jnp.float32),
        "b2n": jnp.zeros((1, dmodel), jnp.float32),
    }


def reference(x, params, *, heads):
    """Pure-JAX reference (uses the same bf16 weight values, f32 math)."""
    B, S, D = x.shape
    kd = D // heads

    def ln(y, g, b):
        mu = jnp.mean(y, -1, keepdims=True)
        var = jnp.mean((y - mu) ** 2, -1, keepdims=True)
        return (y - mu) / jnp.sqrt(var + 1e-5) * g + b

    f32 = jnp.float32
    q = x @ params["wq"].astype(f32)
    k = x @ params["wk"].astype(f32)
    v = x @ params["wv"].astype(f32)
    q = q.reshape(B, S, heads, kd).transpose(0, 2, 1, 3)
    k = k.reshape(B, S, heads, kd).transpose(0, 2, 1, 3)
    v = v.reshape(B, S, heads, kd).transpose(0, 2, 1, 3)
    sc = jnp.einsum("bhqd,bhkd->bhqk", q, k) / jnp.sqrt(jnp.float32(kd))
    p = jax.nn.softmax(sc, axis=-1)
    o = jnp.einsum("bhqk,bhkd->bhqd", p, v).transpose(0, 2, 1, 3).reshape(B, S, D)
    attn = o @ params["wo"].astype(f32)
    y = ln(x + attn, params["g1"][0], params["b1n"][0])
    h = jnp.maximum(y @ params["w1"].astype(f32) + params["b1"][0], 0.0)
    z = h @ params["w2"].astype(f32) + params["b2"][0]
    return ln(y + z, params["g2"][0], params["b2n"][0])


if __name__ == "__main__":
    # TODO(synk): nn.Dropout inside the FFNN is treated as identity (eval mode).
    # Hardware-aligned small shapes: D/HID multiples of 128, S multiple of 8.
    B, S, D, HID, HEADS = 2, 128, 128, 256, 4
    key = jax.random.PRNGKey(0)
    kx, kp = jax.random.split(key)
    x = jax.random.normal(kx, (B, S, D), jnp.float32)
    params = init_params(kp, D, HID)

    out = transformer_block(x, params, heads=HEADS)
    out = jax.block_until_ready(out)

    ref = reference(x, params, heads=HEADS)
    assert out.shape == (B, S, D)
    # bf16 MXU operands (f32 accumulation) -> loosened tolerance vs f32 reference
    assert jnp.allclose(out, ref, atol=3e-2, rtol=3e-2), float(jnp.max(jnp.abs(out - ref)))
    print("KERNEL_OK")
</pallas_src>

<mosaic_0001>
module attributes {stable_mosaic.version = 11 : i64} {
  func.func @transformer_block_kernel(%arg0: i32, %arg1: i32, %arg2: memref<1x128x128xf32, #tpu.memory_space<vmem>>, %arg3: memref<1x128x128xf32, #tpu.memory_space<vmem>>, %arg4: memref<128x128xbf16, #tpu.memory_space<vmem>>, %arg5: memref<128x128xbf16, #tpu.memory_space<vmem>>, %arg6: memref<128x128xbf16, #tpu.memory_space<vmem>>, %arg7: memref<128x128xbf16, #tpu.memory_space<vmem>>, %arg8: memref<1x128xf32, #tpu.memory_space<vmem>>, %arg9: memref<1x128xf32, #tpu.memory_space<vmem>>, %arg10: memref<128x256xbf16, #tpu.memory_space<vmem>>, %arg11: memref<1x256xf32, #tpu.memory_space<vmem>>, %arg12: memref<256x128xbf16, #tpu.memory_space<vmem>>, %arg13: memref<1x128xf32, #tpu.memory_space<vmem>>, %arg14: memref<1x128xf32, #tpu.memory_space<vmem>>, %arg15: memref<1x128xf32, #tpu.memory_space<vmem>>, %arg16: memref<1x128x128xf32, #tpu.memory_space<vmem>>) attributes {dimension_semantics = [#tpu.dimension_semantics<parallel>, #tpu.dimension_semantics<parallel>], iteration_bounds = array<i64: 2, 1>, scalar_prefetch = 0 : i64, scratch_operands = 0 : i64, tpu.core_type = #tpu.core_type<tc>, window_params = [{transform_indices = @transform_0, window_bounds = array<i64: 1, 128, 128>}, {transform_indices = @transform_1, window_bounds = array<i64: 1, 128, 128>}, {pipeline_mode = #tpu.pipeline_mode<synchronous>, transform_indices = @transform_2, window_bounds = array<i64: 128, 128>}, {pipeline_mode = #tpu.pipeline_mode<synchronous>, transform_indices = @transform_3, window_bounds = array<i64: 128, 128>}, {pipeline_mode = #tpu.pipeline_mode<synchronous>, transform_indices = @transform_4, window_bounds = array<i64: 128, 128>}, {pipeline_mode = #tpu.pipeline_mode<synchronous>, transform_indices = @transform_5, window_bounds = array<i64: 128, 128>}, {pipeline_mode = #tpu.pipeline_mode<synchronous>, transform_indices = @transform_6, window_bounds = array<i64: 1, 128>}, {pipeline_mode = #tpu.pipeline_mode<synchronous>, transform_indices = @transform_7, window_bounds = array<i64: 1, 128>}, {pipeline_mode = #tpu.pipeline_mode<synchronous>, transform_indices = @transform_8, window_bounds = array<i64: 128, 256>}, {pipeline_mode = #tpu.pipeline_mode<synchronous>, transform_indices = @transform_9, window_bounds = array<i64: 1, 256>}, {pipeline_mode = #tpu.pipeline_mode<synchronous>, transform_indices = @transform_10, window_bounds = array<i64: 256, 128>}, {pipeline_mode = #tpu.pipeline_mode<synchronous>, transform_indices = @transform_11, window_bounds = array<i64: 1, 128>}, {pipeline_mode = #tpu.pipeline_mode<synchronous>, transform_indices = @transform_12, window_bounds = array<i64: 1, 128>}, {pipeline_mode = #tpu.pipeline_mode<synchronous>, transform_indices = @transform_13, window_bounds = array<i64: 1, 128>}, {transform_indices = @transform_14, window_bounds = array<i64: 1, 128, 128>}]} {
    %c0 = arith.constant 0 : index
    %c0_0 = arith.constant 0 : index
    %c0_1 = arith.constant 0 : index
    %0 = vector.load %arg2[%c0, %c0_0, %c0_1] : memref<1x128x128xf32, #tpu.memory_space<vmem>>, vector<1x128x128xf32>
    %1 = vector.shape_cast %0 : vector<1x128x128xf32> to vector<128x128xf32>
    %2 = arith.truncf %1 : vector<128x128xf32> to vector<128x128xbf16>
    %c0_2 = arith.constant 0 : index
    %c0_3 = arith.constant 0 : index
    %c0_4 = arith.constant 0 : index
    %3 = vector.load %arg3[%c0_2, %c0_3, %c0_4] : memref<1x128x128xf32, #tpu.memory_space<vmem>>, vector<1x128x128xf32>
    %4 = vector.shape_cast %3 : vector<1x128x128xf32> to vector<128x128xf32>
    %5 = arith.truncf %4 : vector<128x128xf32> to vector<128x128xbf16>
    %c0_5 = arith.constant 0 : index
    %c0_6 = arith.constant 0 : index
    %6 = vector.load %arg4[%c0_5, %c0_6] : memref<128x128xbf16, #tpu.memory_space<vmem>>, vector<128x128xbf16>
    %cst = arith.constant dense<0.000000e+00> : vector<128x128xf32>
    %7 = tpu.matmul %2, %6, %cst {dimension_numbers = #tpu.dot_dimension_numbers<[1], [0], [0], [1], [0, 0, 1, 1], [], []>} : vector<128x128xbf16>, vector<128x128xbf16>, vector<128x128xf32> -> vector<128x128xf32>
    %c0_7 = arith.constant 0 : index
    %c0_8 = arith.constant 0 : index
    %8 = vector.load %arg5[%c0_7, %c0_8] : memref<128x128xbf16, #tpu.memory_space<vmem>>, vector<128x128xbf16>
    %cst_9 = arith.constant dense<0.000000e+00> : vector<128x128xf32>
    %9 = tpu.matmul %5, %8, %cst_9 {dimension_numbers = #tpu.dot_dimension_numbers<[1], [0], [0], [1], [0, 0, 1, 1], [], []>} : vector<128x128xbf16>, vector<128x128xbf16>, vector<128x128xf32> -> vector<128x128xf32>
    %c0_10 = arith.constant 0 : index
    %c0_11 = arith.constant 0 : index
    %10 = vector.load %arg6[%c0_10, %c0_11] : memref<128x128xbf16, #tpu.memory_space<vmem>>, vector<128x128xbf16>
    %cst_12 = arith.constant dense<0.000000e+00> : vector<128x128xf32>
    %11 = tpu.matmul %5, %10, %cst_12 {dimension_numbers = #tpu.dot_dimension_numbers<[1], [0], [0], [1], [0, 0, 1, 1], [], []>} : vector<128x128xbf16>, vector<128x128xbf16>, vector<128x128xf32> -> vector<128x128xf32>
    %cst_13 = arith.constant 3.200000e+01 : f32
    %12 = math.sqrt %cst_13 : f32
    %cst_14 = arith.constant 1.000000e+00 : f32
    %13 = arith.divf %cst_14, %12 : f32
    %14 = vector.broadcast %13 : f32 to vector<128x128xf32>
    %15 = arith.mulf %7, %14 : vector<128x128xf32>
    %16 = arith.truncf %15 : vector<128x128xf32> to vector<128x128xbf16>
    %17 = arith.truncf %9 : vector<128x128xf32> to vector<128x128xbf16>
    %18 = arith.truncf %11 : vector<128x128xf32> to vector<128x128xbf16>
    %cst_15 = arith.constant 0.000000e+00 : f32
    %19 = vector.broadcast %cst_15 : f32 to vector<128x128xf32>
    %20 = vector.extract_strided_slice %16 {offsets = [0, 0], sizes = [128, 32], strides = [1, 1]} : vector<128x128xbf16> to vector<128x32xbf16>
    %21 = vector.extract_strided_slice %17 {offsets = [0, 0], sizes = [128, 32], strides = [1, 1]} : vector<128x128xbf16> to vector<128x32xbf16>
    %22 = vector.extract_strided_slice %18 {offsets = [0, 0], sizes = [128, 32], strides = [1, 1]} : vector<128x128xbf16> to vector<128x32xbf16>
    %cst_16 = arith.constant dense<0.000000e+00> : vector<128x128xf32>
    %23 = tpu.matmul %20, %21, %cst_16 {dimension_numbers = #tpu.dot_dimension_numbers<[1], [1], [0], [0], [0, 0, 1, 0], [], []>} : vector<128x32xbf16>, vector<128x32xbf16>, vector<128x128xf32> -> vector<128x128xf32>
    %cst_17 = arith.constant dense<0xFF800000> : vector<128xf32>
    %24 = vector.multi_reduction <maximumf>, %23, %cst_17 [1] : vector<128x128xf32> to vector<128xf32>
    %25 = vector.shape_cast %24 : vector<128xf32> to vector<128x1xf32>
    %26 = vector.broadcast %25 : vector<128x1xf32> to vector<128x128xf32>
    %27 = arith.subf %23, %26 : vector<128x128xf32>
    %28 = math.exp %27 : vector<128x128xf32>
    %cst_18 = arith.constant dense<0.000000e+00> : vector<128xf32>
    %29 = vector.multi_reduction <add>, %28, %cst_18 [1] : vector<128x128xf32> to vector<128xf32>
    %30 = vector.shape_cast %29 : vector<128xf32> to vector<128x1xf32>
    %31 = tpu.reciprocal %30 {approx = true} : vector<128x1xf32> -> vector<128x1xf32>
    %32 = vector.broadcast %31 : vector<128x1xf32> to vector<128x128xf32>
    %33 = arith.mulf %28, %32 : vector<128x128xf32>
    %34 = arith.truncf %33 : vector<128x128xf32> to vector<128x128xbf16>
    %cst_19 = arith.constant dense<0.000000e+00> : vector<128x32xf32>
    %35 = tpu.matmul %34, %22, %cst_19 {dimension_numbers = #tpu.dot_dimension_numbers<[1], [0], [0], [1], [0, 0, 1, 1], [], []>} : vector<128x128xbf16>, vector<128x32xbf16>, vector<128x32xf32> -> vector<128x32xf32>
    %36 = arith.truncf %35 : vector<128x32xf32> to vector<128x32xbf16>
    %c0_20 = arith.constant 0 : index
    %c0_21 = arith.constant 0 : index
    %37 = vector.load %arg7[%c0_20, %c0_21] : memref<128x128xbf16, #tpu.memory_space<vmem>>, vector<32x128xbf16>
    %cst_22 = arith.constant dense<0.000000e+00> : vector<128x128xf32>
    %38 = tpu.matmul %36, %37, %cst_22 {dimension_numbers = #tpu.dot_dimension_numbers<[1], [0], [0], [1], [0, 0, 1, 1], [], []>} : vector<128x32xbf16>, vector<32x128xbf16>, vector<128x128xf32> -> vector<128x128xf32>
    %39 = arith.addf %19, %38 : vector<128x128xf32>
    %40 = vector.extract_strided_slice %16 {offsets = [0, 32], sizes = [128, 32], strides = [1, 1]} : vector<128x128xbf16> to vector<128x32xbf16>
    %41 = vector.extract_strided_slice %17 {offsets = [0, 32], sizes = [128, 32], strides = [1, 1]} : vector<128x128xbf16> to vector<128x32xbf16>
    %42 = vector.extract_strided_slice %18 {offsets = [0, 32], sizes = [128, 32], strides = [1, 1]} : vector<128x128xbf16> to vector<128x32xbf16>
    %cst_23 = arith.constant dense<0.000000e+00> : vector<128x128xf32>
    %43 = tpu.matmul %40, %41, %cst_23 {dimension_numbers = #tpu.dot_dimension_numbers<[1], [1], [0], [0], [0, 0, 1, 0], [], []>} : vector<128x32xbf16>, vector<128x32xbf16>, vector<128x128xf32> -> vector<128x128xf32>
    %cst_24 = arith.constant dense<0xFF800000> : vector<128xf32>
    %44 = vector.multi_reduction <maximumf>, %43, %cst_24 [1] : vector<128x128xf32> to vector<128xf32>
    %45 = vector.shape_cast %44 : vector<128xf32> to vector<128x1xf32>
    %46 = vector.broadcast %45 : vector<128x1xf32> to vector<128x128xf32>
    %47 = arith.subf %43, %46 : vector<128x128xf32>
    %48 = math.exp %47 : vector<128x128xf32>
    %cst_25 = arith.constant dense<0.000000e+00> : vector<128xf32>
    %49 = vector.multi_reduction <add>, %48, %cst_25 [1] : vector<128x128xf32> to vector<128xf32>
    %50 = vector.shape_cast %49 : vector<128xf32> to vector<128x1xf32>
    %51 = tpu.reciprocal %50 {approx = true} : vector<128x1xf32> -> vector<128x1xf32>
    %52 = vector.broadcast %51 : vector<128x1xf32> to vector<128x128xf32>
    %53 = arith.mulf %48, %52 : vector<128x128xf32>
    %54 = arith.truncf %53 : vector<128x128xf32> to vector<128x128xbf16>
    %cst_26 = arith.constant dense<0.000000e+00> : vector<128x32xf32>
    %55 = tpu.matmul %54, %42, %cst_26 {dimension_numbers = #tpu.dot_dimension_numbers<[1], [0], [0], [1], [0, 0, 1, 1], [], []>} : vector<128x128xbf16>, vector<128x32xbf16>, vector<128x32xf32> -> vector<128x32xf32>
    %56 = arith.truncf %55 : vector<128x32xf32> to vector<128x32xbf16>
    %c32 = arith.constant 32 : index
    %c0_27 = arith.constant 0 : index
    %57 = vector.load %arg7[%c32, %c0_27] : memref<128x128xbf16, #tpu.memory_space<vmem>>, vector<32x128xbf16>
    %cst_28 = arith.constant dense<0.000000e+00> : vector<128x128xf32>
    %58 = tpu.matmul %56, %57, %cst_28 {dimension_numbers = #tpu.dot_dimension_numbers<[1], [0], [0], [1], [0, 0, 1, 1], [], []>} : vector<128x32xbf16>, vector<32x128xbf16>, vector<128x128xf32> -> vector<128x128xf32>
    %59 = arith.addf %39, %58 : vector<128x128xf32>
    %60 = vector.extract_strided_slice %16 {offsets = [0, 64], sizes = [128, 32], strides = [1, 1]} : vector<128x128xbf16> to vector<128x32xbf16>
    %61 = vector.extract_strided_slice %17 {offsets = [0, 64], sizes = [128, 32], strides = [1, 1]} : vector<128x128xbf16> to vector<128x32xbf16>
    %62 = vector.extract_strided_slice %18 {offsets = [0, 64], sizes = [128, 32], strides = [1, 1]} : vector<128x128xbf16> to vector<128x32xbf16>
    %cst_29 = arith.constant dense<0.000000e+00> : vector<128x128xf32>
    %63 = tpu.matmul %60, %61, %cst_29 {dimension_numbers = #tpu.dot_dimension_numbers<[1], [1], [0], [0], [0, 0, 1, 0], [], []>} : vector<128x32xbf16>, vector<128x32xbf16>, vector<128x128xf32> -> vector<128x128xf32>
    %cst_30 = arith.constant dense<0xFF800000> : vector<128xf32>
    %64 = vector.multi_reduction <maximumf>, %63, %cst_30 [1] : vector<128x128xf32> to vector<128xf32>
    %65 = vector.shape_cast %64 : vector<128xf32> to vector<128x1xf32>
    %66 = vector.broadcast %65 : vector<128x1xf32> to vector<128x128xf32>
    %67 = arith.subf %63, %66 : vector<128x128xf32>
    %68 = math.exp %67 : vector<128x128xf32>
    %cst_31 = arith.constant dense<0.000000e+00> : vector<128xf32>
    %69 = vector.multi_reduction <add>, %68, %cst_31 [1] : vector<128x128xf32> to vector<128xf32>
    %70 = vector.shape_cast %69 : vector<128xf32> to vector<128x1xf32>
    %71 = tpu.reciprocal %70 {approx = true} : vector<128x1xf32> -> vector<128x1xf32>
    %72 = vector.broadcast %71 : vector<128x1xf32> to vector<128x128xf32>
    %73 = arith.mulf %68, %72 : vector<128x128xf32>
    %74 = arith.truncf %73 : vector<128x128xf32> to vector<128x128xbf16>
    %cst_32 = arith.constant dense<0.000000e+00> : vector<128x32xf32>
    %75 = tpu.matmul %74, %62, %cst_32 {dimension_numbers = #tpu.dot_dimension_numbers<[1], [0], [0], [1], [0, 0, 1, 1], [], []>} : vector<128x128xbf16>, vector<128x32xbf16>, vector<128x32xf32> -> vector<128x32xf32>
    %76 = arith.truncf %75 : vector<128x32xf32> to vector<128x32xbf16>
    %c64 = arith.constant 64 : index
    %c0_33 = arith.constant 0 : index
    %77 = vector.load %arg7[%c64, %c0_33] : memref<128x128xbf16, #tpu.memory_space<vmem>>, vector<32x128xbf16>
    %cst_34 = arith.constant dense<0.000000e+00> : vector<128x128xf32>
    %78 = tpu.matmul %76, %77, %cst_34 {dimension_numbers = #tpu.dot_dimension_numbers<[1], [0], [0], [1], [0, 0, 1, 1], [], []>} : vector<128x32xbf16>, vector<32x128xbf16>, vector<128x128xf32> -> vector<128x128xf32>
    %79 = arith.addf %59, %78 : vector<128x128xf32>
    %80 = vector.extract_strided_slice %16 {offsets = [0, 96], sizes = [128, 32], strides = [1, 1]} : vector<128x128xbf16> to vector<128x32xbf16>
    %81 = vector.extract_strided_slice %17 {offsets = [0, 96], sizes = [128, 32], strides = [1, 1]} : vector<128x128xbf16> to vector<128x32xbf16>
    %82 = vector.extract_strided_slice %18 {offsets = [0, 96], sizes = [128, 32], strides = [1, 1]} : vector<128x128xbf16> to vector<128x32xbf16>
    %cst_35 = arith.constant dense<0.000000e+00> : vector<128x128xf32>
    %83 = tpu.matmul %80, %81, %cst_35 {dimension_numbers = #tpu.dot_dimension_numbers<[1], [1], [0], [0], [0, 0, 1, 0], [], []>} : vector<128x32xbf16>, vector<128x32xbf16>, vector<128x128xf32> -> vector<128x128xf32>
    %cst_36 = arith.constant dense<0xFF800000> : vector<128xf32>
    %84 = vector.multi_reduction <maximumf>, %83, %cst_36 [1] : vector<128x128xf32> to vector<128xf32>
    %85 = vector.shape_cast %84 : vector<128xf32> to vector<128x1xf32>
    %86 = vector.broadcast %85 : vector<128x1xf32> to vector<128x128xf32>
    %87 = arith.subf %83, %86 : vector<128x128xf32>
    %88 = math.exp %87 : vector<128x128xf32>
    %cst_37 = arith.constant dense<0.000000e+00> : vector<128xf32>
    %89 = vector.multi_reduction <add>, %88, %cst_37 [1] : vector<128x128xf32> to vector<128xf32>
    %90 = vector.shape_cast %89 : vector<128xf32> to vector<128x1xf32>
    %91 = tpu.reciprocal %90 {approx = true} : vector<128x1xf32> -> vector<128x1xf32>
    %92 = vector.broadcast %91 : vector<128x1xf32> to vector<128x128xf32>
    %93 = arith.mulf %88, %92 : vector<128x128xf32>
    %94 = arith.truncf %93 : vector<128x128xf32> to vector<128x128xbf16>
    %cst_38 = arith.constant dense<0.000000e+00> : vector<128x32xf32>
    %95 = tpu.matmul %94, %82, %cst_38 {dimension_numbers = #tpu.dot_dimension_numbers<[1], [0], [0], [1], [0, 0, 1, 1], [], []>} : vector<128x128xbf16>, vector<128x32xbf16>, vector<128x32xf32> -> vector<128x32xf32>
    %96 = arith.truncf %95 : vector<128x32xf32> to vector<128x32xbf16>
    %c96 = arith.constant 96 : index
    %c0_39 = arith.constant 0 : index
    %97 = vector.load %arg7[%c96, %c0_39] : memref<128x128xbf16, #tpu.memory_space<vmem>>, vector<32x128xbf16>
    %cst_40 = arith.constant dense<0.000000e+00> : vector<128x128xf32>
    %98 = tpu.matmul %96, %97, %cst_40 {dimension_numbers = #tpu.dot_dimension_numbers<[1], [0], [0], [1], [0, 0, 1, 1], [], []>} : vector<128x32xbf16>, vector<32x128xbf16>, vector<128x128xf32> -> vector<128x128xf32>
    %99 = arith.addf %79, %98 : vector<128x128xf32>
    %100 = arith.addf %1, %99 : vector<128x128xf32>
    %cst_41 = arith.constant dense<0.000000e+00> : vector<128xf32>
    %101 = vector.multi_reduction <add>, %100, %cst_41 [1] : vector<128x128xf32> to vector<128xf32>
    %102 = vector.shape_cast %101 : vector<128xf32> to vector<128x1xf32>
    %cst_42 = arith.constant 1.280000e+02 : f32
    %103 = vector.broadcast %cst_42 : f32 to vector<128x1xf32>
    %104 = arith.divf %102, %103 : vector<128x1xf32>
    %105 = vector.broadcast %104 : vector<128x1xf32> to vector<128x128xf32>
    %106 = arith.subf %100, %105 : vector<128x128xf32>
    %107 = vector.broadcast %104 : vector<128x1xf32> to vector<128x128xf32>
    %108 = arith.subf %100, %107 : vector<128x128xf32>
    %109 = arith.mulf %106, %108 : vector<128x128xf32>
    %cst_43 = arith.constant dense<0.000000e+00> : vector<128xf32>
    %110 = vector.multi_reduction <add>, %109, %cst_43 [1] : vector<128x128xf32> to vector<128xf32>
    %111 = vector.shape_cast %110 : vector<128xf32> to vector<128x1xf32>
    %cst_44 = arith.constant 1.280000e+02 : f32
    %112 = vector.broadcast %cst_44 : f32 to vector<128x1xf32>
    %113 = arith.divf %111, %112 : vector<128x1xf32>
    %114 = vector.broadcast %104 : vector<128x1xf32> to vector<128x128xf32>
    %115 = arith.subf %100, %114 : vector<128x128xf32>
    %cst_45 = arith.constant 9.99999974E-6 : f32
    %116 = vector.broadcast %cst_45 : f32 to vector<128x1xf32>
    %117 = arith.addf %113, %116 : vector<128x1xf32>
    %118 = math.rsqrt %117 : vector<128x1xf32>
    %119 = vector.broadcast %118 : vector<128x1xf32> to vector<128x128xf32>
    %120 = arith.mulf %115, %119 : vector<128x128xf32>
    %c0_46 = arith.constant 0 : index
    %c0_47 = arith.constant 0 : index
    %121 = vector.load %arg8[%c0_46, %c0_47] : memref<1x128xf32, #tpu.memory_space<vmem>>, vector<1x128xf32>
    %122 = vector.shape_cast %121 : vector<1x128xf32> to vector<128xf32>
    %123 = vector.shape_cast %122 : vector<128xf32> to vector<1x128xf32>
    %124 = vector.broadcast %123 : vector<1x128xf32> to vector<128x128xf32>
    %125 = arith.mulf %120, %124 : vector<128x128xf32>
    %c0_48 = arith.constant 0 : index
    %c0_49 = arith.constant 0 : index
    %126 = vector.load %arg9[%c0_48, %c0_49] : memref<1x128xf32, #tpu.memory_space<vmem>>, vector<1x128xf32>
    %127 = vector.shape_cast %126 : vector<1x128xf32> to vector<128xf32>
    %128 = vector.shape_cast %127 : vector<128xf32> to vector<1x128xf32>
    %129 = vector.broadcast %128 : vector<1x128xf32> to vector<128x128xf32>
    %130 = arith.addf %125, %129 : vector<128x128xf32>
    %131 = arith.truncf %130 : vector<128x128xf32> to vector<128x128xbf16>
    %c0_50 = arith.constant 0 : index
    %c0_51 = arith.constant 0 : index
    %132 = vector.load %arg10[%c0_50, %c0_51] : memref<128x256xbf16, #tpu.memory_space<vmem>>, vector<128x256xbf16>
    %cst_52 = arith.constant dense<0.000000e+00> : vector<128x256xf32>
    %133 = tpu.matmul %131, %132, %cst_52 {dimension_numbers = #tpu.dot_dimension_numbers<[1], [0], [0], [1], [0, 0, 1, 1], [], []>} : vector<128x128xbf16>, vector<128x256xbf16>, vector<128x256xf32> -> vector<128x256xf32>
    %c0_53 = arith.constant 0 : index
    %c0_54 = arith.constant 0 : index
    %134 = vector.load %arg11[%c0_53, %c0_54] : memref<1x256xf32, #tpu.memory_space<vmem>>, vector<1x256xf32>
    %135 = vector.shape_cast %134 : vector<1x256xf32> to vector<256xf32>
    %136 = vector.shape_cast %135 : vector<256xf32> to vector<1x256xf32>
    %137 = vector.broadcast %136 : vector<1x256xf32> to vector<128x256xf32>
    %138 = arith.addf %133, %137 : vector<128x256xf32>
    %cst_55 = arith.constant 0.000000e+00 : f32
    %139 = vector.broadcast %cst_55 : f32 to vector<128x256xf32>
    %140 = arith.maximumf %138, %139 : vector<128x256xf32>
    %141 = arith.truncf %140 : vector<128x256xf32> to vector<128x256xbf16>
    %c0_56 = arith.constant 0 : index
    %c0_57 = arith.constant 0 : index
    %142 = vector.load %arg12[%c0_56, %c0_57] : memref<256x128xbf16, #tpu.memory_space<vmem>>, vector<256x128xbf16>
    %cst_58 = arith.constant dense<0.000000e+00> : vector<128x128xf32>
    %143 = tpu.matmul %141, %142, %cst_58 {dimension_numbers = #tpu.dot_dimension_numbers<[1], [0], [0], [1], [0, 0, 1, 1], [], []>} : vector<128x256xbf16>, vector<256x128xbf16>, vector<128x128xf32> -> vector<128x128xf32>
    %c0_59 = arith.constant 0 : index
    %c0_60 = arith.constant 0 : index
    %144 = vector.load %arg13[%c0_59, %c0_60] : memref<1x128xf32, #tpu.memory_space<vmem>>, vector<1x128xf32>
    %145 = vector.shape_cast %144 : vector<1x128xf32> to vector<128xf32>
    %146 = vector.shape_cast %145 : vector<128xf32> to vector<1x128xf32>
    %147 = vector.broadcast %146 : vector<1x128xf32> to vector<128x128xf32>
    %148 = arith.addf %143, %147 : vector<128x128xf32>
    %149 = arith.addf %130, %148 : vector<128x128xf32>
    %cst_61 = arith.constant dense<0.000000e+00> : vector<128xf32>
    %150 = vector.multi_reduction <add>, %149, %cst_61 [1] : vector<128x128xf32> to vector<128xf32>
    %151 = vector.shape_cast %150 : vector<128xf32> to vector<128x1xf32>
    %cst_62 = arith.constant 1.280000e+02 : f32
    %152 = vector.broadcast %cst_62 : f32 to vector<128x1xf32>
    %153 = arith.divf %151, %152 : vector<128x1xf32>
    %154 = vector.broadcast %153 : vector<128x1xf32> to vector<128x128xf32>
    %155 = arith.subf %149, %154 : vector<128x128xf32>
    %156 = vector.broadcast %153 : vector<128x1xf32> to vector<128x128xf32>
    %157 = arith.subf %149, %156 : vector<128x128xf32>
    %158 = arith.mulf %155, %157 : vector<128x128xf32>
    %cst_63 = arith.constant dense<0.000000e+00> : vector<128xf32>
    %159 = vector.multi_reduction <add>, %158, %cst_63 [1] : vector<128x128xf32> to vector<128xf32>
    %160 = vector.shape_cast %159 : vector<128xf32> to vector<128x1xf32>
    %cst_64 = arith.constant 1.280000e+02 : f32
    %161 = vector.broadcast %cst_64 : f32 to vector<128x1xf32>
    %162 = arith.divf %160, %161 : vector<128x1xf32>
    %163 = vector.broadcast %153 : vector<128x1xf32> to vector<128x128xf32>
    %164 = arith.subf %149, %163 : vector<128x128xf32>
    %cst_65 = arith.constant 9.99999974E-6 : f32
    %165 = vector.broadcast %cst_65 : f32 to vector<128x1xf32>
    %166 = arith.addf %162, %165 : vector<128x1xf32>
    %167 = math.rsqrt %166 : vector<128x1xf32>
    %168 = vector.broadcast %167 : vector<128x1xf32> to vector<128x128xf32>
    %169 = arith.mulf %164, %168 : vector<128x128xf32>
    %c0_66 = arith.constant 0 : index
    %c0_67 = arith.constant 0 : index
    %170 = vector.load %arg14[%c0_66, %c0_67] : memref<1x128xf32, #tpu.memory_space<vmem>>, vector<1x128xf32>
    %171 = vector.shape_cast %170 : vector<1x128xf32> to vector<128xf32>
    %172 = vector.shape_cast %171 : vector<128xf32> to vector<1x128xf32>
    %173 = vector.broadcast %172 : vector<1x128xf32> to vector<128x128xf32>
    %174 = arith.mulf %169, %173 : vector<128x128xf32>
    %c0_68 = arith.constant 0 : index
    %c0_69 = arith.constant 0 : index
    %175 = vector.load %arg15[%c0_68, %c0_69] : memref<1x128xf32, #tpu.memory_space<vmem>>, vector<1x128xf32>
    %176 = vector.shape_cast %175 : vector<1x128xf32> to vector<128xf32>
    %177 = vector.shape_cast %176 : vector<128xf32> to vector<1x128xf32>
    %178 = vector.broadcast %177 : vector<1x128xf32> to vector<128x128xf32>
    %179 = arith.addf %174, %178 : vector<128x128xf32>
    %c0_70 = arith.constant 0 : index
    %c0_71 = arith.constant 0 : index
    %c0_72 = arith.constant 0 : index
    %180 = vector.load %arg16[%c0_70, %c0_71, %c0_72] : memref<1x128x128xf32, #tpu.memory_space<vmem>>, vector<1x128x128xf32>
    %181 = vector.shape_cast %180 : vector<1x128x128xf32> to vector<128x128xf32>
    %182 = vector.shape_cast %179 : vector<128x128xf32> to vector<1x128x128xf32>
    tpu.vector_store %arg16[%c0_70, %c0_71, %c0_72], %182 {strides = array<i32>} : memref<1x128x128xf32, #tpu.memory_space<vmem>>, vector<1x128x128xf32>,
    return
  }
  func.func @transform_0(%arg0: i32, %arg1: i32) -> (i32, i32, i32) {
    %c0_i32 = arith.constant 0 : i32
    %c0_i32_0 = arith.constant 0 : i32
    return %arg0, %arg1, %c0_i32 : i32, i32, i32
  }
  func.func @transform_1(%arg0: i32, %arg1: i32) -> (i32, i32, i32) {
    %c0_i32 = arith.constant 0 : i32
    %c0_i32_0 = arith.constant 0 : i32
    %c0_i32_1 = arith.constant 0 : i32
    return %arg0, %c0_i32, %c0_i32_0 : i32, i32, i32
  }
  func.func @transform_2(%arg0: i32, %arg1: i32) -> (i32, i32) {
    %c0_i32 = arith.constant 0 : i32
    %c0_i32_0 = arith.constant 0 : i32
    %c0_i32_1 = arith.constant 0 : i32
    return %c0_i32, %c0_i32_0 : i32, i32
  }
  func.func @transform_3(%arg0: i32, %arg1: i32) -> (i32, i32) {
    %c0_i32 = arith.constant 0 : i32
    %c0_i32_0 = arith.constant 0 : i32
    %c0_i32_1 = arith.constant 0 : i32
    return %c0_i32, %c0_i32_0 : i32, i32
  }
  func.func @transform_4(%arg0: i32, %arg1: i32) -> (i32, i32) {
    %c0_i32 = arith.constant 0 : i32
    %c0_i32_0 = arith.constant 0 : i32
    %c0_i32_1 = arith.constant 0 : i32
    return %c0_i32, %c0_i32_0 : i32, i32
  }
  func.func @transform_5(%arg0: i32, %arg1: i32) -> (i32, i32) {
    %c0_i32 = arith.constant 0 : i32
    %c0_i32_0 = arith.constant 0 : i32
    %c0_i32_1 = arith.constant 0 : i32
    return %c0_i32, %c0_i32_0 : i32, i32
  }
  func.func @transform_6(%arg0: i32, %arg1: i32) -> (i32, i32) {
    %c0_i32 = arith.constant 0 : i32
    %c0_i32_0 = arith.constant 0 : i32
    %c0_i32_1 = arith.constant 0 : i32
    return %c0_i32, %c0_i32_0 : i32, i32
  }
  func.func @transform_7(%arg0: i32, %arg1: i32) -> (i32, i32) {
    %c0_i32 = arith.constant 0 : i32
    %c0_i32_0 = arith.constant 0 : i32
    %c0_i32_1 = arith.constant 0 : i32
    return %c0_i32, %c0_i32_0 : i32, i32
  }
  func.func @transform_8(%arg0: i32, %arg1: i32) -> (i32, i32) {
    %c0_i32 = arith.constant 0 : i32
    %c0_i32_0 = arith.constant 0 : i32
    %c0_i32_1 = arith.constant 0 : i32
    return %c0_i32, %c0_i32_0 : i32, i32
  }
  func.func @transform_9(%arg0: i32, %arg1: i32) -> (i32, i32) {
    %c0_i32 = arith.constant 0 : i32
    %c0_i32_0 = arith.constant 0 : i32
    %c0_i32_1 = arith.constant 0 : i32
    return %c0_i32, %c0_i32_0 : i32, i32
  }
  func.func @transform_10(%arg0: i32, %arg1: i32) -> (i32, i32) {
    %c0_i32 = arith.constant 0 : i32
    %c0_i32_0 = arith.constant 0 : i32
    %c0_i32_1 = arith.constant 0 : i32
    return %c0_i32, %c0_i32_0 : i32, i32
  }
  func.func @transform_11(%arg0: i32, %arg1: i32) -> (i32, i32) {
    %c0_i32 = arith.constant 0 : i32
    %c0_i32_0 = arith.constant 0 : i32
    %c0_i32_1 = arith.constant 0 : i32
    return %c0_i32, %c0_i32_0 : i32, i32
  }
  func.func @transform_12(%arg0: i32, %arg1: i32) -> (i32, i32) {
    %c0_i32 = arith.constant 0 : i32
    %c0_i32_0 = arith.constant 0 : i32
    %c0_i32_1 = arith.constant 0 : i32
    return %c0_i32, %c0_i32_0 : i32, i32
  }
  func.func @transform_13(%arg0: i32, %arg1: i32) -> (i32, i32) {
    %c0_i32 = arith.constant 0 : i32
    %c0_i32_0 = arith.constant 0 : i32
    %c0_i32_1 = arith.constant 0 : i32
    return %c0_i32, %c0_i32_0 : i32, i32
  }
  func.func @transform_14(%arg0: i32, %arg1: i32) -> (i32, i32, i32) {
    %c0_i32 = arith.constant 0 : i32
    %c0_i32_0 = arith.constant 0 : i32
    return %arg0, %arg1, %c0_i32 : i32, i32, i32
  }
}

</mosaic_0001>

<llo_original>
// kernel: tpu_custom_call.1
$region0: #{tpu_custom_call.1}
  #allocation0 [shape = 'u32[]', space=smem, size = 0x4, offset = 0x4, fixed_abs, tag = 'smem constant byte address 0x4 - core index']
  #allocation1 [shape = 'u32[144,128]{1,0:T(1,128)}', space=vmem, size = 0x12000, scoped, tag = 'internal scratch']
  %s0 = inlined_call_operand.hbm [shape: f32[2,128,128], index: 0, kind: input, shape index: {}]
  %s1 = inlined_call_operand.hbm [shape: f32[2,128,128], index: 1, kind: input, shape index: {}]
  %s2 = inlined_call_operand.hbm [shape: bf16[128,128], index: 2, kind: input, shape index: {}]
  %s3 = inlined_call_operand.hbm [shape: bf16[128,128], index: 3, kind: input, shape index: {}]
  %s4 = inlined_call_operand.hbm [shape: bf16[128,128], index: 4, kind: input, shape index: {}]
  %s5 = inlined_call_operand.hbm [shape: bf16[128,128], index: 5, kind: input, shape index: {}]
  %s6 = inlined_call_operand.vmem [shape: f32[1,128], index: 6, kind: input, shape index: {}]
  %s7 = inlined_call_operand.vmem [shape: f32[1,128], index: 7, kind: input, shape index: {}]
  %s8 = inlined_call_operand.hbm [shape: bf16[128,256], index: 8, kind: input, shape index: {}]
  %s9 = inlined_call_operand.vmem [shape: f32[1,256], index: 9, kind: input, shape index: {}]
  %s10 = inlined_call_operand.hbm [shape: bf16[256,128], index: 10, kind: input, shape index: {}]
  %s11 = inlined_call_operand.vmem [shape: f32[1,128], index: 11, kind: input, shape index: {}]
  %s12 = inlined_call_operand.vmem [shape: f32[1,128], index: 12, kind: input, shape index: {}]
  %s13 = inlined_call_operand.vmem [shape: f32[1,128], index: 13, kind: input, shape index: {}]
  %s14 = inlined_call_operand.hbm [shape: f32[2,128,128], index: 14, kind: output, shape index: {}]
  %s15 = sld [smem:[#allocation0]]
  $region121: #{tpu_custom_call.1} parent=0
    _
  %s17 = ssub.s32 1, %s15
  %s18 = scalar_select 0, %s17, %s15
  $region1: #{tpu_custom_call.1} parent=0
    #allocation2 [shape = 'u8[131072]{0}', space=vmem, size = 0x20000, scoped, tag = 'input window, operand 0']
    #allocation3 [shape = 's32[2]{0}', space=sflag, size = 0x8, scoped, tag = 'scoped memory for tpu_custom_call.1']
    #allocation4 [shape = 's32[2]{0}', space=sflag, size = 0x8, scoped, tag = 'scoped memory for tpu_custom_call.1']
    #allocation5 [shape = 'u8[131072]{0}', space=vmem, size = 0x20000, scoped, tag = 'input window, operand 1']
    #allocation6 [shape = 's32[2]{0}', space=sflag, size = 0x8, scoped, tag = 'scoped memory for tpu_custom_call.1']
    #allocation7 [shape = 'u8[32768]{0}', space=vmem, size = 0x8000, scoped, tag = 'input window, operand 2, single buffered']
    #allocation8 [shape = 'u8[32768]{0}', space=vmem, size = 0x8000, scoped, tag = 'input window, operand 3, single buffered']
    #allocation9 [shape = 's32[1]{0}', space=sflag, size = 0x4, scoped, tag = 'scoped memory for tpu_custom_call.1']
    #allocation10 [shape = 'u8[32768]{0}', space=vmem, size = 0x8000, scoped, tag = 'input window, operand 4, single buffered']
    #allocation11 [shape = 'u8[32768]{0}', space=vmem, size = 0x8000, scoped, tag = 'input window, operand 5, single buffered']
    #allocation12 [shape = 's32[1]{0}', space=sflag, size = 0x4, scoped, tag = 'scoped memory for tpu_custom_call.1']
    #allocation13 [shape = 'u8[65536]{0}', space=vmem, size = 0x10000, scoped, tag = 'input window, operand 8, single buffered']
    #allocation14 [shape = 'u8[65536]{0}', space=vmem, size = 0x10000, scoped, tag = 'input window, operand 10, single buffered']
    #allocation15 [shape = 's32[1]{0}', space=sflag, size = 0x4, scoped, tag = 'scoped memory for tpu_custom_call.1']
    #allocation16 [shape = 'u8[131072]{0}', space=vmem, size = 0x20000, scoped, tag = 'output window, operand 0']
    %19 = vsyncpa [#allocation3], 0
    %s20 = scalar_lea.sflag [#allocation3], 1
    %21 = vsyncpa %s20, 0
    %22 = vsyncpa [#allocation6], 0
    %s23 = scalar_lea.sflag [#allocation6], 1
    %24 = vsyncpa %s23, 0
    %25 = vsyncpa [#allocation9], 0
    %26 = vsyncpa [#allocation12], 0
    %27 = vsyncpa [#allocation15], 0
    %28 = vsyncpa [#allocation4], 0
    %s29 = scalar_lea.sflag [#allocation4], 1
    %30 = vsyncpa %s29, 0
    loop: start=0, step=1, limit=4
    $region2: #{tpu_custom_call.1} parent=1 // loop_pre_header
      _
    $region3: #{tpu_custom_call.1} parent=1 // loop_header
      %s32 = sphi 0, %s36
      %p33 = scmp.ge.s32.totalorder %s32, 4
      %s39 = sphi 0, %s51
      %s40 = sphi 0, %s47
      %s41 = sphi 0, %s39
      %s42 = sphi 0, %s40
      %s43 = sphi 0, %s41
      %s44 = sphi 0, %s42
      %s56 = sphi 0, %s58
      %s59 = sphi 0, %s56
      %s60 = sphi 0, %s59
      %s76 = sphi 0, %s60
      %s82 = sphi 0, %s84
      %s85 = sphi 0, %s82
      %s86 = sphi 0, %s85
      %s102 = sphi 0, %s86
      %s106 = sphi 0, %s106
      %s108 = sphi 0, %s106
      %s109 = sphi 0, %s108
      %s123 = sphi 0, %s109
      %s127 = sphi 0, %s127
      %s129 = sphi 0, %s127
      %s130 = sphi 0, %s129
      %s144 = sphi 0, %s130
      %s148 = sphi 0, %s148
      %s150 = sphi 0, %s148
      %s151 = sphi 0, %s150
      %s165 = sphi 0, %s151
      %s169 = sphi 0, %s169
      %s171 = sphi 0, %s169
      %s172 = sphi 0, %s171
      %s186 = sphi 0, %s172
      %s190 = sphi 0, %s190
      %s192 = sphi 0, %s190
      %s193 = sphi 0, %s192
      %s207 = sphi 0, %s193
      %s211 = sphi 0, %s211
      %s213 = sphi 0, %s211
      %s214 = sphi 0, %s213
      %s228 = sphi 0, %s214
      %s232 = sphi 0, %s232
      %s234 = sphi 0, %s232
      %s235 = sphi 0, %s234
      %s249 = sphi 0, %s235
      %s253 = sphi 0, %s253
      %s255 = sphi 0, %s253
      %s256 = sphi 0, %s255
      %s270 = sphi 0, %s256
      %s274 = sphi 0, %s274
      %s276 = sphi 0, %s274
      %s277 = sphi 0, %s276
      %s291 = sphi 0, %s277
      %s295 = sphi 0, %s295
      %s297 = sphi 0, %s295
      %s298 = sphi 0, %s297
      %s312 = sphi 0, %s298
      %s316 = sphi 0, %s316
      %s318 = sphi 0, %s316
      %s319 = sphi 0, %s318
      %s333 = sphi 0, %s319
      %s337 = sphi 0, %s337
      %s339 = sphi 0, %s337
      %s340 = sphi 0, %s339
      %s354 = sphi 0, %s340
      %s362 = sphi 0, %s364
      %s365 = sphi 0, %s362
      %s366 = sphi 0, %s365
      %s382 = sphi 0, %s366
    $region4: #{tpu_custom_call.1} parent=1 // loop_header_branch
      %35 = sbr.rel (%p33) target = $region8
    $region5: #{tpu_custom_call.1} parent=1 // loop_body
      %s37 = ssub.s32 %s32, 1
      %s38 = ssub.s32 %s32, 2
      %s45 = sadd.s32 1, %s40
      %p46 = scmp.ge.s32.totalorder %s45, 1
      %s47 = scalar_select %p46, 0, %s45
      %s48 = sadd.s32 1, %s39
      %s49 = scalar_select %p46, %s48, %s39
      %p50 = scmp.ge.s32.totalorder %s49, 2
      %s51 = scalar_select %p50, 0, %s49
      %s52 = ssub.s32 %s39, %s51
      %s53 = ssub.s32 %s40, %s47
      %s54 = sor.u32 %s52, %s53
      %p55 = scmp.eq.s32.totalorder %s54, 0
      %s57 = sadd.s32 %s56, 1
      %s58 = scalar_select %p55, %s56, %s57
      %p61 = pneg %p55
      %p62 = scmp.eq.s32.totalorder %s32, 1
      %p63 = por %p61, %p62
      %p64 = scmp.ne.s32.totalorder %s56, %s59
      %p65 = scmp.eq.s32.totalorder %s32, 0
      %p66 = por %p64, %p65
      %p67 = scmp.ne.s32.totalorder %s56, %s59
      %p68 = scmp.eq.s32.totalorder %s37, 1
      %p69 = por %p67, %p68
      %p70 = scmp.ne.s32.totalorder %s59, %s60
      %p71 = scmp.eq.s32.totalorder %s37, 0
      %p72 = por %p70, %p71
      %p73 = scmp.ne.s32.totalorder %s59, %s60
      %p74 = scmp.eq.s32.totalorder %s38, 1
      %p75 = por %p73, %p74
      %p77 = scmp.ne.s32.totalorder %s60, %s76
      %p78 = scmp.eq.s32.totalorder %s38, 0
      %p79 = por %p77, %p78
      %s80 = ssub.s32 %s39, %s51
      %p81 = scmp.eq.s32.totalorder %s80, 0
      %s83 = sadd.s32 %s82, 1
      %s84 = scalar_select %p81, %s82, %s83
      %p87 = pneg %p81
      %p88 = scmp.eq.s32.totalorder %s32, 1
      %p89 = por %p87, %p88
      %p90 = scmp.ne.s32.totalorder %s82, %s85
      %p91 = scmp.eq.s32.totalorder %s32, 0
      %p92 = por %p90, %p91
      %p93 = scmp.ne.s32.totalorder %s82, %s85
      %p94 = scmp.eq.s32.totalorder %s37, 1
      %p95 = por %p93, %p94
      %p96 = scmp.ne.s32.totalorder %s85, %s86
      %p97 = scmp.eq.s32.totalorder %s37, 0
      %p98 = por %p96, %p97
      %p99 = scmp.ne.s32.totalorder %s85, %s86
      %p100 = scmp.eq.s32.totalorder %s38, 1
      %p101 = por %p99, %p100
      %p103 = scmp.ne.s32.totalorder %s86, %s102
      %p104 = scmp.eq.s32.totalorder %s38, 0
      %p105 = por %p103, %p104
      %s107 = sadd.s32 %s106, 1
      %p110 = scmp.eq.s32.totalorder %s32, 1
      %p111 = scmp.ne.s32.totalorder %s106, %s108
      %p112 = scmp.eq.s32.totalorder %s32, 0
      %p113 = por %p111, %p112
      %p114 = scmp.ne.s32.totalorder %s106, %s108
      %p115 = scmp.eq.s32.totalorder %s37, 1
      %p116 = por %p114, %p115
      %p117 = scmp.ne.s32.totalorder %s108, %s109
      %p118 = scmp.eq.s32.totalorder %s37, 0
      %p119 = por %p117, %p118
      %p120 = scmp.ne.s32.totalorder %s108, %s109
      %p121 = scmp.eq.s32.totalorder %s38, 1
      %p122 = por %p120, %p121
      %p124 = scmp.ne.s32.totalorder %s109, %s123
      %p125 = scmp.eq.s32.totalorder %s38, 0
      %p126 = por %p124, %p125
      %s128 = sadd.s32 %s127, 1
      %p131 = scmp.eq.s32.totalorder %s32, 1
      %p132 = scmp.ne.s32.totalorder %s127, %s129
      %p133 = scmp.eq.s32.totalorder %s32, 0
      %p134 = por %p132, %p133
      %p135 = scmp.ne.s32.totalorder %s127, %s129
      %p136 = scmp.eq.s32.totalorder %s37, 1
      %p137 = por %p135, %p136
      %p138 = scmp.ne.s32.totalorder %s129, %s130
      %p139 = scmp.eq.s32.totalorder %s37, 0
      %p140 = por %p138, %p139
      %p141 = scmp.ne.s32.totalorder %s129, %s130
      %p142 = scmp.eq.s32.totalorder %s38, 1
      %p143 = por %p141, %p142
      %p145 = scmp.ne.s32.totalorder %s130, %s144
      %p146 = scmp.eq.s32.totalorder %s38, 0
      %p147 = por %p145, %p146
      %s149 = sadd.s32 %s148, 1
      %p152 = scmp.eq.s32.totalorder %s32, 1
      %p153 = scmp.ne.s32.totalorder %s148, %s150
      %p154 = scmp.eq.s32.totalorder %s32, 0
      %p155 = por %p153, %p154
      %p156 = scmp.ne.s32.totalorder %s148, %s150
      %p157 = scmp.eq.s32.totalorder %s37, 1
      %p158 = por %p156, %p157
      %p159 = scmp.ne.s32.totalorder %s150, %s151
      %p160 = scmp.eq.s32.totalorder %s37, 0
      %p161 = por %p159, %p160
      %p162 = scmp.ne.s32.totalorder %s150, %s151
      %p163 = scmp.eq.s32.totalorder %s38, 1
      %p164 = por %p162, %p163
      %p166 = scmp.ne.s32.totalorder %s151, %s165
      %p167 = scmp.eq.s32.totalorder %s38, 0
      %p168 = por %p166, %p167
      %s170 = sadd.s32 %s169, 1
      %p173 = scmp.eq.s32.totalorder %s32, 1
      %p174 = scmp.ne.s32.totalorder %s169, %s171
      %p175 = scmp.eq.s32.totalorder %s32, 0
      %p176 = por %p174, %p175
      %p177 = scmp.ne.s32.totalorder %s169, %s171
      %p178 = scmp.eq.s32.totalorder %s37, 1
      %p179 = por %p177, %p178
      %p180 = scmp.ne.s32.totalorder %s171, %s172
      %p181 = scmp.eq.s32.totalorder %s37, 0
      %p182 = por %p180, %p181
      %p183 = scmp.ne.s32.totalorder %s171, %s172
      %p184 = scmp.eq.s32.totalorder %s38, 1
      %p185 = por %p183, %p184
      %p187 = scmp.ne.s32.totalorder %s172, %s186
      %p188 = scmp.eq.s32.totalorder %s38, 0
      %p189 = por %p187, %p188
      %s191 = sadd.s32 %s190, 1
      %p194 = scmp.eq.s32.totalorder %s32, 1
      %p195 = scmp.ne.s32.totalorder %s190, %s192
      %p196 = scmp.eq.s32.totalorder %s32, 0
      %p197 = por %p195, %p196
      %p198 = scmp.ne.s32.totalorder %s190, %s192
      %p199 = scmp.eq.s32.totalorder %s37, 1
      %p200 = por %p198, %p199
      %p201 = scmp.ne.s32.totalorder %s192, %s193
      %p202 = scmp.eq.s32.totalorder %s37, 0
      %p203 = por %p201, %p202
      %p204 = scmp.ne.s32.totalorder %s192, %s193
      %p205 = scmp.eq.s32.totalorder %s38, 1
      %p206 = por %p204, %p205
      %p208 = scmp.ne.s32.totalorder %s193, %s207
      %p209 = scmp.eq.s32.totalorder %s38, 0
      %p210 = por %p208, %p209
      %s212 = sadd.s32 %s211, 1
      %p215 = scmp.eq.s32.totalorder %s32, 1
      %p216 = scmp.ne.s32.totalorder %s211, %s213
      %p217 = scmp.eq.s32.totalorder %s32, 0
      %p218 = por %p216, %p217
      %p219 = scmp.ne.s32.totalorder %s211, %s213
      %p220 = scmp.eq.s32.totalorder %s37, 1
      %p221 = por %p219, %p220
      %p222 = scmp.ne.s32.totalorder %s213, %s214
      %p223 = scmp.eq.s32.totalorder %s37, 0
      %p224 = por %p222, %p223
      %p225 = scmp.ne.s32.totalorder %s213, %s214
      %p226 = scmp.eq.s32.totalorder %s38, 1
      %p227 = por %p225, %p226
      %p229 = scmp.ne.s32.totalorder %s214, %s228
      %p230 = scmp.eq.s32.totalorder %s38, 0
      %p231 = por %p229, %p230
      %s233 = sadd.s32 %s232, 1
      %p236 = scmp.eq.s32.totalorder %s32, 1
      %p237 = scmp.ne.s32.totalorder %s232, %s234
      %p238 = scmp.eq.s32.totalorder %s32, 0
      %p239 = por %p237, %p238
      %p240 = scmp.ne.s32.totalorder %s232, %s234
      %p241 = scmp.eq.s32.totalorder %s37, 1
      %p242 = por %p240, %p241
      %p243 = scmp.ne.s32.totalorder %s234, %s235
      %p244 = scmp.eq.s32.totalorder %s37, 0
      %p245 = por %p243, %p244
      %p246 = scmp.ne.s32.totalorder %s234, %s235
      %p247 = scmp.eq.s32.totalorder %s38, 1
      %p248 = por %p246, %p247
      %p250 = scmp.ne.s32.totalorder %s235, %s249
      %p251 = scmp.eq.s32.totalorder %s38, 0
      %p252 = por %p250, %p251
      %s254 = sadd.s32 %s253, 1
      %p257 = scmp.eq.s32.totalorder %s32, 1
      %p258 = scmp.ne.s32.totalorder %s253, %s255
      %p259 = scmp.eq.s32.totalorder %s32, 0
      %p260 = por %p258, %p259
      %p261 = scmp.ne.s32.totalorder %s253, %s255
      %p262 = scmp.eq.s32.totalorder %s37, 1
      %p263 = por %p261, %p262
      %p264 = scmp.ne.s32.totalorder %s255, %s256
      %p265 = scmp.eq.s32.totalorder %s37, 0
      %p266 = por %p264, %p265
      %p267 = scmp.ne.s32.totalorder %s255, %s256
      %p268 = scmp.eq.s32.totalorder %s38, 1
      %p269 = por %p267, %p268
      %p271 = scmp.ne.s32.totalorder %s256, %s270
      %p272 = scmp.eq.s32.totalorder %s38, 0
      %p273 = por %p271, %p272
      %s275 = sadd.s32 %s274, 1
      %p278 = scmp.eq.s32.totalorder %s32, 1
      %p279 = scmp.ne.s32.totalorder %s274, %s276
      %p280 = scmp.eq.s32.totalorder %s32, 0
      %p281 = por %p279, %p280
      %p282 = scmp.ne.s32.totalorder %s274, %s276
      %p283 = scmp.eq.s32.totalorder %s37, 1
      %p284 = por %p282, %p283
      %p285 = scmp.ne.s32.totalorder %s276, %s277
      %p286 = scmp.eq.s32.totalorder %s37, 0
      %p287 = por %p285, %p286
      %p288 = scmp.ne.s32.totalorder %s276, %s277
      %p289 = scmp.eq.s32.totalorder %s38, 1
      %p290 = por %p288, %p289
      %p292 = scmp.ne.s32.totalorder %s277, %s291
      %p293 = scmp.eq.s32.totalorder %s38, 0
      %p294 = por %p292, %p293
      %s296 = sadd.s32 %s295, 1
      %p299 = scmp.eq.s32.totalorder %s32, 1
      %p300 = scmp.ne.s32.totalorder %s295, %s297
      %p301 = scmp.eq.s32.totalorder %s32, 0
      %p302 = por %p300, %p301
      %p303 = scmp.ne.s32.totalorder %s295, %s297
      %p304 = scmp.eq.s32.totalorder %s37, 1
      %p305 = por %p303, %p304
      %p306 = scmp.ne.s32.totalorder %s297, %s298
      %p307 = scmp.eq.s32.totalorder %s37, 0
      %p308 = por %p306, %p307
      %p309 = scmp.ne.s32.totalorder %s297, %s298
      %p310 = scmp.eq.s32.totalorder %s38, 1
      %p311 = por %p309, %p310
      %p313 = scmp.ne.s32.totalorder %s298, %s312
      %p314 = scmp.eq.s32.totalorder %s38, 0
      %p315 = por %p313, %p314
      %s317 = sadd.s32 %s316, 1
      %p320 = scmp.eq.s32.totalorder %s32, 1
      %p321 = scmp.ne.s32.totalorder %s316, %s318
      %p322 = scmp.eq.s32.totalorder %s32, 0
      %p323 = por %p321, %p322
      %p324 = scmp.ne.s32.totalorder %s316, %s318
      %p325 = scmp.eq.s32.totalorder %s37, 1
      %p326 = por %p324, %p325
      %p327 = scmp.ne.s32.totalorder %s318, %s319
      %p328 = scmp.eq.s32.totalorder %s37, 0
      %p329 = por %p327, %p328
      %p330 = scmp.ne.s32.totalorder %s318, %s319
      %p331 = scmp.eq.s32.totalorder %s38, 1
      %p332 = por %p330, %p331
      %p334 = scmp.ne.s32.totalorder %s319, %s333
      %p335 = scmp.eq.s32.totalorder %s38, 0
      %p336 = por %p334, %p335
      %s338 = sadd.s32 %s337, 1
      %p341 = scmp.eq.s32.totalorder %s32, 1
      %p342 = scmp.ne.s32.totalorder %s337, %s339
      %p343 = scmp.eq.s32.totalorder %s32, 0
      %p344 = por %p342, %p343
      %p345 = scmp.ne.s32.totalorder %s337, %s339
      %p346 = scmp.eq.s32.totalorder %s37, 1
      %p347 = por %p345, %p346
      %p348 = scmp.ne.s32.totalorder %s339, %s340
      %p349 = scmp.eq.s32.totalorder %s37, 0
      %p350 = por %p348, %p349
      %p351 = scmp.ne.s32.totalorder %s339, %s340
      %p352 = scmp.eq.s32.totalorder %s38, 1
      %p353 = por %p351, %p352
      %p355 = scmp.ne.s32.totalorder %s340, %s354
      %p356 = scmp.eq.s32.totalorder %s38, 0
      %p357 = por %p355, %p356
      %s358 = ssub.s32 %s39, %s51
      %s359 = ssub.s32 %s40, %s47
      %s360 = sor.u32 %s358, %s359
      %p361 = scmp.eq.s32.totalorder %s360, 0
      %s363 = sadd.s32 %s362, 1
      %s364 = scalar_select %p361, %s362, %s363
      %p367 = pneg %p361
      %p368 = scmp.eq.s32.totalorder %s32, 1
      %p369 = por %p367, %p368
      %p370 = scmp.ne.s32.totalorder %s362, %s365
      %p371 = scmp.eq.s32.totalorder %s32, 0
      %p372 = por %p370, %p371
      %p373 = scmp.ne.s32.totalorder %s362, %s365
      %p374 = scmp.eq.s32.totalorder %s37, 1
      %p375 = por %p373, %p374
      %p376 = scmp.ne.s32.totalorder %s365, %s366
      %p377 = scmp.eq.s32.totalorder %s37, 0
      %p378 = por %p376, %p377
      %p379 = scmp.ne.s32.totalorder %s365, %s366
      %p380 = scmp.eq.s32.totalorder %s38, 1
      %p381 = por %p379, %p380
      %p383 = scmp.ne.s32.totalorder %s366, %s382
      %p384 = scmp.eq.s32.totalorder %s38, 0
      %p385 = por %p383, %p384
      %p386 = scmp.le.s32.totalorder 1, %s32
      %p387 = scmp.lt.s32.totalorder %s32, 3
      %p388 = pnand %p386, %p387
      %p389 = pneg %p388
      // Predicated region
      $region9: #{tpu_custom_call.1} parent=5 // pred_check
        _
      $region10: #{tpu_custom_call.1} parent=5 // pred_check_branch
        %391 = sbr.rel (%p388) target = $region12
      $region11: #{tpu_custom_call.1} parent=5 // pred_region
        %s392 = ssub.s32 %s32, 1
        // Predicated region
        $region13: #{tpu_custom_call.1} parent=11 // pred_check
          %p393 = pneg %p119
        $region14: #{tpu_custom_call.1} parent=11 // pred_check_branch
          %395 = sbr.rel (%p393) target = $region16
        $region15: #{tpu_custom_call.1} parent=11 // pred_region
          %s397 = ssub.s32 1024, 1024
          %398 = vsyncadd [#allocation6], %s397
          %s399 = sshll.u32 [#allocation7], 4
          %s400 = int_to_ptr.vmem [resolvable:$true] %s399
          %405 = dma.hbm_to_vmem [thread:$0]  %s2, 1024, %s400, [#allocation6], 64, 64, 4
        $region16: #{tpu_custom_call.1} parent=11 // pred_fallthru
          _
        // Predicated region
        $region17: #{tpu_custom_call.1} parent=11 // pred_check
          %p406 = pneg %p140
        $region18: #{tpu_custom_call.1} parent=11 // pred_check_branch
          %408 = sbr.rel (%p406) target = $region20
        $region19: #{tpu_custom_call.1} parent=11 // pred_region
          %s410 = ssub.s32 1024, 1024
          %411 = vsyncadd [#allocation9], %s410
          %s412 = sshll.u32 [#allocation8], 4
          %s413 = int_to_ptr.vmem [resolvable:$true] %s412
          %418 = dma.hbm_to_vmem [thread:$0]  %s3, 1024, %s413, [#allocation9], 64, 64, 4
        $region20: #{tpu_custom_call.1} parent=11 // pred_fallthru
          _
        // Predicated region
        $region21: #{tpu_custom_call.1} parent=11 // pred_check
          %p419 = pneg %p161
        $region22: #{tpu_custom_call.1} parent=11 // pred_check_branch
          %421 = sbr.rel (%p419) target = $region24
        $region23: #{tpu_custom_call.1} parent=11 // pred_region
          %s423 = ssub.s32 1024, 1024
          %424 = vsyncadd [#allocation9], %s423
          %s425 = sshll.u32 [#allocation10], 4
          %s426 = int_to_ptr.vmem [resolvable:$true] %s425
          %431 = dma.hbm_to_vmem [thread:$0]  %s4, 1024, %s426, [#allocation9], 64, 64, 4
        $region24: #{tpu_custom_call.1} parent=11 // pred_fallthru
          _
        // Predicated region
        $region25: #{tpu_custom_call.1} parent=11 // pred_check
          %p432 = pneg %p182
        $region26: #{tpu_custom_call.1} parent=11 // pred_check_branch
          %434 = sbr.rel (%p432) target = $region28
        $region27: #{tpu_custom_call.1} parent=11 // pred_region
          %s436 = ssub.s32 1024, 1024
          %437 = vsyncadd [#allocation12], %s436
          %s438 = sshll.u32 [#allocation11], 4
          %s439 = int_to_ptr.vmem [resolvable:$true] %s438
          %444 = dma.hbm_to_vmem [thread:$0]  %s5, 1024, %s439, [#allocation12], 64, 64, 4
        $region28: #{tpu_custom_call.1} parent=11 // pred_fallthru
          _
        // Predicated region
        $region29: #{tpu_custom_call.1} parent=11 // pred_check
          %p445 = pneg %p203
        $region30: #{tpu_custom_call.1} parent=11 // pred_check_branch
          %447 = sbr.rel (%p445) target = $region32
        $region31: #{tpu_custom_call.1} parent=11 // pred_region
          _
        $region32: #{tpu_custom_call.1} parent=11 // pred_fallthru
          _
        // Predicated region
        $region33: #{tpu_custom_call.1} parent=11 // pred_check
          %p448 = pneg %p224
        $region34: #{tpu_custom_call.1} parent=11 // pred_check_branch
          %450 = sbr.rel (%p448) target = $region36
        $region35: #{tpu_custom_call.1} parent=11 // pred_region
          _
        $region36: #{tpu_custom_call.1} parent=11 // pred_fallthru
          _
        // Predicated region
        $region37: #{tpu_custom_call.1} parent=11 // pred_check
          %p451 = pneg %p245
        $region38: #{tpu_custom_call.1} parent=11 // pred_check_branch
          %453 = sbr.rel (%p451) target = $region40
        $region39: #{tpu_custom_call.1} parent=11 // pred_region
          %s455 = ssub.s32 2048, 2048
          %456 = vsyncadd [#allocation12], %s455
          %s457 = sshll.u32 [#allocation13], 4
          %s458 = int_to_ptr.vmem [resolvable:$true] %s457
          %463 = dma.hbm_to_vmem [thread:$0]  %s8, 2048, %s458, [#allocation12], 128, 128, 8
        $region40: #{tpu_custom_call.1} parent=11 // pred_fallthru
          _
        // Predicated region
        $region41: #{tpu_custom_call.1} parent=11 // pred_check
          %p464 = pneg %p266
        $region42: #{tpu_custom_call.1} parent=11 // pred_check_branch
          %466 = sbr.rel (%p464) target = $region44
        $region43: #{tpu_custom_call.1} parent=11 // pred_region
          _
        $region44: #{tpu_custom_call.1} parent=11 // pred_fallthru
          _
        // Predicated region
        $region45: #{tpu_custom_call.1} parent=11 // pred_check
          %p467 = pneg %p287
        $region46: #{tpu_custom_call.1} parent=11 // pred_check_branch
          %469 = sbr.rel (%p467) target = $region48
        $region47: #{tpu_custom_call.1} parent=11 // pred_region
          %s471 = ssub.s32 2048, 2048
          %472 = vsyncadd [#allocation15], %s471
          %s473 = sshll.u32 [#allocation14], 4
          %s474 = int_to_ptr.vmem [resolvable:$true] %s473
          %479 = dma.hbm_to_vmem [thread:$0]  %s10, 2048, %s474, [#allocation15], 64, 64, 4
        $region48: #{tpu_custom_call.1} parent=11 // pred_fallthru
          _
        // Predicated region
        $region49: #{tpu_custom_call.1} parent=11 // pred_check
          %p480 = pneg %p308
        $region50: #{tpu_custom_call.1} parent=11 // pred_check_branch
          %482 = sbr.rel (%p480) target = $region52
        $region51: #{tpu_custom_call.1} parent=11 // pred_region
          _
        $region52: #{tpu_custom_call.1} parent=11 // pred_fallthru
          _
        // Predicated region
        $region53: #{tpu_custom_call.1} parent=11 // pred_check
          %p483 = pneg %p329
        $region54: #{tpu_custom_call.1} parent=11 // pred_check_branch
          %485 = sbr.rel (%p483) target = $region56
        $region55: #{tpu_custom_call.1} parent=11 // pred_region
          _
        $region56: #{tpu_custom_call.1} parent=11 // pred_fallthru
          _
        // Predicated region
        $region57: #{tpu_custom_call.1} parent=11 // pred_check
          %p486 = pneg %p350
        $region58: #{tpu_custom_call.1} parent=11 // pred_check_branch
          %488 = sbr.rel (%p486) target = $region60
        $region59: #{tpu_custom_call.1} parent=11 // pred_region
          _
        $region60: #{tpu_custom_call.1} parent=11 // pred_fallthru
          _
      $region12: #{tpu_custom_call.1} parent=5 // pred_fallthru
        _
      %p489 = scmp.lt.s32.totalorder %s32, 2
      // Predicated region
      $region61: #{tpu_custom_call.1} parent=5 // pred_check
        %p490 = pneg %p489
      $region62: #{tpu_custom_call.1} parent=5 // pred_check_branch
        %492 = sbr.rel (%p490) target = $region64
      $region63: #{tpu_custom_call.1} parent=5 // pred_region
        // Predicated region
        $region65: #{tpu_custom_call.1} parent=63 // pred_check
          %p493 = pneg %p66
        $region66: #{tpu_custom_call.1} parent=63 // pred_check_branch
          %495 = sbr.rel (%p493) target = $region68
        $region67: #{tpu_custom_call.1} parent=63 // pred_region
          %s496 = sand.u32 %s56, 1
          %s497 = scalar_lea.sflag [#allocation3], %s496
          %s498 = sand.u32 %s56, 1
          %s499 = smul.addr %s498, 128
          %s500 = scalar_lea.vmem [#allocation2], %s499
          %s501 = smul.u32 16, %s40
          %s503 = ssub.s32 2048, 2048
          %504 = vsyncadd %s497, %s503
          %s505 = smul.addr %s39, 16
          %s506 = sadd.s32 %s501, %s505
          %s507 = smul.addr %s506, 128
          %s508 = scalar_lea.hbm %s0, %s507
          %s509 = sshll.u32 %s500, 4
          %s510 = int_to_ptr.vmem [resolvable:$true] %s509
          %515 = dma.hbm_to_vmem [thread:$0]  %s508, 2048, %s510, %s497, 128, 128, 8
        $region68: #{tpu_custom_call.1} parent=63 // pred_fallthru
          _
        // Predicated region
        $region69: #{tpu_custom_call.1} parent=63 // pred_check
          %p516 = pneg %p92
        $region70: #{tpu_custom_call.1} parent=63 // pred_check_branch
          %518 = sbr.rel (%p516) target = $region72
        $region71: #{tpu_custom_call.1} parent=63 // pred_region
          %s519 = sand.u32 %s32, 1
          %s520 = scalar_lea.sflag [#allocation6], %s519
          %s521 = sand.u32 %s82, 1
          %s522 = smul.addr %s521, 128
          %s523 = scalar_lea.vmem [#allocation5], %s522
          %s525 = ssub.s32 2048, 2048
          %526 = vsyncadd %s520, %s525
          %s527 = smul.addr %s39, 16
          %s528 = smul.addr %s527, 128
          %s529 = scalar_lea.hbm %s1, %s528
          %s530 = sshll.u32 %s523, 4
          %s531 = int_to_ptr.vmem [resolvable:$true] %s530
          %536 = dma.hbm_to_vmem [thread:$0]  %s529, 2048, %s531, %s520, 128, 128, 8
        $region72: #{tpu_custom_call.1} parent=63 // pred_fallthru
          _
      $region64: #{tpu_custom_call.1} parent=5 // pred_fallthru
        _
      %p537 = scmp.le.s32.totalorder 1, %s32
      %p538 = scmp.lt.s32.totalorder %s32, 3
      %p539 = pnand %p537, %p538
      %p540 = pneg %p539
      // Predicated region
      $region73: #{tpu_custom_call.1} parent=5 // pred_check
        _
      $region74: #{tpu_custom_call.1} parent=5 // pred_check_branch
        %542 = sbr.rel (%p539) target = $region76
      $region75: #{tpu_custom_call.1} parent=5 // pred_region
        %s543 = ssub.s32 %s32, 1
        %s544 = sand.u32 %s59, 1
        %s545 = scalar_lea.sflag [#allocation3], %s544
        %s546 = sand.u32 %s59, 1
        %s547 = smul.addr %s546, 128
        %s548 = scalar_lea.vmem [#allocation2], %s547
        // Predicated region
        $region77: #{tpu_custom_call.1} parent=75 // pred_check
          %p549 = pneg %p72
        $region78: #{tpu_custom_call.1} parent=75 // pred_check_branch
          %551 = sbr.rel (%p549) target = $region80
        $region79: #{tpu_custom_call.1} parent=75 // pred_region
          %552 = dma.done %s545, 2048
        $region80: #{tpu_custom_call.1} parent=75 // pred_fallthru
          _
        %s553 = sand.u32 %s37, 1
        %s554 = scalar_lea.sflag [#allocation6], %s553
        %s555 = sand.u32 %s85, 1
        %s556 = smul.addr %s555, 128
        %s557 = scalar_lea.vmem [#allocation5], %s556
        // Predicated region
        $region81: #{tpu_custom_call.1} parent=75 // pred_check
          %p558 = pneg %p98
        $region82: #{tpu_custom_call.1} parent=75 // pred_check_branch
          %560 = sbr.rel (%p558) target = $region84
        $region83: #{tpu_custom_call.1} parent=75 // pred_region
          %561 = dma.done %s554, 2048
        $region84: #{tpu_custom_call.1} parent=75 // pred_fallthru
          _
        // Predicated region
        $region85: #{tpu_custom_call.1} parent=75 // pred_check
          %p562 = pneg %p119
        $region86: #{tpu_custom_call.1} parent=75 // pred_check_branch
          %564 = sbr.rel (%p562) target = $region88
        $region87: #{tpu_custom_call.1} parent=75 // pred_region
          %565 = dma.done [#allocation6], 1024
        $region88: #{tpu_custom_call.1} parent=75 // pred_fallthru
          _
        // Predicated region
        $region89: #{tpu_custom_call.1} parent=75 // pred_check
          %p566 = pneg %p140
        $region90: #{tpu_custom_call.1} parent=75 // pred_check_branch
          %568 = sbr.rel (%p566) target = $region92
        $region91: #{tpu_custom_call.1} parent=75 // pred_region
          %569 = dma.done [#allocation9], 1024
        $region92: #{tpu_custom_call.1} parent=75 // pred_fallthru
          _
        // Predicated region
        $region93: #{tpu_custom_call.1} parent=75 // pred_check
          %p570 = pneg %p161
        $region94: #{tpu_custom_call.1} parent=75 // pred_check_branch
          %572 = sbr.rel (%p570) target = $region96
        $region95: #{tpu_custom_call.1} parent=75 // pred_region
          %573 = dma.done [#allocation9], 1024
        $region96: #{tpu_custom_call.1} parent=75 // pred_fallthru
          _
        // Predicated region
        $region97: #{tpu_custom_call.1} parent=75 // pred_check
          %p574 = pneg %p182
        $region98: #{tpu_custom_call.1} parent=75 // pred_check_branch
          %576 = sbr.rel (%p574) target = $region100
        $region99: #{tpu_custom_call.1} parent=75 // pred_region
          %577 = dma.done [#allocation12], 1024
        $region100: #{tpu_custom_call.1} parent=75 // pred_fallthru
          _
        // Predicated region
        $region101: #{tpu_custom_call.1} parent=75 // pred_check
          %p578 = pneg %p245
        $region102: #{tpu_custom_call.1} parent=75 // pred_check_branch
          %580 = sbr.rel (%p578) target = $region104
        $region103: #{tpu_custom_call.1} parent=75 // pred_region
          %581 = dma.done [#allocation12], 2048
        $region104: #{tpu_custom_call.1} parent=75 // pred_fallthru
          _
        // Predicated region
        $region105: #{tpu_custom_call.1} parent=75 // pred_check
          %p582 = pneg %p287
        $region106: #{tpu_custom_call.1} parent=75 // pred_check_branch
          %584 = sbr.rel (%p582) target = $region108
        $region107: #{tpu_custom_call.1} parent=75 // pred_region
          %585 = dma.done [#allocation15], 2048
        $region108: #{tpu_custom_call.1} parent=75 // pred_fallthru
          _
        %s586 = sand.u32 %s59, 1
        %s587 = scalar_lea.sflag [#allocation3], %s586
        %s588 = sand.u32 %s59, 1
        %s589 = smul.addr %s588, 128
        %s590 = scalar_lea.vmem [#allocation2], %s589
        %p591 = pneg %p72
        %p592 = pneg %p69
        %s593 = sand.u32 %s37, 1
        %s594 = scalar_lea.sflag [#allocation6], %s593
        %s595 = sand.u32 %s85, 1
        %s596 = smul.addr %s595, 128
        %s597 = scalar_lea.vmem [#allocation5], %s596
        %p598 = pneg %p98
        %p599 = pneg %p95
        %p600 = pneg %p119
        %p601 = pneg %p116
        %p602 = pneg %p140
        %p603 = pneg %p137
        %p604 = pneg %p161
        %p605 = pneg %p158
        %p606 = pneg %p182
        %p607 = pneg %p179
        %p608 = pneg %p203
        %p609 = pneg %p200
        %p610 = pneg %p224
        %p611 = pneg %p221
        %p612 = pneg %p245
        %p613 = pneg %p242
        %p614 = pneg %p266
        %p615 = pneg %p263
        %p616 = pneg %p287
        %p617 = pneg %p284
        %p618 = pneg %p308
        %p619 = pneg %p305
        %p620 = pneg %p329
        %p621 = pneg %p326
        %p622 = pneg %p350
        %p623 = pneg %p347
        %p624 = pneg %p378
        %p625 = pneg %p375
        %s626 = sand.u32 %s365, 1
        %s627 = scalar_lea.sflag [#allocation4], %s626
        %s628 = sand.u32 %s365, 1
        %s629 = smul.addr %s628, 128
        %s630 = scalar_lea.vmem [#allocation16], %s629
        %s631 = smul.u32 16, %s42
        %s632 = smul.u32 16, %s42
        %v634 = vld [vmem:[%s548] sm:$0xff]
        %v635 = vld [vmem:[%s548 + $0x8] sm:$0xff]
        %v636 = vld [vmem:[%s548 + $0x10] sm:$0xff]
        %v637 = vld [vmem:[%s548 + $0x18] sm:$0xff]
        %v638 = vld [vmem:[%s548 + $0x20] sm:$0xff]
        %v639 = vld [vmem:[%s548 + $0x28] sm:$0xff]
        %v640 = vld [vmem:[%s548 + $0x30] sm:$0xff]
        %v641 = vld [vmem:[%s548 + $0x38] sm:$0xff]
        %v642 = vld [vmem:[%s548 + $0x40] sm:$0xff]
        %v643 = vld [vmem:[%s548 + $0x48] sm:$0xff]
        %v644 = vld [vmem:[%s548 + $0x50] sm:$0xff]
        %v645 = vld [vmem:[%s548 + $0x58] sm:$0xff]
        %v646 = vld [vmem:[%s548 + $0x60] sm:$0xff]
        %v647 = vld [vmem:[%s548 + $0x68] sm:$0xff]
        %v648 = vld [vmem:[%s548 + $0x70] sm:$0xff]
        %v649 = vld [vmem:[%s548 + $0x78] sm:$0xff]
        %v650 = vpack.c.bf16 %v635, %v634
        %v651 = vpack.c.bf16 %v637, %v636
        %v652 = vpack.c.bf16 %v639, %v638
        %v653 = vpack.c.bf16 %v641, %v640
        %v654 = vpack.c.bf16 %v643, %v642
        %v655 = vpack.c.bf16 %v645, %v644
        %v656 = vpack.c.bf16 %v647, %v646
        %v657 = vpack.c.bf16 %v649, %v648
        %v658 = vld [vmem:[%s557] sm:$0xff]
        %v659 = vld [vmem:[%s557 + $0x8] sm:$0xff]
        %v660 = vld [vmem:[%s557 + $0x10] sm:$0xff]
        %v661 = vld [vmem:[%s557 + $0x18] sm:$0xff]
        %v662 = vld [vmem:[%s557 + $0x20] sm:$0xff]
        %v663 = vld [vmem:[%s557 + $0x28] sm:$0xff]
        %v664 = vld [vmem:[%s557 + $0x30] sm:$0xff]
        %v665 = vld [vmem:[%s557 + $0x38] sm:$0xff]
        %v666 = vld [vmem:[%s557 + $0x40] sm:$0xff]
        %v667 = vld [vmem:[%s557 + $0x48] sm:$0xff]
        %v668 = vld [vmem:[%s557 + $0x50] sm:$0xff]
        %v669 = vld [vmem:[%s557 + $0x58] sm:$0xff]
        %v670 = vld [vmem:[%s557 + $0x60] sm:$0xff]
        %v671 = vld [vmem:[%s557 + $0x68] sm:$0xff]
        %v672 = vld [vmem:[%s557 + $0x70] sm:$0xff]
        %v673 = vld [vmem:[%s557 + $0x78] sm:$0xff]
        %v674 = vpack.c.bf16 %v659, %v658
        %v675 = vpack.c.bf16 %v661, %v660
        %v676 = vpack.c.bf16 %v663, %v662
        %v677 = vpack.c.bf16 %v665, %v664
        %v678 = vpack.c.bf16 %v667, %v666
        %v679 = vpack.c.bf16 %v669, %v668
        %v680 = vpack.c.bf16 %v671, %v670
        %v681 = vpack.c.bf16 %v673, %v672
        %v682 = vld [vmem:[#allocation7] sm:$0xf]
        %v683 = vld [vmem:[#allocation7 + $0x4] sm:$0xf]
        %v684 = vld [vmem:[#allocation7 + $0x8] sm:$0xf]
        %v685 = vld [vmem:[#allocation7 + $0xc] sm:$0xf]
        %v686 = vld [vmem:[#allocation7 + $0x10] sm:$0xf]
        %v687 = vld [vmem:[#allocation7 + $0x14] sm:$0xf]
        %v688 = vld [vmem:[#allocation7 + $0x18] sm:$0xf]
        %v689 = vld [vmem:[#allocation7 + $0x1c] sm:$0xf]
        %v690 = vld [vmem:[#allocation7 + $0x20] sm:$0xf]
        %v691 = vld [vmem:[#allocation7 + $0x24] sm:$0xf]
        %v692 = vld [vmem:[#allocation7 + $0x28] sm:$0xf]
        %v693 = vld [vmem:[#allocation7 + $0x2c] sm:$0xf]
        %v694 = vld [vmem:[#allocation7 + $0x30] sm:$0xf]
        %v695 = vld [vmem:[#allocation7 + $0x34] sm:$0xf]
        %v696 = vld [vmem:[#allocation7 + $0x38] sm:$0xf]
        %v697 = vld [vmem:[#allocation7 + $0x3c] sm:$0xf]
        %v714 = vunpack.c.l.b16 %v682
        %v715 = vunpack.c.l.b16 %v683
        %v716 = vunpack.c.l.b16 %v684
        %v717 = vunpack.c.l.b16 %v685
        %v718 = vunpack.c.l.b16 %v686
        %v719 = vunpack.c.l.b16 %v687
        %v720 = vunpack.c.l.b16 %v688
        %v721 = vunpack.c.l.b16 %v689
        %v722 = vunpack.c.l.b16 %v690
        %v723 = vunpack.c.l.b16 %v691
        %v724 = vunpack.c.l.b16 %v692
        %v725 = vunpack.c.l.b16 %v693
        %v726 = vunpack.c.l.b16 %v694
        %v727 = vunpack.c.l.b16 %v695
        %v728 = vunpack.c.l.b16 %v696
        %v729 = vunpack.c.l.b16 %v697
        %v730 = vpack.c.b16 %v715, %v714
        %v731 = vpack.c.b16 %v717, %v716
        %v732 = vpack.c.b16 %v719, %v718
        %v733 = vpack.c.b16 %v721, %v720
        %v734 = vpack.c.b16 %v723, %v722
        %v735 = vpack.c.b16 %v725, %v724
        %v736 = vpack.c.b16 %v727, %v726
        %v737 = vpack.c.b16 %v729, %v728
        %746 = vmatprep.subr.bf16.mxu0 0
        %747 = vmatpush1.bf16.msra.mxu0 %v737
        %748 = vmatprep.subr.bf16.mxu0 0
        %749 = vmatpush1.bf16.msra.mxu0 %v736
        %750 = vmatprep.subr.bf16.mxu0 0
        %751 = vmatpush1.bf16.msra.mxu0 %v735
        %752 = vmatprep.subr.bf16.mxu0 0
        %753 = vmatpush1.bf16.msra.mxu0 %v734
        %754 = vmatprep.subr.bf16.mxu0 0
        %755 = vmatpush1.bf16.msra.mxu0 %v733
        %756 = vmatprep.subr.bf16.mxu0 0
        %757 = vmatpush1.bf16.msra.mxu0 %v732
        %758 = vmatprep.subr.bf16.mxu0 0
        %759 = vmatpush1.bf16.msra.mxu0 %v731
        %760 = vmatprep.subr.bf16.mxu0 0
        %761 = vmatpush1.bf16.msra.mxu0 %v730
        %762 = vmatprep.subr.bf16.mxu0 0
        %763 = vmatpush2.bf16.msra.mxu0 0
        %764 = vmatprep.subr.bf16.mxu0 0
        %765 = vmatpush2.bf16.msra.mxu0 0
        %766 = vmatprep.subr.bf16.mxu0 0
        %767 = vmatpush2.bf16.msra.mxu0 0
        %768 = vmatprep.subr.bf16.mxu0 0
        %769 = vmatpush2.bf16.msra.mxu0 0
        %770 = vmatprep.subr.bf16.mxu0 0
        %771 = vmatpush2.bf16.msra.mxu0 0
        %772 = vmatprep.subr.bf16.mxu0 0
        %773 = vmatpush2.bf16.msra.mxu0 0
        %774 = vmatprep.subr.bf16.mxu0 0
        %775 = vmatpush2.bf16.msra.mxu0 0
        %776 = vmatprep.subr.bf16.mxu0 0
        %777 = vmatpush2.bf16.msra.mxu0 0
        %778 = vmatprep.mubr.bf16.mxu0 0
        %779 = vmatmul.mubr.bf16.gmra.mxu0 %v650
        %v780 = vpop.f32.mrf.mxu0
        %v781 = vadd.f32 0.0, %v780
        %v782 = vpop.f32.mrf.mxu0
        %v783 = vpop.f32.mrf.mxu0
        %v784 = vadd.f32 0.0, %v783
        %v785 = vpop.f32.mrf.mxu0
        %786 = vmatprep.mubr.bf16.mxu0 0
        %787 = vmatmul.mubr.bf16.gmra.mxu0 %v651
        %v788 = vpop.f32.mrf.mxu0
        %v789 = vadd.f32 0.0, %v788
        %v790 = vpop.f32.mrf.mxu0
        %v791 = vpop.f32.mrf.mxu0
        %v792 = vadd.f32 0.0, %v791
        %v793 = vpop.f32.mrf.mxu0
        %794 = vmatprep.mubr.bf16.mxu0 0
        %795 = vmatmul.mubr.bf16.gmra.mxu0 %v652
        %v796 = vpop.f32.mrf.mxu0
        %v797 = vadd.f32 0.0, %v796
        %v798 = vpop.f32.mrf.mxu0
        %v799 = vpop.f32.mrf.mxu0
        %v800 = vadd.f32 0.0, %v799
        %v801 = vpop.f32.mrf.mxu0
        %802 = vmatprep.mubr.bf16.mxu0 0
        %803 = vmatmul.mubr.bf16.gmra.mxu0 %v653
        %v804 = vpop.f32.mrf.mxu0
        %v805 = vadd.f32 0.0, %v804
        %v806 = vpop.f32.mrf.mxu0
        %v807 = vpop.f32.mrf.mxu0
        %v808 = vadd.f32 0.0, %v807
        %v809 = vpop.f32.mrf.mxu0
        %810 = vmatprep.mubr.bf16.mxu0 0
        %811 = vmatmul.mubr.bf16.gmra.mxu0 %v654
        %v812 = vpop.f32.mrf.mxu0
        %v813 = vadd.f32 0.0, %v812
        %v814 = vpop.f32.mrf.mxu0
        %v815 = vpop.f32.mrf.mxu0
        %v816 = vadd.f32 0.0, %v815
        %v817 = vpop.f32.mrf.mxu0
        %818 = vmatprep.mubr.bf16.mxu0 0
        %819 = vmatmul.mubr.bf16.gmra.mxu0 %v655
        %v820 = vpop.f32.mrf.mxu0
        %v821 = vadd.f32 0.0, %v820
        %v822 = vpop.f32.mrf.mxu0
        %v823 = vpop.f32.mrf.mxu0
        %v824 = vadd.f32 0.0, %v823
        %v825 = vpop.f32.mrf.mxu0
        %826 = vmatprep.mubr.bf16.mxu0 0
        %827 = vmatmul.mubr.bf16.gmra.mxu0 %v656
        %v828 = vpop.f32.mrf.mxu0
        %v829 = vadd.f32 0.0, %v828
        %v830 = vpop.f32.mrf.mxu0
        %v831 = vpop.f32.mrf.mxu0
        %v832 = vadd.f32 0.0, %v831
        %v833 = vpop.f32.mrf.mxu0
        %834 = vmatprep.mubr.bf16.mxu0 0
        %835 = vmatmul.mubr.bf16.gmra.mxu0 %v657
        %v836 = vpop.f32.mrf.mxu0
        %v837 = vadd.f32 0.0, %v836
        %v838 = vpop.f32.mrf.mxu0
        %v839 = vpop.f32.mrf.mxu0
        %v840 = vadd.f32 0.0, %v839
        %v841 = vpop.f32.mrf.mxu0
        %842 = vdwg.mxu0
        %v843 = vld [vmem:[#allocation8] sm:$0xf]
        %v844 = vld [vmem:[#allocation8 + $0x4] sm:$0xf]
        %v845 = vld [vmem:[#allocation8 + $0x8] sm:$0xf]
        %v846 = vld [vmem:[#allocation8 + $0xc] sm:$0xf]
        %v847 = vld [vmem:[#allocation8 + $0x10] sm:$0xf]
        %v848 = vld [vmem:[#allocation8 + $0x14] sm:$0xf]
        %v849 = vld [vmem:[#allocation8 + $0x18] sm:$0xf]
        %v850 = vld [vmem:[#allocation8 + $0x1c] sm:$0xf]
        %v851 = vld [vmem:[#allocation8 + $0x20] sm:$0xf]
        %v852 = vld [vmem:[#allocation8 + $0x24] sm:$0xf]
        %v853 = vld [vmem:[#allocation8 + $0x28] sm:$0xf]
        %v854 = vld [vmem:[#allocation8 + $0x2c] sm:$0xf]
        %v855 = vld [vmem:[#allocation8 + $0x30] sm:$0xf]
        %v856 = vld [vmem:[#allocation8 + $0x34] sm:$0xf]
        %v857 = vld [vmem:[#allocation8 + $0x38] sm:$0xf]
        %v858 = vld [vmem:[#allocation8 + $0x3c] sm:$0xf]
        %v875 = vunpack.c.l.b16 %v843
        %v876 = vunpack.c.l.b16 %v844
        %v877 = vunpack.c.l.b16 %v845
        %v878 = vunpack.c.l.b16 %v846
        %v879 = vunpack.c.l.b16 %v847
        %v880 = vunpack.c.l.b16 %v848
        %v881 = vunpack.c.l.b16 %v849
        %v882 = vunpack.c.l.b16 %v850
        %v883 = vunpack.c.l.b16 %v851
        %v884 = vunpack.c.l.b16 %v852
        %v885 = vunpack.c.l.b16 %v853
        %v886 = vunpack.c.l.b16 %v854
        %v887 = vunpack.c.l.b16 %v855
        %v888 = vunpack.c.l.b16 %v856
        %v889 = vunpack.c.l.b16 %v857
        %v890 = vunpack.c.l.b16 %v858
        %v891 = vpack.c.b16 %v876, %v875
        %v892 = vpack.c.b16 %v878, %v877
        %v893 = vpack.c.b16 %v880, %v879
        %v894 = vpack.c.b16 %v882, %v881
        %v895 = vpack.c.b16 %v884, %v883
        %v896 = vpack.c.b16 %v886, %v885
        %v897 = vpack.c.b16 %v888, %v887
        %v898 = vpack.c.b16 %v890, %v889
        %907 = vmatprep.subr.bf16.mxu0 0
        %908 = vmatpush1.bf16.msra.mxu0 %v898
        %909 = vmatprep.subr.bf16.mxu0 0
        %910 = vmatpush1.bf16.msra.mxu0 %v897
        %911 = vmatprep.subr.bf16.mxu0 0
        %912 = vmatpush1.bf16.msra.mxu0 %v896
        %913 = vmatprep.subr.bf16.mxu0 0
        %914 = vmatpush1.bf16.msra.mxu0 %v895
        %915 = vmatprep.subr.bf16.mxu0 0
        %916 = vmatpush1.bf16.msra.mxu0 %v894
        %917 = vmatprep.subr.bf16.mxu0 0
        %918 = vmatpush1.bf16.msra.mxu0 %v893
        %919 = vmatprep.subr.bf16.mxu0 0
        %920 = vmatpush1.bf16.msra.mxu0 %v892
        %921 = vmatprep.subr.bf16.mxu0 0
        %922 = vmatpush1.bf16.msra.mxu0 %v891
        %923 = vmatprep.subr.bf16.mxu0 0
        %924 = vmatpush2.bf16.msra.mxu0 0
        %925 = vmatprep.subr.bf16.mxu0 0
        %926 = vmatpush2.bf16.msra.mxu0 0
        %927 = vmatprep.subr.bf16.mxu0 0
        %928 = vmatpush2.bf16.msra.mxu0 0
        %929 = vmatprep.subr.bf16.mxu0 0
        %930 = vmatpush2.bf16.msra.mxu0 0
        %931 = vmatprep.subr.bf16.mxu0 0
        %932 = vmatpush2.bf16.msra.mxu0 0
        %933 = vmatprep.subr.bf16.mxu0 0
        %934 = vmatpush2.bf16.msra.mxu0 0
        %935 = vmatprep.subr.bf16.mxu0 0
        %936 = vmatpush2.bf16.msra.mxu0 0
        %937 = vmatprep.subr.bf16.mxu0 0
        %938 = vmatpush2.bf16.msra.mxu0 0
        %939 = vmatprep.mubr.bf16.mxu0 0
        %940 = vmatmul.mubr.bf16.gmra.mxu0 %v674
        %v941 = vpop.f32.mrf.mxu0
        %v942 = vadd.f32 0.0, %v941
        %v943 = vpop.f32.mrf.mxu0
        %v944 = vpop.f32.mrf.mxu0
        %v945 = vadd.f32 0.0, %v944
        %v946 = vpop.f32.mrf.mxu0
        %947 = vmatprep.mubr.bf16.mxu0 0
        %948 = vmatmul.mubr.bf16.gmra.mxu0 %v675
        %v949 = vpop.f32.mrf.mxu0
        %v950 = vadd.f32 0.0, %v949
        %v951 = vpop.f32.mrf.mxu0
        %v952 = vpop.f32.mrf.mxu0
        %v953 = vadd.f32 0.0, %v952
        %v954 = vpop.f32.mrf.mxu0
        %955 = vmatprep.mubr.bf16.mxu0 0
        %956 = vmatmul.mubr.bf16.gmra.mxu0 %v676
        %v957 = vpop.f32.mrf.mxu0
        %v958 = vadd.f32 0.0, %v957
        %v959 = vpop.f32.mrf.mxu0
        %v960 = vpop.f32.mrf.mxu0
        %v961 = vadd.f32 0.0, %v960
        %v962 = vpop.f32.mrf.mxu0
        %963 = vmatprep.mubr.bf16.mxu0 0
        %964 = vmatmul.mubr.bf16.gmra.mxu0 %v677
        %v965 = vpop.f32.mrf.mxu0
        %v966 = vadd.f32 0.0, %v965
        %v967 = vpop.f32.mrf.mxu0
        %v968 = vpop.f32.mrf.mxu0
        %v969 = vadd.f32 0.0, %v968
        %v970 = vpop.f32.mrf.mxu0
        %971 = vmatprep.mubr.bf16.mxu0 0
        %972 = vmatmul.mubr.bf16.gmra.mxu0 %v678
        %v973 = vpop.f32.mrf.mxu0
        %v974 = vadd.f32 0.0, %v973
        %v975 = vpop.f32.mrf.mxu0
        %v976 = vpop.f32.mrf.mxu0
        %v977 = vadd.f32 0.0, %v976
        %v978 = vpop.f32.mrf.mxu0
        %979 = vmatprep.mubr.bf16.mxu0 0
        %980 = vmatmul.mubr.bf16.gmra.mxu0 %v679
        %v981 = vpop.f32.mrf.mxu0
        %v982 = vadd.f32 0.0, %v981
        %v983 = vpop.f32.mrf.mxu0
        %v984 = vpop.f32.mrf.mxu0
        %v985 = vadd.f32 0.0, %v984
        %v986 = vpop.f32.mrf.mxu0
        %987 = vmatprep.mubr.bf16.mxu0 0
        %988 = vmatmul.mubr.bf16.gmra.mxu0 %v680
        %v989 = vpop.f32.mrf.mxu0
        %v990 = vadd.f32 0.0, %v989
        %v991 = vpop.f32.mrf.mxu0
        %v992 = vpop.f32.mrf.mxu0
        %v993 = vadd.f32 0.0, %v992
        %v994 = vpop.f32.mrf.mxu0
        %995 = vmatprep.mubr.bf16.mxu0 0
        %996 = vmatmul.mubr.bf16.gmra.mxu0 %v681
        %v997 = vpop.f32.mrf.mxu0
        %v998 = vadd.f32 0.0, %v997
        %v999 = vpop.f32.mrf.mxu0
        %v1000 = vpop.f32.mrf.mxu0
        %v1001 = vadd.f32 0.0, %v1000
        %v1002 = vpop.f32.mrf.mxu0
        %1003 = vdwg.mxu0
        %v1004 = vld [vmem:[#allocation10] sm:$0xf]
        %v1005 = vld [vmem:[#allocation10 + $0x4] sm:$0xf]
        %v1006 = vld [vmem:[#allocation10 + $0x8] sm:$0xf]
        %v1007 = vld [vmem:[#allocation10 + $0xc] sm:$0xf]
        %v1008 = vld [vmem:[#allocation10 + $0x10] sm:$0xf]
        %v1009 = vld [vmem:[#allocation10 + $0x14] sm:$0xf]
        %v1010 = vld [vmem:[#allocation10 + $0x18] sm:$0xf]
        %v1011 = vld [vmem:[#allocation10 + $0x1c] sm:$0xf]
        %v1012 = vld [vmem:[#allocation10 + $0x20] sm:$0xf]
        %v1013 = vld [vmem:[#allocation10 + $0x24] sm:$0xf]
        %v1014 = vld [vmem:[#allocation10 + $0x28] sm:$0xf]
        %v1015 = vld [vmem:[#allocation10 + $0x2c] sm:$0xf]
        %v1016 = vld [vmem:[#allocation10 + $0x30] sm:$0xf]
        %v1017 = vld [vmem:[#allocation10 + $0x34] sm:$0xf]
        %v1018 = vld [vmem:[#allocation10 + $0x38] sm:$0xf]
        %v1019 = vld [vmem:[#allocation10 + $0x3c] sm:$0xf]
        %v1036 = vunpack.c.l.b16 %v1004
        %v1037 = vunpack.c.l.b16 %v1005
        %v1038 = vunpack.c.l.b16 %v1006
        %v1039 = vunpack.c.l.b16 %v1007
        %v1040 = vunpack.c.l.b16 %v1008
        %v1041 = vunpack.c.l.b16 %v1009
        %v1042 = vunpack.c.l.b16 %v1010
        %v1043 = vunpack.c.l.b16 %v1011
        %v1044 = vunpack.c.l.b16 %v1012
        %v1045 = vunpack.c.l.b16 %v1013
        %v1046 = vunpack.c.l.b16 %v1014
        %v1047 = vunpack.c.l.b16 %v1015
        %v1048 = vunpack.c.l.b16 %v1016
        %v1049 = vunpack.c.l.b16 %v1017
        %v1050 = vunpack.c.l.b16 %v1018
        %v1051 = vunpack.c.l.b16 %v1019
        %v1052 = vpack.c.b16 %v1037, %v1036
        %v1053 = vpack.c.b16 %v1039, %v1038
        %v1054 = vpack.c.b16 %v1041, %v1040
        %v1055 = vpack.c.b16 %v1043, %v1042
        %v1056 = vpack.c.b16 %v1045, %v1044
        %v1057 = vpack.c.b16 %v1047, %v1046
        %v1058 = vpack.c.b16 %v1049, %v1048
        %v1059 = vpack.c.b16 %v1051, %v1050
        %1068 = vmatprep.subr.bf16.mxu0 0
        %1069 = vmatpush1.bf16.msra.mxu0 %v1059
        %1070 = vmatprep.subr.bf16.mxu0 0
        %1071 = vmatpush1.bf16.msra.mxu0 %v1058
        %1072 = vmatprep.subr.bf16.mxu0 0
        %1073 = vmatpush1.bf16.msra.mxu0 %v1057
        %1074 = vmatprep.subr.bf16.mxu0 0
        %1075 = vmatpush1.bf16.msra.mxu0 %v1056
        %1076 = vmatprep.subr.bf16.mxu0 0
        %1077 = vmatpush1.bf16.msra.mxu0 %v1055
        %1078 = vmatprep.subr.bf16.mxu0 0
        %1079 = vmatpush1.bf16.msra.mxu0 %v1054
        %1080 = vmatprep.subr.bf16.mxu0 0
        %1081 = vmatpush1.bf16.msra.mxu0 %v1053
        %1082 = vmatprep.subr.bf16.mxu0 0
        %1083 = vmatpush1.bf16.msra.mxu0 %v1052
        %1084 = vmatprep.subr.bf16.mxu0 0
        %1085 = vmatpush2.bf16.msra.mxu0 0
        %1086 = vmatprep.subr.bf16.mxu0 0
        %1087 = vmatpush2.bf16.msra.mxu0 0
        %1088 = vmatprep.subr.bf16.mxu0 0
        %1089 = vmatpush2.bf16.msra.mxu0 0
        %1090 = vmatprep.subr.bf16.mxu0 0
        %1091 = vmatpush2.bf16.msra.mxu0 0
        %1092 = vmatprep.subr.bf16.mxu0 0
        %1093 = vmatpush2.bf16.msra.mxu0 0
        %1094 = vmatprep.subr.bf16.mxu0 0
        %1095 = vmatpush2.bf16.msra.mxu0 0
        %1096 = vmatprep.subr.bf16.mxu0 0
        %1097 = vmatpush2.bf16.msra.mxu0 0
        %1098 = vmatprep.subr.bf16.mxu0 0
        %1099 = vmatpush2.bf16.msra.mxu0 0
        %1100 = vmatprep.mubr.bf16.mxu0 0
        %1101 = vmatmul.mubr.bf16.gmra.mxu0 %v674
        %v1102 = vpop.f32.mrf.mxu0
        %v1103 = vadd.f32 0.0, %v1102
        %v1104 = vpop.f32.mrf.mxu0
        %v1105 = vpop.f32.mrf.mxu0
        %v1106 = vadd.f32 0.0, %v1105
        %v1107 = vpop.f32.mrf.mxu0
        %1108 = vmatprep.mubr.bf16.mxu0 0
        %1109 = vmatmul.mubr.bf16.gmra.mxu0 %v675
        %v1110 = vpop.f32.mrf.mxu0
        %v1111 = vadd.f32 0.0, %v1110
        %v1112 = vpop.f32.mrf.mxu0
        %v1113 = vpop.f32.mrf.mxu0
        %v1114 = vadd.f32 0.0, %v1113
        %v1115 = vpop.f32.mrf.mxu0
        %1116 = vmatprep.mubr.bf16.mxu0 0
        %1117 = vmatmul.mubr.bf16.gmra.mxu0 %v676
        %v1118 = vpop.f32.mrf.mxu0
        %v1119 = vadd.f32 0.0, %v1118
        %v1120 = vpop.f32.mrf.mxu0
        %v1121 = vpop.f32.mrf.mxu0
        %v1122 = vadd.f32 0.0, %v1121
        %v1123 = vpop.f32.mrf.mxu0
        %1124 = vmatprep.mubr.bf16.mxu0 0
        %1125 = vmatmul.mubr.bf16.gmra.mxu0 %v677
        %v1126 = vpop.f32.mrf.mxu0
        %v1127 = vadd.f32 0.0, %v1126
        %v1128 = vpop.f32.mrf.mxu0
        %v1129 = vpop.f32.mrf.mxu0
        %v1130 = vadd.f32 0.0, %v1129
        %v1131 = vpop.f32.mrf.mxu0
        %1132 = vmatprep.mubr.bf16.mxu0 0
        %1133 = vmatmul.mubr.bf16.gmra.mxu0 %v678
        %v1134 = vpop.f32.mrf.mxu0
        %v1135 = vadd.f32 0.0, %v1134
        %v1136 = vpop.f32.mrf.mxu0
        %v1137 = vpop.f32.mrf.mxu0
        %v1138 = vadd.f32 0.0, %v1137
        %v1139 = vpop.f32.mrf.mxu0
        %1140 = vmatprep.mubr.bf16.mxu0 0
        %1141 = vmatmul.mubr.bf16.gmra.mxu0 %v679
        %v1142 = vpop.f32.mrf.mxu0
        %v1143 = vadd.f32 0.0, %v1142
        %v1144 = vpop.f32.mrf.mxu0
        %v1145 = vpop.f32.mrf.mxu0
        %v1146 = vadd.f32 0.0, %v1145
        %v1147 = vpop.f32.mrf.mxu0
        %1148 = vmatprep.mubr.bf16.mxu0 0
        %1149 = vmatmul.mubr.bf16.gmra.mxu0 %v680
        %v1150 = vpop.f32.mrf.mxu0
        %v1151 = vadd.f32 0.0, %v1150
        %v1152 = vpop.f32.mrf.mxu0
        %v1153 = vpop.f32.mrf.mxu0
        %v1154 = vadd.f32 0.0, %v1153
        %v1155 = vpop.f32.mrf.mxu0
        %1156 = vmatprep.mubr.bf16.mxu0 0
        %1157 = vmatmul.mubr.bf16.gmra.mxu0 %v681
        %v1158 = vpop.f32.mrf.mxu0
        %v1159 = vadd.f32 0.0, %v1158
        %v1160 = vpop.f32.mrf.mxu0
        %v1161 = vpop.f32.mrf.mxu0
        %v1162 = vadd.f32 0.0, %v1161
        %v1163 = vpop.f32.mrf.mxu0
        %1164 = vdwg.mxu0
        %v1165 = vmul.f32 %v781, 0.17677669
        %v1166 = vmul.f32 %v784, 0.17677669
        %v1167 = vmul.f32 %v789, 0.17677669
        %v1168 = vmul.f32 %v792, 0.17677669
        %v1169 = vmul.f32 %v797, 0.17677669
        %v1170 = vmul.f32 %v800, 0.17677669
        %v1171 = vmul.f32 %v805, 0.17677669
        %v1172 = vmul.f32 %v808, 0.17677669
        %v1173 = vmul.f32 %v813, 0.17677669
        %v1174 = vmul.f32 %v816, 0.17677669
        %v1175 = vmul.f32 %v821, 0.17677669
        %v1176 = vmul.f32 %v824, 0.17677669
        %v1177 = vmul.f32 %v829, 0.17677669
        %v1178 = vmul.f32 %v832, 0.17677669
        %v1179 = vmul.f32 %v837, 0.17677669
        %v1180 = vmul.f32 %v840, 0.17677669
        %v1181 = vpack.c.bf16 %v1166, %v1165
        %v1182 = vpack.c.bf16 %v1168, %v1167
        %v1183 = vpack.c.bf16 %v1170, %v1169
        %v1184 = vpack.c.bf16 %v1172, %v1171
        %v1185 = vpack.c.bf16 %v1174, %v1173
        %v1186 = vpack.c.bf16 %v1176, %v1175
        %v1187 = vpack.c.bf16 %v1178, %v1177
        %v1188 = vpack.c.bf16 %v1180, %v1179
        %v1189 = vpack.c.bf16 %v945, %v942
        %v1190 = vpack.c.bf16 %v953, %v950
        %v1191 = vpack.c.bf16 %v961, %v958
        %v1192 = vpack.c.bf16 %v969, %v966
        %v1193 = vpack.c.bf16 %v977, %v974
        %v1194 = vpack.c.bf16 %v985, %v982
        %v1195 = vpack.c.bf16 %v993, %v990
        %v1196 = vpack.c.bf16 %v1001, %v998
        %v1197 = vpack.c.bf16 %v1106, %v1103
        %v1198 = vpack.c.bf16 %v1114, %v1111
        %v1199 = vpack.c.bf16 %v1122, %v1119
        %v1200 = vpack.c.bf16 %v1130, %v1127
        %v1201 = vpack.c.bf16 %v1138, %v1135
        %v1202 = vpack.c.bf16 %v1146, %v1143
        %v1203 = vpack.c.bf16 %v1154, %v1151
        %v1204 = vpack.c.bf16 %v1162, %v1159
        %vm1205 = vcmask 261120
        %v1207 = vsel %vm1205, %v1181, 0
        %v1210 = vsel %vm1205, %v1182, 0
        %v1213 = vsel %vm1205, %v1183, 0
        %v1216 = vsel %vm1205, %v1184, 0
        %v1219 = vsel %vm1205, %v1185, 0
        %v1222 = vsel %vm1205, %v1186, 0
        %v1225 = vsel %vm1205, %v1187, 0
        %v1228 = vsel %vm1205, %v1188, 0
        %v1231 = vsel %vm1205, %v1189, 0
        %v1234 = vsel %vm1205, %v1190, 0
        %v1237 = vsel %vm1205, %v1191, 0
        %v1240 = vsel %vm1205, %v1192, 0
        %v1243 = vsel %vm1205, %v1193, 0
        %v1246 = vsel %vm1205, %v1194, 0
        %v1249 = vsel %vm1205, %v1195, 0
        %v1252 = vsel %vm1205, %v1196, 0
        %1254 = vmatprep.subr.bf16.mxu0 0
        %1255 = vmatpush1.bf16.xpose.msra.mxu0 %v1252
        %1256 = vmatprep.subr.bf16.mxu0 0
        %1257 = vmatpush1.bf16.xpose.msra.mxu0 %v1249
        %1258 = vmatprep.subr.bf16.mxu0 0
        %1259 = vmatpush1.bf16.xpose.msra.mxu0 %v1246
        %1260 = vmatprep.subr.bf16.mxu0 0
        %1261 = vmatpush1.bf16.xpose.msra.mxu0 %v1243
        %1262 = vmatprep.subr.bf16.mxu0 0
        %1263 = vmatpush1.bf16.xpose.msra.mxu0 %v1240
        %1264 = vmatprep.subr.bf16.mxu0 0
        %1265 = vmatpush1.bf16.xpose.msra.mxu0 %v1237
        %1266 = vmatprep.subr.bf16.mxu0 0
        %1267 = vmatpush1.bf16.xpose.msra.mxu0 %v1234
        %1268 = vmatprep.subr.bf16.mxu0 0
        %1269 = vmatpush1.bf16.xpose.msra.mxu0 %v1231
        %1270 = vmatprep.subr.bf16.mxu0 0
        %1271 = vmatpush2.bf16.xpose.msra.mxu0 0
        %1272 = vmatprep.subr.bf16.mxu0 0
        %1273 = vmatpush2.bf16.xpose.msra.mxu0 0
        %1274 = vmatprep.subr.bf16.mxu0 0
        %1275 = vmatpush2.bf16.xpose.msra.mxu0 0
        %1276 = vmatprep.subr.bf16.mxu0 0
        %1277 = vmatpush2.bf16.xpose.msra.mxu0 0
        %1278 = vmatprep.subr.bf16.mxu0 0
        %1279 = vmatpush2.bf16.xpose.msra.mxu0 0
        %1280 = vmatprep.subr.bf16.mxu0 0
        %1281 = vmatpush2.bf16.xpose.msra.mxu0 0
        %1282 = vmatprep.subr.bf16.mxu0 0
        %1283 = vmatpush2.bf16.xpose.msra.mxu0 0
        %1284 = vmatprep.subr.bf16.mxu0 0
        %1285 = vmatpush2.bf16.xpose.msra.mxu0 0
        %1286 = vmatprep.mubr.bf16.mxu0 0
        %1287 = vmatmul.mubr.bf16.gmra.mxu0 %v1207
        %v1288 = vpop.f32.mrf.mxu0
        %v1289 = vadd.f32 0.0, %v1288
        %v1290 = vpop.f32.mrf.mxu0
        %v1291 = vpop.f32.mrf.mxu0
        %v1292 = vadd.f32 0.0, %v1291
        %v1293 = vpop.f32.mrf.mxu0
        %1294 = vmatprep.mubr.bf16.mxu0 0
        %1295 = vmatmul.mubr.bf16.gmra.mxu0 %v1210
        %v1296 = vpop.f32.mrf.mxu0
        %v1297 = vadd.f32 0.0, %v1296
        %v1298 = vpop.f32.mrf.mxu0
        %v1299 = vpop.f32.mrf.mxu0
        %v1300 = vadd.f32 0.0, %v1299
        %v1301 = vpop.f32.mrf.mxu0
        %1302 = vmatprep.mubr.bf16.mxu0 0
        %1303 = vmatmul.mubr.bf16.gmra.mxu0 %v1213
        %v1304 = vpop.f32.mrf.mxu0
        %v1305 = vadd.f32 0.0, %v1304
        %v1306 = vpop.f32.mrf.mxu0
        %v1307 = vpop.f32.mrf.mxu0
        %v1308 = vadd.f32 0.0, %v1307
        %v1309 = vpop.f32.mrf.mxu0
        %1310 = vmatprep.mubr.bf16.mxu0 0
        %1311 = vmatmul.mubr.bf16.gmra.mxu0 %v1216
        %v1312 = vpop.f32.mrf.mxu0
        %v1313 = vadd.f32 0.0, %v1312
        %v1314 = vpop.f32.mrf.mxu0
        %v1315 = vpop.f32.mrf.mxu0
        %v1316 = vadd.f32 0.0, %v1315
        %v1317 = vpop.f32.mrf.mxu0
        %1318 = vmatprep.mubr.bf16.mxu0 0
        %1319 = vmatmul.mubr.bf16.gmra.mxu0 %v1219
        %v1320 = vpop.f32.mrf.mxu0
        %v1321 = vadd.f32 0.0, %v1320
        %v1322 = vpop.f32.mrf.mxu0
        %v1323 = vpop.f32.mrf.mxu0
        %v1324 = vadd.f32 0.0, %v1323
        %v1325 = vpop.f32.mrf.mxu0
        %1326 = vmatprep.mubr.bf16.mxu0 0
        %1327 = vmatmul.mubr.bf16.gmra.mxu0 %v1222
        %v1328 = vpop.f32.mrf.mxu0
        %v1329 = vadd.f32 0.0, %v1328
        %v1330 = vpop.f32.mrf.mxu0
        %v1331 = vpop.f32.mrf.mxu0
        %v1332 = vadd.f32 0.0, %v1331
        %v1333 = vpop.f32.mrf.mxu0
        %1334 = vmatprep.mubr.bf16.mxu0 0
        %1335 = vmatmul.mubr.bf16.gmra.mxu0 %v1225
        %v1336 = vpop.f32.mrf.mxu0
        %v1337 = vadd.f32 0.0, %v1336
        %v1338 = vpop.f32.mrf.mxu0
        %v1339 = vpop.f32.mrf.mxu0
        %v1340 = vadd.f32 0.0, %v1339
        %v1341 = vpop.f32.mrf.mxu0
        %1342 = vmatprep.mubr.bf16.mxu0 0
        %1343 = vmatmul.mubr.bf16.gmra.mxu0 %v1228
        %v1344 = vpop.f32.mrf.mxu0
        %v1345 = vadd.f32 0.0, %v1344
        %v1346 = vpop.f32.mrf.mxu0
        %v1347 = vpop.f32.mrf.mxu0
        %v1348 = vadd.f32 0.0, %v1347
        %v1349 = vpop.f32.mrf.mxu0
        %1350 = vdwg.mxu0
        %1351 = vmax.xlane.f32.xlu0 %v1289
        %v1352 = vpop.xlane.xlu0 %1351
        %1353 = vmax.xlane.f32.xlu0 %v1292
        %v1354 = vpop.xlane.xlu0 %1353
        %1355 = vmax.xlane.f32.xlu0 %v1297
        %v1356 = vpop.xlane.xlu0 %1355
        %1357 = vmax.xlane.f32.xlu0 %v1300
        %v1358 = vpop.xlane.xlu0 %1357
        %1359 = vmax.xlane.f32.xlu0 %v1305
        %v1360 = vpop.xlane.xlu0 %1359
        %1361 = vmax.xlane.f32.xlu0 %v1308
        %v1362 = vpop.xlane.xlu0 %1361
        %1363 = vmax.xlane.f32.xlu0 %v1313
        %v1364 = vpop.xlane.xlu0 %1363
        %1365 = vmax.xlane.f32.xlu0 %v1316
        %v1366 = vpop.xlane.xlu0 %1365
        %1367 = vmax.xlane.f32.xlu0 %v1321
        %v1368 = vpop.xlane.xlu0 %1367
        %1369 = vmax.xlane.f32.xlu0 %v1324
        %v1370 = vpop.xlane.xlu0 %1369
        %1371 = vmax.xlane.f32.xlu0 %v1329
        %v1372 = vpop.xlane.xlu0 %1371
        %1373 = vmax.xlane.f32.xlu0 %v1332
        %v1374 = vpop.xlane.xlu0 %1373
        %1375 = vmax.xlane.f32.xlu0 %v1337
        %v1376 = vpop.xlane.xlu0 %1375
        %1377 = vmax.xlane.f32.xlu0 %v1340
        %v1378 = vpop.xlane.xlu0 %1377
        %1379 = vmax.xlane.f32.xlu0 %v1345
        %v1380 = vpop.xlane.xlu0 %1379
        %1381 = vmax.xlane.f32.xlu0 %v1348
        %v1382 = vpop.xlane.xlu0 %1381
        %v1383 = vsub.f32 %v1289, %v1352
        %v1384 = vsub.f32 %v1292, %v1354
        %v1385 = vsub.f32 %v1297, %v1356
        %v1386 = vsub.f32 %v1300, %v1358
        %v1387 = vsub.f32 %v1305, %v1360
        %v1388 = vsub.f32 %v1308, %v1362
        %v1389 = vsub.f32 %v1313, %v1364
        %v1390 = vsub.f32 %v1316, %v1366
        %v1391 = vsub.f32 %v1321, %v1368
        %v1392 = vsub.f32 %v1324, %v1370
        %v1393 = vsub.f32 %v1329, %v1372
        %v1394 = vsub.f32 %v1332, %v1374
        %v1395 = vsub.f32 %v1337, %v1376
        %v1396 = vsub.f32 %v1340, %v1378
        %v1397 = vsub.f32 %v1345, %v1380
        %v1398 = vsub.f32 %v1348, %v1382
        %v1399 = vmul.f32 %v1383, 1.442695
        %v1400 = vpow.pop %v1399
        %v1401 = vmul.f32 %v1384, 1.442695
        %v1402 = vpow.pop %v1401
        %v1403 = vmul.f32 %v1385, 1.442695
        %v1404 = vpow.pop %v1403
        %v1405 = vmul.f32 %v1386, 1.442695
        %v1406 = vpow.pop %v1405
        %v1407 = vmul.f32 %v1387, 1.442695
        %v1408 = vpow.pop %v1407
        %v1409 = vmul.f32 %v1388, 1.442695
        %v1410 = vpow.pop %v1409
        %v1411 = vmul.f32 %v1389, 1.442695
        %v1412 = vpow.pop %v1411
        %v1413 = vmul.f32 %v1390, 1.442695
        %v1414 = vpow.pop %v1413
        %v1415 = vmul.f32 %v1391, 1.442695
        %v1416 = vpow.pop %v1415
        %v1417 = vmul.f32 %v1392, 1.442695
        %v1418 = vpow.pop %v1417
        %v1419 = vmul.f32 %v1393, 1.442695
        %v1420 = vpow.pop %v1419
        %v1421 = vmul.f32 %v1394, 1.442695
        %v1422 = vpow.pop %v1421
        %v1423 = vmul.f32 %v1395, 1.442695
        %v1424 = vpow.pop %v1423
        %v1425 = vmul.f32 %v1396, 1.442695
        %v1426 = vpow.pop %v1425
        %v1427 = vmul.f32 %v1397, 1.442695
        %v1428 = vpow.pop %v1427
        %v1429 = vmul.f32 %v1398, 1.442695
        %v1430 = vpow.pop %v1429
        %1431 = vadd.xlane.f32.xlu0 %v1400
        %v1432 = vpop.xlane.xlu0 %1431
        %1433 = vadd.xlane.f32.xlu0 %v1402
        %v1434 = vpop.xlane.xlu0 %1433
        %1435 = vadd.xlane.f32.xlu0 %v1404
        %v1436 = vpop.xlane.xlu0 %1435
        %1437 = vadd.xlane.f32.xlu0 %v1406
        %v1438 = vpop.xlane.xlu0 %1437
        %1439 = vadd.xlane.f32.xlu0 %v1408
        %v1440 = vpop.xlane.xlu0 %1439
        %1441 = vadd.xlane.f32.xlu0 %v1410
        %v1442 = vpop.xlane.xlu0 %1441
        %1443 = vadd.xlane.f32.xlu0 %v1412
        %v1444 = vpop.xlane.xlu0 %1443
        %1445 = vadd.xlane.f32.xlu0 %v1414
        %v1446 = vpop.xlane.xlu0 %1445
        %1447 = vadd.xlane.f32.xlu0 %v1416
        %v1448 = vpop.xlane.xlu0 %1447
        %1449 = vadd.xlane.f32.xlu0 %v1418
        %v1450 = vpop.xlane.xlu0 %1449
        %1451 = vadd.xlane.f32.xlu0 %v1420
        %v1452 = vpop.xlane.xlu0 %1451
        %1453 = vadd.xlane.f32.xlu0 %v1422
        %v1454 = vpop.xlane.xlu0 %1453
        %1455 = vadd.xlane.f32.xlu0 %v1424
        %v1456 = vpop.xlane.xlu0 %1455
        %1457 = vadd.xlane.f32.xlu0 %v1426
        %v1458 = vpop.xlane.xlu0 %1457
        %1459 = vadd.xlane.f32.xlu0 %v1428
        %v1460 = vpop.xlane.xlu0 %1459
        %1461 = vadd.xlane.f32.xlu0 %v1430
        %v1462 = vpop.xlane.xlu0 %1461
        %v1463 = vrcp.pop %v1432
        %v1464 = vrcp.pop %v1434
        %v1465 = vrcp.pop %v1436
        %v1466 = vrcp.pop %v1438
        %v1467 = vrcp.pop %v1440
        %v1468 = vrcp.pop %v1442
        %v1469 = vrcp.pop %v1444
        %v1470 = vrcp.pop %v1446
        %v1471 = vrcp.pop %v1448
        %v1472 = vrcp.pop %v1450
        %v1473 = vrcp.pop %v1452
        %v1474 = vrcp.pop %v1454
        %v1475 = vrcp.pop %v1456
        %v1476 = vrcp.pop %v1458
        %v1477 = vrcp.pop %v1460
        %v1478 = vrcp.pop %v1462
        %v1479 = vmul.f32 %v1400, %v1463
        %v1480 = vmul.f32 %v1402, %v1464
        %v1481 = vmul.f32 %v1404, %v1465
        %v1482 = vmul.f32 %v1406, %v1466
        %v1483 = vmul.f32 %v1408, %v1467
        %v1484 = vmul.f32 %v1410, %v1468
        %v1485 = vmul.f32 %v1412, %v1469
        %v1486 = vmul.f32 %v1414, %v1470
        %v1487 = vmul.f32 %v1416, %v1471
        %v1488 = vmul.f32 %v1418, %v1472
        %v1489 = vmul.f32 %v1420, %v1473
        %v1490 = vmul.f32 %v1422, %v1474
        %v1491 = vmul.f32 %v1424, %v1475
        %v1492 = vmul.f32 %v1426, %v1476
        %v1493 = vmul.f32 %v1428, %v1477
        %v1494 = vmul.f32 %v1430, %v1478
        %v1495 = vpack.c.bf16 %v1480, %v1479
        %v1496 = vpack.c.bf16 %v1482, %v1481
        %v1497 = vpack.c.bf16 %v1484, %v1483
        %v1498 = vpack.c.bf16 %v1486, %v1485
        %v1499 = vpack.c.bf16 %v1488, %v1487
        %v1500 = vpack.c.bf16 %v1490, %v1489
        %v1501 = vpack.c.bf16 %v1492, %v1491
        %v1502 = vpack.c.bf16 %v1494, %v1493
        %1503 = vmatprep.subr.bf16.mxu0 0
        %1504 = vmatpush1.bf16.msra.mxu0 %v1204
        %1505 = vmatprep.subr.bf16.mxu0 0
        %1506 = vmatpush1.bf16.msra.mxu0 %v1203
        %1507 = vmatprep.subr.bf16.mxu0 0
        %1508 = vmatpush1.bf16.msra.mxu0 %v1202
        %1509 = vmatprep.subr.bf16.mxu0 0
        %1510 = vmatpush1.bf16.msra.mxu0 %v1201
        %1511 = vmatprep.subr.bf16.mxu0 0
        %1512 = vmatpush1.bf16.msra.mxu0 %v1200
        %1513 = vmatprep.subr.bf16.mxu0 0
        %1514 = vmatpush1.bf16.msra.mxu0 %v1199
        %1515 = vmatprep.subr.bf16.mxu0 0
        %1516 = vmatpush1.bf16.msra.mxu0 %v1198
        %1517 = vmatprep.subr.bf16.mxu0 0
        %1518 = vmatpush1.bf16.msra.mxu0 %v1197
        %1519 = vmatprep.subr.bf16.mxu0 0
        %1520 = vmatpush2.bf16.msra.mxu0 0
        %1521 = vmatprep.subr.bf16.mxu0 0
        %1522 = vmatpush2.bf16.msra.mxu0 0
        %1523 = vmatprep.subr.bf16.mxu0 0
        %1524 = vmatpush2.bf16.msra.mxu0 0
        %1525 = vmatprep.subr.bf16.mxu0 0
        %1526 = vmatpush2.bf16.msra.mxu0 0
        %1527 = vmatprep.subr.bf16.mxu0 0
        %1528 = vmatpush2.bf16.msra.mxu0 0
        %1529 = vmatprep.subr.bf16.mxu0 0
        %1530 = vmatpush2.bf16.msra.mxu0 0
        %1531 = vmatprep.subr.bf16.mxu0 0
        %1532 = vmatpush2.bf16.msra.mxu0 0
        %1533 = vmatprep.subr.bf16.mxu0 0
        %1534 = vmatpush2.bf16.msra.mxu0 0
        %1535 = vmatprep.mubr.bf16.mxu0 0
        %1536 = vmatmul.mubr.bf16.gmra.mxu0 %v1495
        %v1537 = vpop.f32.mrf.mxu0
        %v1538 = vadd.f32 0.0, %v1537
        %v1539 = vpop.f32.mrf.mxu0
        %v1540 = vpop.f32.mrf.mxu0
        %v1541 = vadd.f32 0.0, %v1540
        %v1542 = vpop.f32.mrf.mxu0
        %1543 = vmatprep.mubr.bf16.mxu0 0
        %1544 = vmatmul.mubr.bf16.gmra.mxu0 %v1496
        %v1545 = vpop.f32.mrf.mxu0
        %v1546 = vadd.f32 0.0, %v1545
        %v1547 = vpop.f32.mrf.mxu0
        %v1548 = vpop.f32.mrf.mxu0
        %v1549 = vadd.f32 0.0, %v1548
        %v1550 = vpop.f32.mrf.mxu0
        %1551 = vmatprep.mubr.bf16.mxu0 0
        %1552 = vmatmul.mubr.bf16.gmra.mxu0 %v1497
        %v1553 = vpop.f32.mrf.mxu0
        %v1554 = vadd.f32 0.0, %v1553
        %v1555 = vpop.f32.mrf.mxu0
        %v1556 = vpop.f32.mrf.mxu0
        %v1557 = vadd.f32 0.0, %v1556
        %v1558 = vpop.f32.mrf.mxu0
        %1559 = vmatprep.mubr.bf16.mxu0 0
        %1560 = vmatmul.mubr.bf16.gmra.mxu0 %v1498
        %v1561 = vpop.f32.mrf.mxu0
        %v1562 = vadd.f32 0.0, %v1561
        %v1563 = vpop.f32.mrf.mxu0
        %v1564 = vpop.f32.mrf.mxu0
        %v1565 = vadd.f32 0.0, %v1564
        %v1566 = vpop.f32.mrf.mxu0
        %1567 = vmatprep.mubr.bf16.mxu0 0
        %1568 = vmatmul.mubr.bf16.gmra.mxu0 %v1499
        %v1569 = vpop.f32.mrf.mxu0
        %v1570 = vadd.f32 0.0, %v1569
        %v1571 = vpop.f32.mrf.mxu0
        %v1572 = vpop.f32.mrf.mxu0
        %v1573 = vadd.f32 0.0, %v1572
        %v1574 = vpop.f32.mrf.mxu0
        %1575 = vmatprep.mubr.bf16.mxu0 0
        %1576 = vmatmul.mubr.bf16.gmra.mxu0 %v1500
        %v1577 = vpop.f32.mrf.mxu0
        %v1578 = vadd.f32 0.0, %v1577
        %v1579 = vpop.f32.mrf.mxu0
        %v1580 = vpop.f32.mrf.mxu0
        %v1581 = vadd.f32 0.0, %v1580
        %v1582 = vpop.f32.mrf.mxu0
        %1583 = vmatprep.mubr.bf16.mxu0 0
        %1584 = vmatmul.mubr.bf16.gmra.mxu0 %v1501
        %v1585 = vpop.f32.mrf.mxu0
        %v1586 = vadd.f32 0.0, %v1585
        %v1587 = vpop.f32.mrf.mxu0
        %v1588 = vpop.f32.mrf.mxu0
        %v1589 = vadd.f32 0.0, %v1588
        %v1590 = vpop.f32.mrf.mxu0
        %1591 = vmatprep.mubr.bf16.mxu0 0
        %1592 = vmatmul.mubr.bf16.gmra.mxu0 %v1502
        %v1593 = vpop.f32.mrf.mxu0
        %v1594 = vadd.f32 0.0, %v1593
        %v1595 = vpop.f32.mrf.mxu0
        %v1596 = vpop.f32.mrf.mxu0
        %v1597 = vadd.f32 0.0, %v1596
        %v1598 = vpop.f32.mrf.mxu0
        %1599 = vdwg.mxu0
        %v1600 = vpack.c.bf16 %v1541, %v1538
        %v1601 = vpack.c.bf16 %v1549, %v1546
        %v1602 = vpack.c.bf16 %v1557, %v1554
        %v1603 = vpack.c.bf16 %v1565, %v1562
        %v1604 = vpack.c.bf16 %v1573, %v1570
        %v1605 = vpack.c.bf16 %v1581, %v1578
        %v1606 = vpack.c.bf16 %v1589, %v1586
        %v1607 = vpack.c.bf16 %v1597, %v1594
        %v1608 = vld [vmem:[#allocation11] sm:$0xf]
        %v1609 = vld [vmem:[#allocation11 + $0x4] sm:$0xf]
        %v1610 = vld [vmem:[#allocation11 + $0x8] sm:$0xf]
        %v1611 = vld [vmem:[#allocation11 + $0xc] sm:$0xf]
        %1620 = vrot.lane.b32.xlu0 %v1181, 96
        %v1621 = vpop.permute.xlu0 %1620
        %1622 = vrot.lane.b32.xlu0 %v1182, 96
        %v1623 = vpop.permute.xlu0 %1622
        %1624 = vrot.lane.b32.xlu0 %v1183, 96
        %v1625 = vpop.permute.xlu0 %1624
        %1626 = vrot.lane.b32.xlu0 %v1184, 96
        %v1627 = vpop.permute.xlu0 %1626
        %1628 = vrot.lane.b32.xlu0 %v1185, 96
        %v1629 = vpop.permute.xlu0 %1628
        %1630 = vrot.lane.b32.xlu0 %v1186, 96
        %v1631 = vpop.permute.xlu0 %1630
        %1632 = vrot.lane.b32.xlu0 %v1187, 96
        %v1633 = vpop.permute.xlu0 %1632
        %1634 = vrot.lane.b32.xlu0 %v1188, 96
        %v1635 = vpop.permute.xlu0 %1634
        %1644 = vrot.lane.b32.xlu0 %v1189, 96
        %v1645 = vpop.permute.xlu0 %1644
        %1646 = vrot.lane.b32.xlu0 %v1190, 96
        %v1647 = vpop.permute.xlu0 %1646
        %1648 = vrot.lane.b32.xlu0 %v1191, 96
        %v1649 = vpop.permute.xlu0 %1648
        %1650 = vrot.lane.b32.xlu0 %v1192, 96
        %v1651 = vpop.permute.xlu0 %1650
        %1652 = vrot.lane.b32.xlu0 %v1193, 96
        %v1653 = vpop.permute.xlu0 %1652
        %1654 = vrot.lane.b32.xlu0 %v1194, 96
        %v1655 = vpop.permute.xlu0 %1654
        %1656 = vrot.lane.b32.xlu0 %v1195, 96
        %v1657 = vpop.permute.xlu0 %1656
        %1658 = vrot.lane.b32.xlu0 %v1196, 96
        %v1659 = vpop.permute.xlu0 %1658
        %v1661 = vsel %vm1205, %v1621, 0
        %v1664 = vsel %vm1205, %v1623, 0
        %v1667 = vsel %vm1205, %v1625, 0
        %v1670 = vsel %vm1205, %v1627, 0
        %v1673 = vsel %vm1205, %v1629, 0
        %v1676 = vsel %vm1205, %v1631, 0
        %v1679 = vsel %vm1205, %v1633, 0
        %v1682 = vsel %vm1205, %v1635, 0
        %v1685 = vsel %vm1205, %v1645, 0
        %v1688 = vsel %vm1205, %v1647, 0
        %v1691 = vsel %vm1205, %v1649, 0
        %v1694 = vsel %vm1205, %v1651, 0
        %v1697 = vsel %vm1205, %v1653, 0
        %v1700 = vsel %vm1205, %v1655, 0
        %v1703 = vsel %vm1205, %v1657, 0
        %v1706 = vsel %vm1205, %v1659, 0
        %1708 = vmatprep.subr.bf16.mxu0 0
        %1709 = vmatpush1.bf16.xpose.msra.mxu0 %v1706
        %1710 = vmatprep.subr.bf16.mxu0 0
        %1711 = vmatpush1.bf16.xpose.msra.mxu0 %v1703
        %1712 = vmatprep.subr.bf16.mxu0 0
        %1713 = vmatpush1.bf16.xpose.msra.mxu0 %v1700
        %1714 = vmatprep.subr.bf16.mxu0 0
        %1715 = vmatpush1.bf16.xpose.msra.mxu0 %v1697
        %1716 = vmatprep.subr.bf16.mxu0 0
        %1717 = vmatpush1.bf16.xpose.msra.mxu0 %v1694
        %1718 = vmatprep.subr.bf16.mxu0 0
        %1719 = vmatpush1.bf16.xpose.msra.mxu0 %v1691
        %1720 = vmatprep.subr.bf16.mxu0 0
        %1721 = vmatpush1.bf16.xpose.msra.mxu0 %v1688
        %1722 = vmatprep.subr.bf16.mxu0 0
        %1723 = vmatpush1.bf16.xpose.msra.mxu0 %v1685
        %1724 = vmatprep.subr.bf16.mxu0 0
        %1725 = vmatpush2.bf16.xpose.msra.mxu0 0
        %1726 = vmatprep.subr.bf16.mxu0 0
        %1727 = vmatpush2.bf16.xpose.msra.mxu0 0
        %1728 = vmatprep.subr.bf16.mxu0 0
        %1729 = vmatpush2.bf16.xpose.msra.mxu0 0
        %1730 = vmatprep.subr.bf16.mxu0 0
        %1731 = vmatpush2.bf16.xpose.msra.mxu0 0
        %1732 = vmatprep.subr.bf16.mxu0 0
        %1733 = vmatpush2.bf16.xpose.msra.mxu0 0
        %1734 = vmatprep.subr.bf16.mxu0 0
        %1735 = vmatpush2.bf16.xpose.msra.mxu0 0
        %1736 = vmatprep.subr.bf16.mxu0 0
        %1737 = vmatpush2.bf16.xpose.msra.mxu0 0
        %1738 = vmatprep.subr.bf16.mxu0 0
        %1739 = vmatpush2.bf16.xpose.msra.mxu0 0
        %1740 = vmatprep.mubr.bf16.mxu0 0
        %1741 = vmatmul.mubr.bf16.gmra.mxu0 %v1661
        %v1742 = vpop.f32.mrf.mxu0
        %v1743 = vadd.f32 0.0, %v1742
        %v1744 = vpop.f32.mrf.mxu0
        %v1745 = vpop.f32.mrf.mxu0
        %v1746 = vadd.f32 0.0, %v1745
        %v1747 = vpop.f32.mrf.mxu0
        %1748 = vmatprep.mubr.bf16.mxu0 0
        %1749 = vmatmul.mubr.bf16.gmra.mxu0 %v1664
        %v1750 = vpop.f32.mrf.mxu0
        %v1751 = vadd.f32 0.0, %v1750
        %v1752 = vpop.f32.mrf.mxu0
        %v1753 = vpop.f32.mrf.mxu0
        %v1754 = vadd.f32 0.0, %v1753
        %v1755 = vpop.f32.mrf.mxu0
        %1756 = vmatprep.mubr.bf16.mxu0 0
        %1757 = vmatmul.mubr.bf16.gmra.mxu0 %v1667
        %v1758 = vpop.f32.mrf.mxu0
        %v1759 = vadd.f32 0.0, %v1758
        %v1760 = vpop.f32.mrf.mxu0
        %v1761 = vpop.f32.mrf.mxu0
        %v1762 = vadd.f32 0.0, %v1761
        %v1763 = vpop.f32.mrf.mxu0
        %1764 = vmatprep.mubr.bf16.mxu0 0
        %1765 = vmatmul.mubr.bf16.gmra.mxu0 %v1670
        %v1766 = vpop.f32.mrf.mxu0
        %v1767 = vadd.f32 0.0, %v1766
        %v1768 = vpop.f32.mrf.mxu0
        %v1769 = vpop.f32.mrf.mxu0
        %v1770 = vadd.f32 0.0, %v1769
        %v1771 = vpop.f32.mrf.mxu0
        %1772 = vmatprep.mubr.bf16.mxu0 0
        %1773 = vmatmul.mubr.bf16.gmra.mxu0 %v1673
        %v1774 = vpop.f32.mrf.mxu0
        %v1775 = vadd.f32 0.0, %v1774
        %v1776 = vpop.f32.mrf.mxu0
        %v1777 = vpop.f32.mrf.mxu0
        %v1778 = vadd.f32 0.0, %v1777
        %v1779 = vpop.f32.mrf.mxu0
        %1780 = vmatprep.mubr.bf16.mxu0 0
        %1781 = vmatmul.mubr.bf16.gmra.mxu0 %v1676
        %v1782 = vpop.f32.mrf.mxu0
        %v1783 = vadd.f32 0.0, %v1782
        %v1784 = vpop.f32.mrf.mxu0
        %v1785 = vpop.f32.mrf.mxu0
        %v1786 = vadd.f32 0.0, %v1785
        %v1787 = vpop.f32.mrf.mxu0
        %1788 = vmatprep.mubr.bf16.mxu0 0
        %1789 = vmatmul.mubr.bf16.gmra.mxu0 %v1679
        %v1790 = vpop.f32.mrf.mxu0
        %v1791 = vadd.f32 0.0, %v1790
        %v1792 = vpop.f32.mrf.mxu0
        %v1793 = vpop.f32.mrf.mxu0
        %v1794 = vadd.f32 0.0, %v1793
        %v1795 = vpop.f32.mrf.mxu0
        %1796 = vmatprep.mubr.bf16.mxu0 0
        %1797 = vmatmul.mubr.bf16.gmra.mxu0 %v1682
        %v1798 = vpop.f32.mrf.mxu0
        %v1799 = vadd.f32 0.0, %v1798
        %v1800 = vpop.f32.mrf.mxu0
        %v1801 = vpop.f32.mrf.mxu0
        %v1802 = vadd.f32 0.0, %v1801
        %v1803 = vpop.f32.mrf.mxu0
        %1804 = vdwg.mxu0
        %1805 = vmax.xlane.f32.xlu0 %v1743
        %v1806 = vpop.xlane.xlu0 %1805
        %1807 = vmax.xlane.f32.xlu0 %v1746
        %v1808 = vpop.xlane.xlu0 %1807
        %1809 = vmax.xlane.f32.xlu0 %v1751
        %v1810 = vpop.xlane.xlu0 %1809
        %1811 = vmax.xlane.f32.xlu0 %v1754
        %v1812 = vpop.xlane.xlu0 %1811
        %1813 = vmax.xlane.f32.xlu0 %v1759
        %v1814 = vpop.xlane.xlu0 %1813
        %1815 = vmax.xlane.f32.xlu0 %v1762
        %v1816 = vpop.xlane.xlu0 %1815
        %1817 = vmax.xlane.f32.xlu0 %v1767
        %v1818 = vpop.xlane.xlu0 %1817
        %1819 = vmax.xlane.f32.xlu0 %v1770
        %v1820 = vpop.xlane.xlu0 %1819
        %1821 = vmax.xlane.f32.xlu0 %v1775
        %v1822 = vpop.xlane.xlu0 %1821
        %1823 = vmax.xlane.f32.xlu0 %v1778
        %v1824 = vpop.xlane.xlu0 %1823
        %1825 = vmax.xlane.f32.xlu0 %v1783
        %v1826 = vpop.xlane.xlu0 %1825
        %1827 = vmax.xlane.f32.xlu0 %v1786
        %v1828 = vpop.xlane.xlu0 %1827
        %1829 = vmax.xlane.f32.xlu0 %v1791
        %v1830 = vpop.xlane.xlu0 %1829
        %1831 = vmax.xlane.f32.xlu0 %v1794
        %v1832 = vpop.xlane.xlu0 %1831
        %1833 = vmax.xlane.f32.xlu0 %v1799
        %v1834 = vpop.xlane.xlu0 %1833
        %1835 = vmax.xlane.f32.xlu0 %v1802
        %v1836 = vpop.xlane.xlu0 %1835
        %v1837 = vsub.f32 %v1743, %v1806
        %v1838 = vsub.f32 %v1746, %v1808
        %v1839 = vsub.f32 %v1751, %v1810
        %v1840 = vsub.f32 %v1754, %v1812
        %v1841 = vsub.f32 %v1759, %v1814
        %v1842 = vsub.f32 %v1762, %v1816
        %v1843 = vsub.f32 %v1767, %v1818
        %v1844 = vsub.f32 %v1770, %v1820
        %v1845 = vsub.f32 %v1775, %v1822
        %v1846 = vsub.f32 %v1778, %v1824
        %v1847 = vsub.f32 %v1783, %v1826
        %v1848 = vsub.f32 %v1786, %v1828
        %v1849 = vsub.f32 %v1791, %v1830
        %v1850 = vsub.f32 %v1794, %v1832
        %v1851 = vsub.f32 %v1799, %v1834
        %v1852 = vsub.f32 %v1802, %v1836
        %v1853 = vmul.f32 %v1837, 1.442695
        %v1854 = vpow.pop %v1853
        %v1855 = vmul.f32 %v1838, 1.442695
        %v1856 = vpow.pop %v1855
        %v1857 = vmul.f32 %v1839, 1.442695
        %v1858 = vpow.pop %v1857
        %v1859 = vmul.f32 %v1840, 1.442695
        %v1860 = vpow.pop %v1859
        %v1861 = vmul.f32 %v1841, 1.442695
        %v1862 = vpow.pop %v1861
        %v1863 = vmul.f32 %v1842, 1.442695
        %v1864 = vpow.pop %v1863
        %v1865 = vmul.f32 %v1843, 1.442695
        %v1866 = vpow.pop %v1865
        %v1867 = vmul.f32 %v1844, 1.442695
        %v1868 = vpow.pop %v1867
        %v1869 = vmul.f32 %v1845, 1.442695
        %v1870 = vpow.pop %v1869
        %v1871 = vmul.f32 %v1846, 1.442695
        %v1872 = vpow.pop %v1871
        %v1873 = vmul.f32 %v1847, 1.442695
        %v1874 = vpow.pop %v1873
        %v1875 = vmul.f32 %v1848, 1.442695
        %v1876 = vpow.pop %v1875
        %v1877 = vmul.f32 %v1849, 1.442695
        %v1878 = vpow.pop %v1877
        %v1879 = vmul.f32 %v1850, 1.442695
        %v1880 = vpow.pop %v1879
        %v1881 = vmul.f32 %v1851, 1.442695
        %v1882 = vpow.pop %v1881
        %v1883 = vmul.f32 %v1852, 1.442695
        %v1884 = vpow.pop %v1883
        %1885 = vadd.xlane.f32.xlu0 %v1854
        %v1886 = vpop.xlane.xlu0 %1885
        %1887 = vadd.xlane.f32.xlu0 %v1856
        %v1888 = vpop.xlane.xlu0 %1887
        %1889 = vadd.xlane.f32.xlu0 %v1858
        %v1890 = vpop.xlane.xlu0 %1889
        %1891 = vadd.xlane.f32.xlu0 %v1860
        %v1892 = vpop.xlane.xlu0 %1891
        %1893 = vadd.xlane.f32.xlu0 %v1862
        %v1894 = vpop.xlane.xlu0 %1893
        %1895 = vadd.xlane.f32.xlu0 %v1864
        %v1896 = vpop.xlane.xlu0 %1895
        %1897 = vadd.xlane.f32.xlu0 %v1866
        %v1898 = vpop.xlane.xlu0 %1897
        %1899 = vadd.xlane.f32.xlu0 %v1868
        %v1900 = vpop.xlane.xlu0 %1899
        %1901 = vadd.xlane.f32.xlu0 %v1870
        %v1902 = vpop.xlane.xlu0 %1901
        %1903 = vadd.xlane.f32.xlu0 %v1872
        %v1904 = vpop.xlane.xlu0 %1903
        %1905 = vadd.xlane.f32.xlu0 %v1874
        %v1906 = vpop.xlane.xlu0 %1905
        %1907 = vadd.xlane.f32.xlu0 %v1876
        %v1908 = vpop.xlane.xlu0 %1907
        %1909 = vadd.xlane.f32.xlu0 %v1878
        %v1910 = vpop.xlane.xlu0 %1909
        %1911 = vadd.xlane.f32.xlu0 %v1880
        %v1912 = vpop.xlane.xlu0 %1911
        %1913 = vadd.xlane.f32.xlu0 %v1882
        %v1914 = vpop.xlane.xlu0 %1913
        %1915 = vadd.xlane.f32.xlu0 %v1884
        %v1916 = vpop.xlane.xlu0 %1915
        %v1917 = vrcp.pop %v1886
        %v1918 = vrcp.pop %v1888
        %v1919 = vrcp.pop %v1890
        %v1920 = vrcp.pop %v1892
        %v1921 = vrcp.pop %v1894
        %v1922 = vrcp.pop %v1896
        %v1923 = vrcp.pop %v1898
        %v1924 = vrcp.pop %v1900
        %v1925 = vrcp.pop %v1902
        %v1926 = vrcp.pop %v1904
        %v1927 = vrcp.pop %v1906
        %v1928 = vrcp.pop %v1908
        %v1929 = vrcp.pop %v1910
        %v1930 = vrcp.pop %v1912
        %v1931 = vrcp.pop %v1914
        %v1932 = vrcp.pop %v1916
        %v1933 = vmul.f32 %v1854, %v1917
        %v1934 = vmul.f32 %v1856, %v1918
        %v1935 = vmul.f32 %v1858, %v1919
        %v1936 = vmul.f32 %v1860, %v1920
        %v1937 = vmul.f32 %v1862, %v1921
        %v1938 = vmul.f32 %v1864, %v1922
        %v1939 = vmul.f32 %v1866, %v1923
        %v1940 = vmul.f32 %v1868, %v1924
        %v1941 = vmul.f32 %v1870, %v1925
        %v1942 = vmul.f32 %v1872, %v1926
        %v1943 = vmul.f32 %v1874, %v1927
        %v1944 = vmul.f32 %v1876, %v1928
        %v1945 = vmul.f32 %v1878, %v1929
        %v1946 = vmul.f32 %v1880, %v1930
        %v1947 = vmul.f32 %v1882, %v1931
        %v1948 = vmul.f32 %v1884, %v1932
        %v1949 = vpack.c.bf16 %v1934, %v1933
        %v1950 = vpack.c.bf16 %v1936, %v1935
        %v1951 = vpack.c.bf16 %v1938, %v1937
        %v1952 = vpack.c.bf16 %v1940, %v1939
        %v1953 = vpack.c.bf16 %v1942, %v1941
        %v1954 = vpack.c.bf16 %v1944, %v1943
        %v1955 = vpack.c.bf16 %v1946, %v1945
        %v1956 = vpack.c.bf16 %v1948, %v1947
        %1965 = vrot.lane.b32.xlu0 %v1197, 96
        %v1966 = vpop.permute.xlu0 %1965
        %1967 = vrot.lane.b32.xlu0 %v1198, 96
        %v1968 = vpop.permute.xlu0 %1967
        %1969 = vrot.lane.b32.xlu0 %v1199, 96
        %v1970 = vpop.permute.xlu0 %1969
        %1971 = vrot.lane.b32.xlu0 %v1200, 96
        %v1972 = vpop.permute.xlu0 %1971
        %1973 = vrot.lane.b32.xlu0 %v1201, 96
        %v1974 = vpop.permute.xlu0 %1973
        %1975 = vrot.lane.b32.xlu0 %v1202, 96
        %v1976 = vpop.permute.xlu0 %1975
        %1977 = vrot.lane.b32.xlu0 %v1203, 96
        %v1978 = vpop.permute.xlu0 %1977
        %1979 = vrot.lane.b32.xlu0 %v1204, 96
        %v1980 = vpop.permute.xlu0 %1979
        %1989 = vmatprep.subr.bf16.mxu0 0
        %1990 = vmatpush1.bf16.msra.mxu0 %v1980
        %1991 = vmatprep.subr.bf16.mxu0 0
        %1992 = vmatpush1.bf16.msra.mxu0 %v1978
        %1993 = vmatprep.subr.bf16.mxu0 0
        %1994 = vmatpush1.bf16.msra.mxu0 %v1976
        %1995 = vmatprep.subr.bf16.mxu0 0
        %1996 = vmatpush1.bf16.msra.mxu0 %v1974
        %1997 = vmatprep.subr.bf16.mxu0 0
        %1998 = vmatpush1.bf16.msra.mxu0 %v1972
        %1999 = vmatprep.subr.bf16.mxu0 0
        %2000 = vmatpush1.bf16.msra.mxu0 %v1970
        %2001 = vmatprep.subr.bf16.mxu0 0
        %2002 = vmatpush1.bf16.msra.mxu0 %v1968
        %2003 = vmatprep.subr.bf16.mxu0 0
        %2004 = vmatpush1.bf16.msra.mxu0 %v1966
        %2005 = vmatprep.subr.bf16.mxu0 0
        %2006 = vmatpush2.bf16.msra.mxu0 0
        %2007 = vmatprep.subr.bf16.mxu0 0
        %2008 = vmatpush2.bf16.msra.mxu0 0
        %2009 = vmatprep.subr.bf16.mxu0 0
        %2010 = vmatpush2.bf16.msra.mxu0 0
        %2011 = vmatprep.subr.bf16.mxu0 0
        %2012 = vmatpush2.bf16.msra.mxu0 0
        %2013 = vmatprep.subr.bf16.mxu0 0
        %2014 = vmatpush2.bf16.msra.mxu0 0
        %2015 = vmatprep.subr.bf16.mxu0 0
        %2016 = vmatpush2.bf16.msra.mxu0 0
        %2017 = vmatprep.subr.bf16.mxu0 0
        %2018 = vmatpush2.bf16.msra.mxu0 0
        %2019 = vmatprep.subr.bf16.mxu0 0
        %2020 = vmatpush2.bf16.msra.mxu0 0
        %2021 = vmatprep.mubr.bf16.mxu0 0
        %2022 = vmatmul.mubr.bf16.gmra.mxu0 %v1949
        %v2023 = vpop.f32.mrf.mxu0
        %v2024 = vadd.f32 0.0, %v2023
        %v2025 = vpop.f32.mrf.mxu0
        %v2026 = vpop.f32.mrf.mxu0
        %v2027 = vadd.f32 0.0, %v2026
        %v2028 = vpop.f32.mrf.mxu0
        %2029 = vmatprep.mubr.bf16.mxu0 0
        %2030 = vmatmul.mubr.bf16.gmra.mxu0 %v1950
        %v2031 = vpop.f32.mrf.mxu0
        %v2032 = vadd.f32 0.0, %v2031
        %v2033 = vpop.f32.mrf.mxu0
        %v2034 = vpop.f32.mrf.mxu0
        %v2035 = vadd.f32 0.0, %v2034
        %v2036 = vpop.f32.mrf.mxu0
        %2037 = vmatprep.mubr.bf16.mxu0 0
        %2038 = vmatmul.mubr.bf16.gmra.mxu0 %v1951
        %v2039 = vpop.f32.mrf.mxu0
        %v2040 = vadd.f32 0.0, %v2039
        %v2041 = vpop.f32.mrf.mxu0
        %v2042 = vpop.f32.mrf.mxu0
        %v2043 = vadd.f32 0.0, %v2042
        %v2044 = vpop.f32.mrf.mxu0
        %2045 = vmatprep.mubr.bf16.mxu0 0
        %2046 = vmatmul.mubr.bf16.gmra.mxu0 %v1952
        %v2047 = vpop.f32.mrf.mxu0
        %v2048 = vadd.f32 0.0, %v2047
        %v2049 = vpop.f32.mrf.mxu0
        %v2050 = vpop.f32.mrf.mxu0
        %v2051 = vadd.f32 0.0, %v2050
        %v2052 = vpop.f32.mrf.mxu0
        %2053 = vmatprep.mubr.bf16.mxu0 0
        %2054 = vmatmul.mubr.bf16.gmra.mxu0 %v1953
        %v2055 = vpop.f32.mrf.mxu0
        %v2056 = vadd.f32 0.0, %v2055
        %v2057 = vpop.f32.mrf.mxu0
        %v2058 = vpop.f32.mrf.mxu0
        %v2059 = vadd.f32 0.0, %v2058
        %v2060 = vpop.f32.mrf.mxu0
        %2061 = vmatprep.mubr.bf16.mxu0 0
        %2062 = vmatmul.mubr.bf16.gmra.mxu0 %v1954
        %v2063 = vpop.f32.mrf.mxu0
        %v2064 = vadd.f32 0.0, %v2063
        %v2065 = vpop.f32.mrf.mxu0
        %v2066 = vpop.f32.mrf.mxu0
        %v2067 = vadd.f32 0.0, %v2066
        %v2068 = vpop.f32.mrf.mxu0
        %2069 = vmatprep.mubr.bf16.mxu0 0
        %2070 = vmatmul.mubr.bf16.gmra.mxu0 %v1955
        %v2071 = vpop.f32.mrf.mxu0
        %v2072 = vadd.f32 0.0, %v2071
        %v2073 = vpop.f32.mrf.mxu0
        %v2074 = vpop.f32.mrf.mxu0
        %v2075 = vadd.f32 0.0, %v2074
        %v2076 = vpop.f32.mrf.mxu0
        %2077 = vmatprep.mubr.bf16.mxu0 0
        %2078 = vmatmul.mubr.bf16.gmra.mxu0 %v1956
        %v2079 = vpop.f32.mrf.mxu0
        %v2080 = vadd.f32 0.0, %v2079
        %v2081 = vpop.f32.mrf.mxu0
        %v2082 = vpop.f32.mrf.mxu0
        %v2083 = vadd.f32 0.0, %v2082
        %v2084 = vpop.f32.mrf.mxu0
        %2085 = vdwg.mxu0
        %v2086 = vpack.c.bf16 %v2027, %v2024
        %v2087 = vpack.c.bf16 %v2035, %v2032
        %v2088 = vpack.c.bf16 %v2043, %v2040
        %v2089 = vpack.c.bf16 %v2051, %v2048
        %v2090 = vpack.c.bf16 %v2059, %v2056
        %v2091 = vpack.c.bf16 %v2067, %v2064
        %v2092 = vpack.c.bf16 %v2075, %v2072
        %v2093 = vpack.c.bf16 %v2083, %v2080
        %v2094 = vld [vmem:[#allocation11 + $0x10] sm:$0xf]
        %v2095 = vld [vmem:[#allocation11 + $0x14] sm:$0xf]
        %v2096 = vld [vmem:[#allocation11 + $0x18] sm:$0xf]
        %v2097 = vld [vmem:[#allocation11 + $0x1c] sm:$0xf]
        %v2102 = vunpack.c.l.b16 %v2094
        %v2103 = vunpack.c.l.b16 %v2095
        %v2104 = vunpack.c.l.b16 %v2096
        %v2105 = vunpack.c.l.b16 %v2097
        %v2106 = vpack.c.b16 %v2103, %v2102
        %v2107 = vpack.c.b16 %v2105, %v2104
        %v2111 = vsel %vm1205, %v2086, 0
        %v2114 = vsel %vm1205, %v2087, 0
        %v2117 = vsel %vm1205, %v2088, 0
        %v2120 = vsel %vm1205, %v2089, 0
        %v2123 = vsel %vm1205, %v2090, 0
        %v2126 = vsel %vm1205, %v2091, 0
        %v2129 = vsel %vm1205, %v2092, 0
        %v2132 = vsel %vm1205, %v2093, 0
        %2134 = vmatprep.subr.bf16.mxu0 0
        %2135 = vmatpush1.bf16.msra.mxu0 0
        %2136 = vmatprep.subr.bf16.mxu0 0
        %2137 = vmatpush1.bf16.msra.mxu0 0
        %2138 = vmatprep.subr.bf16.mxu0 0
        %2139 = vmatpush1.bf16.msra.mxu0 0
        %2140 = vmatprep.subr.bf16.mxu0 0
        %2141 = vmatpush1.bf16.msra.mxu0 0
        %2142 = vmatprep.subr.bf16.mxu0 0
        %2143 = vmatpush1.bf16.msra.mxu0 0
        %2144 = vmatprep.subr.bf16.mxu0 0
        %2145 = vmatpush1.bf16.msra.mxu0 0
        %2146 = vmatprep.subr.bf16.mxu0 0
        %2147 = vmatpush1.bf16.msra.mxu0 %v2107
        %2148 = vmatprep.subr.bf16.mxu0 0
        %2149 = vmatpush1.bf16.msra.mxu0 %v2106
        %2150 = vmatprep.subr.bf16.mxu0 0
        %2151 = vmatpush2.bf16.msra.mxu0 0
        %2152 = vmatprep.subr.bf16.mxu0 0
        %2153 = vmatpush2.bf16.msra.mxu0 0
        %2154 = vmatprep.subr.bf16.mxu0 0
        %2155 = vmatpush2.bf16.msra.mxu0 0
        %2156 = vmatprep.subr.bf16.mxu0 0
        %2157 = vmatpush2.bf16.msra.mxu0 0
        %2158 = vmatprep.subr.bf16.mxu0 0
        %2159 = vmatpush2.bf16.msra.mxu0 0
        %2160 = vmatprep.subr.bf16.mxu0 0
        %2161 = vmatpush2.bf16.msra.mxu0 0
        %2162 = vmatprep.subr.bf16.mxu0 0
        %2163 = vmatpush2.bf16.msra.mxu0 0
        %2164 = vmatprep.subr.bf16.mxu0 0
        %2165 = vmatpush2.bf16.msra.mxu0 0
        %2166 = vmatprep.mubr.bf16.mxu0 0
        %2167 = vmatmul.mubr.bf16.gmra.mxu0 %v2111
        %v2168 = vpop.f32.mrf.mxu0
        %v2169 = vadd.f32 0.0, %v2168
        %v2170 = vpop.f32.mrf.mxu0
        %v2171 = vpop.f32.mrf.mxu0
        %v2172 = vadd.f32 0.0, %v2171
        %v2173 = vpop.f32.mrf.mxu0
        %2174 = vmatprep.mubr.bf16.mxu0 0
        %2175 = vmatmul.mubr.bf16.gmra.mxu0 %v2114
        %v2176 = vpop.f32.mrf.mxu0
        %v2177 = vadd.f32 0.0, %v2176
        %v2178 = vpop.f32.mrf.mxu0
        %v2179 = vpop.f32.mrf.mxu0
        %v2180 = vadd.f32 0.0, %v2179
        %v2181 = vpop.f32.mrf.mxu0
        %2182 = vmatprep.mubr.bf16.mxu0 0
        %2183 = vmatmul.mubr.bf16.gmra.mxu0 %v2117
        %v2184 = vpop.f32.mrf.mxu0
        %v2185 = vadd.f32 0.0, %v2184
        %v2186 = vpop.f32.mrf.mxu0
        %v2187 = vpop.f32.mrf.mxu0
        %v2188 = vadd.f32 0.0, %v2187
        %v2189 = vpop.f32.mrf.mxu0
        %2190 = vmatprep.mubr.bf16.mxu0 0
        %2191 = vmatmul.mubr.bf16.gmra.mxu0 %v2120
        %v2192 = vpop.f32.mrf.mxu0
        %v2193 = vadd.f32 0.0, %v2192
        %v2194 = vpop.f32.mrf.mxu0
        %v2195 = vpop.f32.mrf.mxu0
        %v2196 = vadd.f32 0.0, %v2195
        %v2197 = vpop.f32.mrf.mxu0
        %2198 = vmatprep.mubr.bf16.mxu0 0
        %2199 = vmatmul.mubr.bf16.gmra.mxu0 %v2123
        %v2200 = vpop.f32.mrf.mxu0
        %v2201 = vadd.f32 0.0, %v2200
        %v2202 = vpop.f32.mrf.mxu0
        %v2203 = vpop.f32.mrf.mxu0
        %v2204 = vadd.f32 0.0, %v2203
        %v2205 = vpop.f32.mrf.mxu0
        %2206 = vmatprep.mubr.bf16.mxu0 0
        %2207 = vmatmul.mubr.bf16.gmra.mxu0 %v2126
        %v2208 = vpop.f32.mrf.mxu0
        %v2209 = vadd.f32 0.0, %v2208
        %v2210 = vpop.f32.mrf.mxu0
        %v2211 = vpop.f32.mrf.mxu0
        %v2212 = vadd.f32 0.0, %v2211
        %v2213 = vpop.f32.mrf.mxu0
        %2214 = vmatprep.mubr.bf16.mxu0 0
        %2215 = vmatmul.mubr.bf16.gmra.mxu0 %v2129
        %v2216 = vpop.f32.mrf.mxu0
        %v2217 = vadd.f32 0.0, %v2216
        %v2218 = vpop.f32.mrf.mxu0
        %v2219 = vpop.f32.mrf.mxu0
        %v2220 = vadd.f32 0.0, %v2219
        %v2221 = vpop.f32.mrf.mxu0
        %2222 = vmatprep.mubr.bf16.mxu0 0
        %2223 = vmatmul.mubr.bf16.gmra.mxu0 %v2132
        %v2224 = vpop.f32.mrf.mxu0
        %v2225 = vadd.f32 0.0, %v2224
        %v2226 = vpop.f32.mrf.mxu0
        %v2227 = vpop.f32.mrf.mxu0
        %v2228 = vadd.f32 0.0, %v2227
        %v2229 = vpop.f32.mrf.mxu0
        %2230 = vdwg.mxu0
        %v2235 = vunpack.c.l.b16 %v1608
        %v2236 = vunpack.c.l.b16 %v1609
        %v2237 = vunpack.c.l.b16 %v1610
        %v2238 = vunpack.c.l.b16 %v1611
        %v2239 = vpack.c.b16 %v2236, %v2235
        %v2240 = vpack.c.b16 %v2238, %v2237
        %v2244 = vsel %vm1205, %v1600, 0
        %v2247 = vsel %vm1205, %v1601, 0
        %v2250 = vsel %vm1205, %v1602, 0
        %v2253 = vsel %vm1205, %v1603, 0
        %v2256 = vsel %vm1205, %v1604, 0
        %v2259 = vsel %vm1205, %v1605, 0
        %v2262 = vsel %vm1205, %v1606, 0
        %v2265 = vsel %vm1205, %v1607, 0
        %2267 = vmatprep.subr.bf16.mxu0 0
        %2268 = vmatpush1.bf16.msra.mxu0 0
        %2269 = vmatprep.subr.bf16.mxu0 0
        %2270 = vmatpush1.bf16.msra.mxu0 0
        %2271 = vmatprep.subr.bf16.mxu0 0
        %2272 = vmatpush1.bf16.msra.mxu0 0
        %2273 = vmatprep.subr.bf16.mxu0 0
        %2274 = vmatpush1.bf16.msra.mxu0 0
        %2275 = vmatprep.subr.bf16.mxu0 0
        %2276 = vmatpush1.bf16.msra.mxu0 0
        %2277 = vmatprep.subr.bf16.mxu0 0
        %2278 = vmatpush1.bf16.msra.mxu0 0
        %2279 = vmatprep.subr.bf16.mxu0 0
        %2280 = vmatpush1.bf16.msra.mxu0 %v2240
        %2281 = vmatprep.subr.bf16.mxu0 0
        %2282 = vmatpush1.bf16.msra.mxu0 %v2239
        %2283 = vmatprep.subr.bf16.mxu0 0
        %2284 = vmatpush2.bf16.msra.mxu0 0
        %2285 = vmatprep.subr.bf16.mxu0 0
        %2286 = vmatpush2.bf16.msra.mxu0 0
        %2287 = vmatprep.subr.bf16.mxu0 0
        %2288 = vmatpush2.bf16.msra.mxu0 0
        %2289 = vmatprep.subr.bf16.mxu0 0
        %2290 = vmatpush2.bf16.msra.mxu0 0
        %2291 = vmatprep.subr.bf16.mxu0 0
        %2292 = vmatpush2.bf16.msra.mxu0 0
        %2293 = vmatprep.subr.bf16.mxu0 0
        %2294 = vmatpush2.bf16.msra.mxu0 0
        %2295 = vmatprep.subr.bf16.mxu0 0
        %2296 = vmatpush2.bf16.msra.mxu0 0
        %2297 = vmatprep.subr.bf16.mxu0 0
        %2298 = vmatpush2.bf16.msra.mxu0 0
        %2299 = vmatprep.mubr.bf16.mxu0 0
        %2300 = vmatmul.mubr.bf16.gmra.mxu0 %v2244
        %v2301 = vpop.f32.mrf.mxu0
        %v2302 = vadd.f32 %v2169, %v2301
        %v2303 = vpop.f32.mrf.mxu0
        %v2304 = vpop.f32.mrf.mxu0
        %v2305 = vadd.f32 %v2172, %v2304
        %v2306 = vpop.f32.mrf.mxu0
        %2307 = vmatprep.mubr.bf16.mxu0 0
        %2308 = vmatmul.mubr.bf16.gmra.mxu0 %v2247
        %v2309 = vpop.f32.mrf.mxu0
        %v2310 = vadd.f32 %v2177, %v2309
        %v2311 = vpop.f32.mrf.mxu0
        %v2312 = vpop.f32.mrf.mxu0
        %v2313 = vadd.f32 %v2180, %v2312
        %v2314 = vpop.f32.mrf.mxu0
        %2315 = vmatprep.mubr.bf16.mxu0 0
        %2316 = vmatmul.mubr.bf16.gmra.mxu0 %v2250
        %v2317 = vpop.f32.mrf.mxu0
        %v2318 = vadd.f32 %v2185, %v2317
        %v2319 = vpop.f32.mrf.mxu0
        %v2320 = vpop.f32.mrf.mxu0
        %v2321 = vadd.f32 %v2188, %v2320
        %v2322 = vpop.f32.mrf.mxu0
        %2323 = vmatprep.mubr.bf16.mxu0 0
        %2324 = vmatmul.mubr.bf16.gmra.mxu0 %v2253
        %v2325 = vpop.f32.mrf.mxu0
        %v2326 = vadd.f32 %v2193, %v2325
        %v2327 = vpop.f32.mrf.mxu0
        %v2328 = vpop.f32.mrf.mxu0
        %v2329 = vadd.f32 %v2196, %v2328
        %v2330 = vpop.f32.mrf.mxu0
        %2331 = vmatprep.mubr.bf16.mxu0 0
        %2332 = vmatmul.mubr.bf16.gmra.mxu0 %v2256
        %v2333 = vpop.f32.mrf.mxu0
        %v2334 = vadd.f32 %v2201, %v2333
        %v2335 = vpop.f32.mrf.mxu0
        %v2336 = vpop.f32.mrf.mxu0
        %v2337 = vadd.f32 %v2204, %v2336
        %v2338 = vpop.f32.mrf.mxu0
        %2339 = vmatprep.mubr.bf16.mxu0 0
        %2340 = vmatmul.mubr.bf16.gmra.mxu0 %v2259
        %v2341 = vpop.f32.mrf.mxu0
        %v2342 = vadd.f32 %v2209, %v2341
        %v2343 = vpop.f32.mrf.mxu0
        %v2344 = vpop.f32.mrf.mxu0
        %v2345 = vadd.f32 %v2212, %v2344
        %v2346 = vpop.f32.mrf.mxu0
        %2347 = vmatprep.mubr.bf16.mxu0 0
        %2348 = vmatmul.mubr.bf16.gmra.mxu0 %v2262
        %v2349 = vpop.f32.mrf.mxu0
        %v2350 = vadd.f32 %v2217, %v2349
        %v2351 = vpop.f32.mrf.mxu0
        %v2352 = vpop.f32.mrf.mxu0
        %v2353 = vadd.f32 %v2220, %v2352
        %v2354 = vpop.f32.mrf.mxu0
        %2355 = vmatprep.mubr.bf16.mxu0 0
        %2356 = vmatmul.mubr.bf16.gmra.mxu0 %v2265
        %v2357 = vpop.f32.mrf.mxu0
        %v2358 = vadd.f32 %v2225, %v2357
        %v2359 = vpop.f32.mrf.mxu0
        %v2360 = vpop.f32.mrf.mxu0
        %v2361 = vadd.f32 %v2228, %v2360
        %v2362 = vpop.f32.mrf.mxu0
        %2363 = vdwg.mxu0
        %2364 = vrot.lane.b32.xlu0 %v1181, 64
        %v2365 = vpop.permute.xlu0 %2364
        %2366 = vrot.lane.b32.xlu0 %v1182, 64
        %v2367 = vpop.permute.xlu0 %2366
        %2368 = vrot.lane.b32.xlu0 %v1183, 64
        %v2369 = vpop.permute.xlu0 %2368
        %2370 = vrot.lane.b32.xlu0 %v1184, 64
        %v2371 = vpop.permute.xlu0 %2370
        %2372 = vrot.lane.b32.xlu0 %v1185, 64
        %v2373 = vpop.permute.xlu0 %2372
        %2374 = vrot.lane.b32.xlu0 %v1186, 64
        %v2375 = vpop.permute.xlu0 %2374
        %2376 = vrot.lane.b32.xlu0 %v1187, 64
        %v2377 = vpop.permute.xlu0 %2376
        %2378 = vrot.lane.b32.xlu0 %v1188, 64
        %v2379 = vpop.permute.xlu0 %2378
        %2380 = vrot.lane.b32.xlu0 %v1189, 64
        %v2381 = vpop.permute.xlu0 %2380
        %2382 = vrot.lane.b32.xlu0 %v1190, 64
        %v2383 = vpop.permute.xlu0 %2382
        %2384 = vrot.lane.b32.xlu0 %v1191, 64
        %v2385 = vpop.permute.xlu0 %2384
        %2386 = vrot.lane.b32.xlu0 %v1192, 64
        %v2387 = vpop.permute.xlu0 %2386
        %2388 = vrot.lane.b32.xlu0 %v1193, 64
        %v2389 = vpop.permute.xlu0 %2388
        %2390 = vrot.lane.b32.xlu0 %v1194, 64
        %v2391 = vpop.permute.xlu0 %2390
        %2392 = vrot.lane.b32.xlu0 %v1195, 64
        %v2393 = vpop.permute.xlu0 %2392
        %2394 = vrot.lane.b32.xlu0 %v1196, 64
        %v2395 = vpop.permute.xlu0 %2394
        %v2397 = vsel %vm1205, %v2365, 0
        %v2400 = vsel %vm1205, %v2367, 0
        %v2403 = vsel %vm1205, %v2369, 0
        %v2406 = vsel %vm1205, %v2371, 0
        %v2409 = vsel %vm1205, %v2373, 0
        %v2412 = vsel %vm1205, %v2375, 0
        %v2415 = vsel %vm1205, %v2377, 0
        %v2418 = vsel %vm1205, %v2379, 0
        %v2421 = vsel %vm1205, %v2381, 0
        %v2424 = vsel %vm1205, %v2383, 0
        %v2427 = vsel %vm1205, %v2385, 0
        %v2430 = vsel %vm1205, %v2387, 0
        %v2433 = vsel %vm1205, %v2389, 0
        %v2436 = vsel %vm1205, %v2391, 0
        %v2439 = vsel %vm1205, %v2393, 0
        %v2442 = vsel %vm1205, %v2395, 0
        %2444 = vmatprep.subr.bf16.mxu0 0
        %2445 = vmatpush1.bf16.xpose.msra.mxu0 %v2442
        %2446 = vmatprep.subr.bf16.mxu0 0
        %2447 = vmatpush1.bf16.xpose.msra.mxu0 %v2439
        %2448 = vmatprep.subr.bf16.mxu0 0
        %2449 = vmatpush1.bf16.xpose.msra.mxu0 %v2436
        %2450 = vmatprep.subr.bf16.mxu0 0
        %2451 = vmatpush1.bf16.xpose.msra.mxu0 %v2433
        %2452 = vmatprep.subr.bf16.mxu0 0
        %2453 = vmatpush1.bf16.xpose.msra.mxu0 %v2430
        %2454 = vmatprep.subr.bf16.mxu0 0
        %2455 = vmatpush1.bf16.xpose.msra.mxu0 %v2427
        %2456 = vmatprep.subr.bf16.mxu0 0
        %2457 = vmatpush1.bf16.xpose.msra.mxu0 %v2424
        %2458 = vmatprep.subr.bf16.mxu0 0
        %2459 = vmatpush1.bf16.xpose.msra.mxu0 %v2421
        %2460 = vmatprep.subr.bf16.mxu0 0
        %2461 = vmatpush2.bf16.xpose.msra.mxu0 0
        %2462 = vmatprep.subr.bf16.mxu0 0
        %2463 = vmatpush2.bf16.xpose.msra.mxu0 0
        %2464 = vmatprep.subr.bf16.mxu0 0
        %2465 = vmatpush2.bf16.xpose.msra.mxu0 0
        %2466 = vmatprep.subr.bf16.mxu0 0
        %2467 = vmatpush2.bf16.xpose.msra.mxu0 0
        %2468 = vmatprep.subr.bf16.mxu0 0
        %2469 = vmatpush2.bf16.xpose.msra.mxu0 0
        %2470 = vmatprep.subr.bf16.mxu0 0
        %2471 = vmatpush2.bf16.xpose.msra.mxu0 0
        %2472 = vmatprep.subr.bf16.mxu0 0
        %2473 = vmatpush2.bf16.xpose.msra.mxu0 0
        %2474 = vmatprep.subr.bf16.mxu0 0
        %2475 = vmatpush2.bf16.xpose.msra.mxu0 0
        %2476 = vmatprep.mubr.bf16.mxu0 0
        %2477 = vmatmul.mubr.bf16.gmra.mxu0 %v2397
        %v2478 = vpop.f32.mrf.mxu0
        %v2479 = vadd.f32 0.0, %v2478
        %v2480 = vpop.f32.mrf.mxu0
        %v2481 = vpop.f32.mrf.mxu0
        %v2482 = vadd.f32 0.0, %v2481
        %v2483 = vpop.f32.mrf.mxu0
        %2484 = vmatprep.mubr.bf16.mxu0 0
        %2485 = vmatmul.mubr.bf16.gmra.mxu0 %v2400
        %v2486 = vpop.f32.mrf.mxu0
        %v2487 = vadd.f32 0.0, %v2486
        %v2488 = vpop.f32.mrf.mxu0
        %v2489 = vpop.f32.mrf.mxu0
        %v2490 = vadd.f32 0.0, %v2489
        %v2491 = vpop.f32.mrf.mxu0
        %2492 = vmatprep.mubr.bf16.mxu0 0
        %2493 = vmatmul.mubr.bf16.gmra.mxu0 %v2403
        %v2494 = vpop.f32.mrf.mxu0
        %v2495 = vadd.f32 0.0, %v2494
        %v2496 = vpop.f32.mrf.mxu0
        %v2497 = vpop.f32.mrf.mxu0
        %v2498 = vadd.f32 0.0, %v2497
        %v2499 = vpop.f32.mrf.mxu0
        %2500 = vmatprep.mubr.bf16.mxu0 0
        %2501 = vmatmul.mubr.bf16.gmra.mxu0 %v2406
        %v2502 = vpop.f32.mrf.mxu0
        %v2503 = vadd.f32 0.0, %v2502
        %v2504 = vpop.f32.mrf.mxu0
        %v2505 = vpop.f32.mrf.mxu0
        %v2506 = vadd.f32 0.0, %v2505
        %v2507 = vpop.f32.mrf.mxu0
        %2508 = vmatprep.mubr.bf16.mxu0 0
        %2509 = vmatmul.mubr.bf16.gmra.mxu0 %v2409
        %v2510 = vpop.f32.mrf.mxu0
        %v2511 = vadd.f32 0.0, %v2510
        %v2512 = vpop.f32.mrf.mxu0
        %v2513 = vpop.f32.mrf.mxu0
        %v2514 = vadd.f32 0.0, %v2513
        %v2515 = vpop.f32.mrf.mxu0
        %2516 = vmatprep.mubr.bf16.mxu0 0
        %2517 = vmatmul.mubr.bf16.gmra.mxu0 %v2412
        %v2518 = vpop.f32.mrf.mxu0
        %v2519 = vadd.f32 0.0, %v2518
        %v2520 = vpop.f32.mrf.mxu0
        %v2521 = vpop.f32.mrf.mxu0
        %v2522 = vadd.f32 0.0, %v2521
        %v2523 = vpop.f32.mrf.mxu0
        %2524 = vmatprep.mubr.bf16.mxu0 0
        %2525 = vmatmul.mubr.bf16.gmra.mxu0 %v2415
        %v2526 = vpop.f32.mrf.mxu0
        %v2527 = vadd.f32 0.0, %v2526
        %v2528 = vpop.f32.mrf.mxu0
        %v2529 = vpop.f32.mrf.mxu0
        %v2530 = vadd.f32 0.0, %v2529
        %v2531 = vpop.f32.mrf.mxu0
        %2532 = vmatprep.mubr.bf16.mxu0 0
        %2533 = vmatmul.mubr.bf16.gmra.mxu0 %v2418
        %v2534 = vpop.f32.mrf.mxu0
        %v2535 = vadd.f32 0.0, %v2534
        %v2536 = vpop.f32.mrf.mxu0
        %v2537 = vpop.f32.mrf.mxu0
        %v2538 = vadd.f32 0.0, %v2537
        %v2539 = vpop.f32.mrf.mxu0
        %2540 = vdwg.mxu0
        %2541 = vmax.xlane.f32.xlu0 %v2479
        %v2542 = vpop.xlane.xlu0 %2541
        %2543 = vmax.xlane.f32.xlu0 %v2482
        %v2544 = vpop.xlane.xlu0 %2543
        %2545 = vmax.xlane.f32.xlu0 %v2487
        %v2546 = vpop.xlane.xlu0 %2545
        %2547 = vmax.xlane.f32.xlu0 %v2490
        %v2548 = vpop.xlane.xlu0 %2547
        %2549 = vmax.xlane.f32.xlu0 %v2495
        %v2550 = vpop.xlane.xlu0 %2549
        %2551 = vmax.xlane.f32.xlu0 %v2498
        %v2552 = vpop.xlane.xlu0 %2551
        %2553 = vmax.xlane.f32.xlu0 %v2503
        %v2554 = vpop.xlane.xlu0 %2553
        %2555 = vmax.xlane.f32.xlu0 %v2506
        %v2556 = vpop.xlane.xlu0 %2555
        %2557 = vmax.xlane.f32.xlu0 %v2511
        %v2558 = vpop.xlane.xlu0 %2557
        %2559 = vmax.xlane.f32.xlu0 %v2514
        %v2560 = vpop.xlane.xlu0 %2559
        %2561 = vmax.xlane.f32.xlu0 %v2519
        %v2562 = vpop.xlane.xlu0 %2561
        %2563 = vmax.xlane.f32.xlu0 %v2522
        %v2564 = vpop.xlane.xlu0 %2563
        %2565 = vmax.xlane.f32.xlu0 %v2527
        %v2566 = vpop.xlane.xlu0 %2565
        %2567 = vmax.xlane.f32.xlu0 %v2530
        %v2568 = vpop.xlane.xlu0 %2567
        %2569 = vmax.xlane.f32.xlu0 %v2535
        %v2570 = vpop.xlane.xlu0 %2569
        %2571 = vmax.xlane.f32.xlu0 %v2538
        %v2572 = vpop.xlane.xlu0 %2571
        %v2573 = vsub.f32 %v2479, %v2542
        %v2574 = vsub.f32 %v2482, %v2544
        %v2575 = vsub.f32 %v2487, %v2546
        %v2576 = vsub.f32 %v2490, %v2548
        %v2577 = vsub.f32 %v2495, %v2550
        %v2578 = vsub.f32 %v2498, %v2552
        %v2579 = vsub.f32 %v2503, %v2554
        %v2580 = vsub.f32 %v2506, %v2556
        %v2581 = vsub.f32 %v2511, %v2558
        %v2582 = vsub.f32 %v2514, %v2560
        %v2583 = vsub.f32 %v2519, %v2562
        %v2584 = vsub.f32 %v2522, %v2564
        %v2585 = vsub.f32 %v2527, %v2566
        %v2586 = vsub.f32 %v2530, %v2568
        %v2587 = vsub.f32 %v2535, %v2570
        %v2588 = vsub.f32 %v2538, %v2572
        %v2589 = vmul.f32 %v2573, 1.442695
        %v2590 = vpow.pop %v2589
        %v2591 = vmul.f32 %v2574, 1.442695
        %v2592 = vpow.pop %v2591
        %v2593 = vmul.f32 %v2575, 1.442695
        %v2594 = vpow.pop %v2593
        %v2595 = vmul.f32 %v2576, 1.442695
        %v2596 = vpow.pop %v2595
        %v2597 = vmul.f32 %v2577, 1.442695
        %v2598 = vpow.pop %v2597
        %v2599 = vmul.f32 %v2578, 1.442695
        %v2600 = vpow.pop %v2599
        %v2601 = vmul.f32 %v2579, 1.442695
        %v2602 = vpow.pop %v2601
        %v2603 = vmul.f32 %v2580, 1.442695
        %v2604 = vpow.pop %v2603
        %v2605 = vmul.f32 %v2581, 1.442695
        %v2606 = vpow.pop %v2605
        %v2607 = vmul.f32 %v2582, 1.442695
        %v2608 = vpow.pop %v2607
        %v2609 = vmul.f32 %v2583, 1.442695
        %v2610 = vpow.pop %v2609
        %v2611 = vmul.f32 %v2584, 1.442695
        %v2612 = vpow.pop %v2611
        %v2613 = vmul.f32 %v2585, 1.442695
        %v2614 = vpow.pop %v2613
        %v2615 = vmul.f32 %v2586, 1.442695
        %v2616 = vpow.pop %v2615
        %v2617 = vmul.f32 %v2587, 1.442695
        %v2618 = vpow.pop %v2617
        %v2619 = vmul.f32 %v2588, 1.442695
        %v2620 = vpow.pop %v2619
        %2621 = vadd.xlane.f32.xlu0 %v2590
        %v2622 = vpop.xlane.xlu0 %2621
        %2623 = vadd.xlane.f32.xlu0 %v2592
        %v2624 = vpop.xlane.xlu0 %2623
        %2625 = vadd.xlane.f32.xlu0 %v2594
        %v2626 = vpop.xlane.xlu0 %2625
        %2627 = vadd.xlane.f32.xlu0 %v2596
        %v2628 = vpop.xlane.xlu0 %2627
        %2629 = vadd.xlane.f32.xlu0 %v2598
        %v2630 = vpop.xlane.xlu0 %2629
        %2631 = vadd.xlane.f32.xlu0 %v2600
        %v2632 = vpop.xlane.xlu0 %2631
        %2633 = vadd.xlane.f32.xlu0 %v2602
        %v2634 = vpop.xlane.xlu0 %2633
        %2635 = vadd.xlane.f32.xlu0 %v2604
        %v2636 = vpop.xlane.xlu0 %2635
        %2637 = vadd.xlane.f32.xlu0 %v2606
        %v2638 = vpop.xlane.xlu0 %2637
        %2639 = vadd.xlane.f32.xlu0 %v2608
        %v2640 = vpop.xlane.xlu0 %2639
        %2641 = vadd.xlane.f32.xlu0 %v2610
        %v2642 = vpop.xlane.xlu0 %2641
        %2643 = vadd.xlane.f32.xlu0 %v2612
        %v2644 = vpop.xlane.xlu0 %2643
        %2645 = vadd.xlane.f32.xlu0 %v2614
        %v2646 = vpop.xlane.xlu0 %2645
        %2647 = vadd.xlane.f32.xlu0 %v2616
        %v2648 = vpop.xlane.xlu0 %2647
        %2649 = vadd.xlane.f32.xlu0 %v2618
        %v2650 = vpop.xlane.xlu0 %2649
        %2651 = vadd.xlane.f32.xlu0 %v2620
        %v2652 = vpop.xlane.xlu0 %2651
        %v2653 = vrcp.pop %v2622
        %v2654 = vrcp.pop %v2624
        %v2655 = vrcp.pop %v2626
        %v2656 = vrcp.pop %v2628
        %v2657 = vrcp.pop %v2630
        %v2658 = vrcp.pop %v2632
        %v2659 = vrcp.pop %v2634
        %v2660 = vrcp.pop %v2636
        %v2661 = vrcp.pop %v2638
        %v2662 = vrcp.pop %v2640
        %v2663 = vrcp.pop %v2642
        %v2664 = vrcp.pop %v2644
        %v2665 = vrcp.pop %v2646
        %v2666 = vrcp.pop %v2648
        %v2667 = vrcp.pop %v2650
        %v2668 = vrcp.pop %v2652
        %v2669 = vmul.f32 %v2590, %v2653
        %v2670 = vmul.f32 %v2592, %v2654
        %v2671 = vmul.f32 %v2594, %v2655
        %v2672 = vmul.f32 %v2596, %v2656
        %v2673 = vmul.f32 %v2598, %v2657
        %v2674 = vmul.f32 %v2600, %v2658
        %v2675 = vmul.f32 %v2602, %v2659
        %v2676 = vmul.f32 %v2604, %v2660
        %v2677 = vmul.f32 %v2606, %v2661
        %v2678 = vmul.f32 %v2608, %v2662
        %v2679 = vmul.f32 %v2610, %v2663
        %v2680 = vmul.f32 %v2612, %v2664
        %v2681 = vmul.f32 %v2614, %v2665
        %v2682 = vmul.f32 %v2616, %v2666
        %v2683 = vmul.f32 %v2618, %v2667
        %v2684 = vmul.f32 %v2620, %v2668
        %v2685 = vpack.c.bf16 %v2670, %v2669
        %v2686 = vpack.c.bf16 %v2672, %v2671
        %v2687 = vpack.c.bf16 %v2674, %v2673
        %v2688 = vpack.c.bf16 %v2676, %v2675
        %v2689 = vpack.c.bf16 %v2678, %v2677
        %v2690 = vpack.c.bf16 %v2680, %v2679
        %v2691 = vpack.c.bf16 %v2682, %v2681
        %v2692 = vpack.c.bf16 %v2684, %v2683
        %2693 = vrot.lane.b32.xlu0 %v1197, 64
        %v2694 = vpop.permute.xlu0 %2693
        %2695 = vrot.lane.b32.xlu0 %v1198, 64
        %v2696 = vpop.permute.xlu0 %2695
        %2697 = vrot.lane.b32.xlu0 %v1199, 64
        %v2698 = vpop.permute.xlu0 %2697
        %2699 = vrot.lane.b32.xlu0 %v1200, 64
        %v2700 = vpop.permute.xlu0 %2699
        %2701 = vrot.lane.b32.xlu0 %v1201, 64
        %v2702 = vpop.permute.xlu0 %2701
        %2703 = vrot.lane.b32.xlu0 %v1202, 64
        %v2704 = vpop.permute.xlu0 %2703
        %2705 = vrot.lane.b32.xlu0 %v1203, 64
        %v2706 = vpop.permute.xlu0 %2705
        %2707 = vrot.lane.b32.xlu0 %v1204, 64
        %v2708 = vpop.permute.xlu0 %2707
        %2717 = vmatprep.subr.bf16.mxu0 0
        %2718 = vmatpush1.bf16.msra.mxu0 %v2708
        %2719 = vmatprep.subr.bf16.mxu0 0
        %2720 = vmatpush1.bf16.msra.mxu0 %v2706
        %2721 = vmatprep.subr.bf16.mxu0 0
        %2722 = vmatpush1.bf16.msra.mxu0 %v2704
        %2723 = vmatprep.subr.bf16.mxu0 0
        %2724 = vmatpush1.bf16.msra.mxu0 %v2702
        %2725 = vmatprep.subr.bf16.mxu0 0
        %2726 = vmatpush1.bf16.msra.mxu0 %v2700
        %2727 = vmatprep.subr.bf16.mxu0 0
        %2728 = vmatpush1.bf16.msra.mxu0 %v2698
        %2729 = vmatprep.subr.bf16.mxu0 0
        %2730 = vmatpush1.bf16.msra.mxu0 %v2696
        %2731 = vmatprep.subr.bf16.mxu0 0
        %2732 = vmatpush1.bf16.msra.mxu0 %v2694
        %2733 = vmatprep.subr.bf16.mxu0 0
        %2734 = vmatpush2.bf16.msra.mxu0 0
        %2735 = vmatprep.subr.bf16.mxu0 0
        %2736 = vmatpush2.bf16.msra.mxu0 0
        %2737 = vmatprep.subr.bf16.mxu0 0
        %2738 = vmatpush2.bf16.msra.mxu0 0
        %2739 = vmatprep.subr.bf16.mxu0 0
        %2740 = vmatpush2.bf16.msra.mxu0 0
        %2741 = vmatprep.subr.bf16.mxu0 0
        %2742 = vmatpush2.bf16.msra.mxu0 0
        %2743 = vmatprep.subr.bf16.mxu0 0
        %2744 = vmatpush2.bf16.msra.mxu0 0
        %2745 = vmatprep.subr.bf16.mxu0 0
        %2746 = vmatpush2.bf16.msra.mxu0 0
        %2747 = vmatprep.subr.bf16.mxu0 0
        %2748 = vmatpush2.bf16.msra.mxu0 0
        %2749 = vmatprep.mubr.bf16.mxu0 0
        %2750 = vmatmul.mubr.bf16.gmra.mxu0 %v2685
        %v2751 = vpop.f32.mrf.mxu0
        %v2752 = vadd.f32 0.0, %v2751
        %v2753 = vpop.f32.mrf.mxu0
        %v2754 = vpop.f32.mrf.mxu0
        %v2755 = vadd.f32 0.0, %v2754
        %v2756 = vpop.f32.mrf.mxu0
        %2757 = vmatprep.mubr.bf16.mxu0 0
        %2758 = vmatmul.mubr.bf16.gmra.mxu0 %v2686
        %v2759 = vpop.f32.mrf.mxu0
        %v2760 = vadd.f32 0.0, %v2759
        %v2761 = vpop.f32.mrf.mxu0
        %v2762 = vpop.f32.mrf.mxu0
        %v2763 = vadd.f32 0.0, %v2762
        %v2764 = vpop.f32.mrf.mxu0
        %2765 = vmatprep.mubr.bf16.mxu0 0
        %2766 = vmatmul.mubr.bf16.gmra.mxu0 %v2687
        %v2767 = vpop.f32.mrf.mxu0
        %v2768 = vadd.f32 0.0, %v2767
        %v2769 = vpop.f32.mrf.mxu0
        %v2770 = vpop.f32.mrf.mxu0
        %v2771 = vadd.f32 0.0, %v2770
        %v2772 = vpop.f32.mrf.mxu0
        %2773 = vmatprep.mubr.bf16.mxu0 0
        %2774 = vmatmul.mubr.bf16.gmra.mxu0 %v2688
        %v2775 = vpop.f32.mrf.mxu0
        %v2776 = vadd.f32 0.0, %v2775
        %v2777 = vpop.f32.mrf.mxu0
        %v2778 = vpop.f32.mrf.mxu0
        %v2779 = vadd.f32 0.0, %v2778
        %v2780 = vpop.f32.mrf.mxu0
        %2781 = vmatprep.mubr.bf16.mxu0 0
        %2782 = vmatmul.mubr.bf16.gmra.mxu0 %v2689
        %v2783 = vpop.f32.mrf.mxu0
        %v2784 = vadd.f32 0.0, %v2783
        %v2785 = vpop.f32.mrf.mxu0
        %v2786 = vpop.f32.mrf.mxu0
        %v2787 = vadd.f32 0.0, %v2786
        %v2788 = vpop.f32.mrf.mxu0
        %2789 = vmatprep.mubr.bf16.mxu0 0
        %2790 = vmatmul.mubr.bf16.gmra.mxu0 %v2690
        %v2791 = vpop.f32.mrf.mxu0
        %v2792 = vadd.f32 0.0, %v2791
        %v2793 = vpop.f32.mrf.mxu0
        %v2794 = vpop.f32.mrf.mxu0
        %v2795 = vadd.f32 0.0, %v2794
        %v2796 = vpop.f32.mrf.mxu0
        %2797 = vmatprep.mubr.bf16.mxu0 0
        %2798 = vmatmul.mubr.bf16.gmra.mxu0 %v2691
        %v2799 = vpop.f32.mrf.mxu0
        %v2800 = vadd.f32 0.0, %v2799
        %v2801 = vpop.f32.mrf.mxu0
        %v2802 = vpop.f32.mrf.mxu0
        %v2803 = vadd.f32 0.0, %v2802
        %v2804 = vpop.f32.mrf.mxu0
        %2805 = vmatprep.mubr.bf16.mxu0 0
        %2806 = vmatmul.mubr.bf16.gmra.mxu0 %v2692
        %v2807 = vpop.f32.mrf.mxu0
        %v2808 = vadd.f32 0.0, %v2807
        %v2809 = vpop.f32.mrf.mxu0
        %v2810 = vpop.f32.mrf.mxu0
        %v2811 = vadd.f32 0.0, %v2810
        %v2812 = vpop.f32.mrf.mxu0
        %2813 = vdwg.mxu0
        %v2814 = vpack.c.bf16 %v2755, %v2752
        %v2815 = vpack.c.bf16 %v2763, %v2760
        %v2816 = vpack.c.bf16 %v2771, %v2768
        %v2817 = vpack.c.bf16 %v2779, %v2776
        %v2818 = vpack.c.bf16 %v2787, %v2784
        %v2819 = vpack.c.bf16 %v2795, %v2792
        %v2820 = vpack.c.bf16 %v2803, %v2800
        %v2821 = vpack.c.bf16 %v2811, %v2808
        %v2822 = vld [vmem:[#allocation11 + $0x20] sm:$0xf]
        %v2823 = vld [vmem:[#allocation11 + $0x24] sm:$0xf]
        %v2824 = vld [vmem:[#allocation11 + $0x28] sm:$0xf]
        %v2825 = vld [vmem:[#allocation11 + $0x2c] sm:$0xf]
        %v2830 = vunpack.c.l.b16 %v2822
        %v2831 = vunpack.c.l.b16 %v2823
        %v2832 = vunpack.c.l.b16 %v2824
        %v2833 = vunpack.c.l.b16 %v2825
        %v2834 = vpack.c.b16 %v2831, %v2830
        %v2835 = vpack.c.b16 %v2833, %v2832
        %v2839 = vsel %vm1205, %v2814, 0
        %v2842 = vsel %vm1205, %v2815, 0
        %v2845 = vsel %vm1205, %v2816, 0
        %v2848 = vsel %vm1205, %v2817, 0
        %v2851 = vsel %vm1205, %v2818, 0
        %v2854 = vsel %vm1205, %v2819, 0
        %v2857 = vsel %vm1205, %v2820, 0
        %v2860 = vsel %vm1205, %v2821, 0
        %2862 = vmatprep.subr.bf16.mxu0 0
        %2863 = vmatpush1.bf16.msra.mxu0 0
        %2864 = vmatprep.subr.bf16.mxu0 0
        %2865 = vmatpush1.bf16.msra.mxu0 0
        %2866 = vmatprep.subr.bf16.mxu0 0
        %2867 = vmatpush1.bf16.msra.mxu0 0
        %2868 = vmatprep.subr.bf16.mxu0 0
        %2869 = vmatpush1.bf16.msra.mxu0 0
        %2870 = vmatprep.subr.bf16.mxu0 0
        %2871 = vmatpush1.bf16.msra.mxu0 0
        %2872 = vmatprep.subr.bf16.mxu0 0
        %2873 = vmatpush1.bf16.msra.mxu0 0
        %2874 = vmatprep.subr.bf16.mxu0 0
        %2875 = vmatpush1.bf16.msra.mxu0 %v2835
        %2876 = vmatprep.subr.bf16.mxu0 0
        %2877 = vmatpush1.bf16.msra.mxu0 %v2834
        %2878 = vmatprep.subr.bf16.mxu0 0
        %2879 = vmatpush2.bf16.msra.mxu0 0
        %2880 = vmatprep.subr.bf16.mxu0 0
        %2881 = vmatpush2.bf16.msra.mxu0 0
        %2882 = vmatprep.subr.bf16.mxu0 0
        %2883 = vmatpush2.bf16.msra.mxu0 0
        %2884 = vmatprep.subr.bf16.mxu0 0
        %2885 = vmatpush2.bf16.msra.mxu0 0
        %2886 = vmatprep.subr.bf16.mxu0 0
        %2887 = vmatpush2.bf16.msra.mxu0 0
        %2888 = vmatprep.subr.bf16.mxu0 0
        %2889 = vmatpush2.bf16.msra.mxu0 0
        %2890 = vmatprep.subr.bf16.mxu0 0
        %2891 = vmatpush2.bf16.msra.mxu0 0
        %2892 = vmatprep.subr.bf16.mxu0 0
        %2893 = vmatpush2.bf16.msra.mxu0 0
        %2894 = vmatprep.mubr.bf16.mxu0 0
        %2895 = vmatmul.mubr.bf16.gmra.mxu0 %v2839
        %v2896 = vpop.f32.mrf.mxu0
        %v2897 = vadd.f32 0.0, %v2896
        %v2898 = vpop.f32.mrf.mxu0
        %v2899 = vpop.f32.mrf.mxu0
        %v2900 = vadd.f32 0.0, %v2899
        %v2901 = vpop.f32.mrf.mxu0
        %2902 = vmatprep.mubr.bf16.mxu0 0
        %2903 = vmatmul.mubr.bf16.gmra.mxu0 %v2842
        %v2904 = vpop.f32.mrf.mxu0
        %v2905 = vadd.f32 0.0, %v2904
        %v2906 = vpop.f32.mrf.mxu0
        %v2907 = vpop.f32.mrf.mxu0
        %v2908 = vadd.f32 0.0, %v2907
        %v2909 = vpop.f32.mrf.mxu0
        %2910 = vmatprep.mubr.bf16.mxu0 0
        %2911 = vmatmul.mubr.bf16.gmra.mxu0 %v2845
        %v2912 = vpop.f32.mrf.mxu0
        %v2913 = vadd.f32 0.0, %v2912
        %v2914 = vpop.f32.mrf.mxu0
        %v2915 = vpop.f32.mrf.mxu0
        %v2916 = vadd.f32 0.0, %v2915
        %v2917 = vpop.f32.mrf.mxu0
        %2918 = vmatprep.mubr.bf16.mxu0 0
        %2919 = vmatmul.mubr.bf16.gmra.mxu0 %v2848
        %v2920 = vpop.f32.mrf.mxu0
        %v2921 = vadd.f32 0.0, %v2920
        %v2922 = vpop.f32.mrf.mxu0
        %v2923 = vpop.f32.mrf.mxu0
        %v2924 = vadd.f32 0.0, %v2923
        %v2925 = vpop.f32.mrf.mxu0
        %2926 = vmatprep.mubr.bf16.mxu0 0
        %2927 = vmatmul.mubr.bf16.gmra.mxu0 %v2851
        %v2928 = vpop.f32.mrf.mxu0
        %v2929 = vadd.f32 0.0, %v2928
        %v2930 = vpop.f32.mrf.mxu0
        %v2931 = vpop.f32.mrf.mxu0
        %v2932 = vadd.f32 0.0, %v2931
        %v2933 = vpop.f32.mrf.mxu0
        %2934 = vmatprep.mubr.bf16.mxu0 0
        %2935 = vmatmul.mubr.bf16.gmra.mxu0 %v2854
        %v2936 = vpop.f32.mrf.mxu0
        %v2937 = vadd.f32 0.0, %v2936
        %v2938 = vpop.f32.mrf.mxu0
        %v2939 = vpop.f32.mrf.mxu0
        %v2940 = vadd.f32 0.0, %v2939
        %v2941 = vpop.f32.mrf.mxu0
        %2942 = vmatprep.mubr.bf16.mxu0 0
        %2943 = vmatmul.mubr.bf16.gmra.mxu0 %v2857
        %v2944 = vpop.f32.mrf.mxu0
        %v2945 = vadd.f32 0.0, %v2944
        %v2946 = vpop.f32.mrf.mxu0
        %v2947 = vpop.f32.mrf.mxu0
        %v2948 = vadd.f32 0.0, %v2947
        %v2949 = vpop.f32.mrf.mxu0
        %2950 = vmatprep.mubr.bf16.mxu0 0
        %2951 = vmatmul.mubr.bf16.gmra.mxu0 %v2860
        %v2952 = vpop.f32.mrf.mxu0
        %v2953 = vadd.f32 0.0, %v2952
        %v2954 = vpop.f32.mrf.mxu0
        %v2955 = vpop.f32.mrf.mxu0
        %v2956 = vadd.f32 0.0, %v2955
        %v2957 = vpop.f32.mrf.mxu0
        %2958 = vdwg.mxu0
        %v2959 = vadd.f32 %v2302, %v2897
        %v2960 = vadd.f32 %v2305, %v2900
        %v2961 = vadd.f32 %v2310, %v2905
        %v2962 = vadd.f32 %v2313, %v2908
        %v2963 = vadd.f32 %v2318, %v2913
        %v2964 = vadd.f32 %v2321, %v2916
        %v2965 = vadd.f32 %v2326, %v2921
        %v2966 = vadd.f32 %v2329, %v2924
        %v2967 = vadd.f32 %v2334, %v2929
        %v2968 = vadd.f32 %v2337, %v2932
        %v2969 = vadd.f32 %v2342, %v2937
        %v2970 = vadd.f32 %v2345, %v2940
        %v2971 = vadd.f32 %v2350, %v2945
        %v2972 = vadd.f32 %v2353, %v2948
        %v2973 = vadd.f32 %v2358, %v2953
        %v2974 = vadd.f32 %v2361, %v2956
        %2975 = vrot.lane.b32.xlu0 %v1181, 32
        %v2976 = vpop.permute.xlu0 %2975
        %2977 = vrot.lane.b32.xlu0 %v1182, 32
        %v2978 = vpop.permute.xlu0 %2977
        %2979 = vrot.lane.b32.xlu0 %v1183, 32
        %v2980 = vpop.permute.xlu0 %2979
        %2981 = vrot.lane.b32.xlu0 %v1184, 32
        %v2982 = vpop.permute.xlu0 %2981
        %2983 = vrot.lane.b32.xlu0 %v1185, 32
        %v2984 = vpop.permute.xlu0 %2983
        %2985 = vrot.lane.b32.xlu0 %v1186, 32
        %v2986 = vpop.permute.xlu0 %2985
        %2987 = vrot.lane.b32.xlu0 %v1187, 32
        %v2988 = vpop.permute.xlu0 %2987
        %2989 = vrot.lane.b32.xlu0 %v1188, 32
        %v2990 = vpop.permute.xlu0 %2989
        %2991 = vrot.lane.b32.xlu0 %v1189, 32
        %v2992 = vpop.permute.xlu0 %2991
        %2993 = vrot.lane.b32.xlu0 %v1190, 32
        %v2994 = vpop.permute.xlu0 %2993
        %2995 = vrot.lane.b32.xlu0 %v1191, 32
        %v2996 = vpop.permute.xlu0 %2995
        %2997 = vrot.lane.b32.xlu0 %v1192, 32
        %v2998 = vpop.permute.xlu0 %2997
        %2999 = vrot.lane.b32.xlu0 %v1193, 32
        %v3000 = vpop.permute.xlu0 %2999
        %3001 = vrot.lane.b32.xlu0 %v1194, 32
        %v3002 = vpop.permute.xlu0 %3001
        %3003 = vrot.lane.b32.xlu0 %v1195, 32
        %v3004 = vpop.permute.xlu0 %3003
        %3005 = vrot.lane.b32.xlu0 %v1196, 32
        %v3006 = vpop.permute.xlu0 %3005
        %v3008 = vsel %vm1205, %v2976, 0
        %v3011 = vsel %vm1205, %v2978, 0
        %v3014 = vsel %vm1205, %v2980, 0
        %v3017 = vsel %vm1205, %v2982, 0
        %v3020 = vsel %vm1205, %v2984, 0
        %v3023 = vsel %vm1205, %v2986, 0
        %v3026 = vsel %vm1205, %v2988, 0
        %v3029 = vsel %vm1205, %v2990, 0
        %v3032 = vsel %vm1205, %v2992, 0
        %v3035 = vsel %vm1205, %v2994, 0
        %v3038 = vsel %vm1205, %v2996, 0
        %v3041 = vsel %vm1205, %v2998, 0
        %v3044 = vsel %vm1205, %v3000, 0
        %v3047 = vsel %vm1205, %v3002, 0
        %v3050 = vsel %vm1205, %v3004, 0
        %v3053 = vsel %vm1205, %v3006, 0
        %3055 = vmatprep.subr.bf16.mxu0 0
        %3056 = vmatpush1.bf16.xpose.msra.mxu0 %v3053
        %3057 = vmatprep.subr.bf16.mxu0 0
        %3058 = vmatpush1.bf16.xpose.msra.mxu0 %v3050
        %3059 = vmatprep.subr.bf16.mxu0 0
        %3060 = vmatpush1.bf16.xpose.msra.mxu0 %v3047
        %3061 = vmatprep.subr.bf16.mxu0 0
        %3062 = vmatpush1.bf16.xpose.msra.mxu0 %v3044
        %3063 = vmatprep.subr.bf16.mxu0 0
        %3064 = vmatpush1.bf16.xpose.msra.mxu0 %v3041
        %3065 = vmatprep.subr.bf16.mxu0 0
        %3066 = vmatpush1.bf16.xpose.msra.mxu0 %v3038
        %3067 = vmatprep.subr.bf16.mxu0 0
        %3068 = vmatpush1.bf16.xpose.msra.mxu0 %v3035
        %3069 = vmatprep.subr.bf16.mxu0 0
        %3070 = vmatpush1.bf16.xpose.msra.mxu0 %v3032
        %3071 = vmatprep.subr.bf16.mxu0 0
        %3072 = vmatpush2.bf16.xpose.msra.mxu0 0
        %3073 = vmatprep.subr.bf16.mxu0 0
        %3074 = vmatpush2.bf16.xpose.msra.mxu0 0
        %3075 = vmatprep.subr.bf16.mxu0 0
        %3076 = vmatpush2.bf16.xpose.msra.mxu0 0
        %3077 = vmatprep.subr.bf16.mxu0 0
        %3078 = vmatpush2.bf16.xpose.msra.mxu0 0
        %3079 = vmatprep.subr.bf16.mxu0 0
        %3080 = vmatpush2.bf16.xpose.msra.mxu0 0
        %3081 = vmatprep.subr.bf16.mxu0 0
        %3082 = vmatpush2.bf16.xpose.msra.mxu0 0
        %3083 = vmatprep.subr.bf16.mxu0 0
        %3084 = vmatpush2.bf16.xpose.msra.mxu0 0
        %3085 = vmatprep.subr.bf16.mxu0 0
        %3086 = vmatpush2.bf16.xpose.msra.mxu0 0
        %3087 = vmatprep.mubr.bf16.mxu0 0
        %3088 = vmatmul.mubr.bf16.gmra.mxu0 %v3008
        %v3089 = vpop.f32.mrf.mxu0
        %v3090 = vadd.f32 0.0, %v3089
        %v3091 = vpop.f32.mrf.mxu0
        %v3092 = vpop.f32.mrf.mxu0
        %v3093 = vadd.f32 0.0, %v3092
        %v3094 = vpop.f32.mrf.mxu0
        %3095 = vmatprep.mubr.bf16.mxu0 0
        %3096 = vmatmul.mubr.bf16.gmra.mxu0 %v3011
        %v3097 = vpop.f32.mrf.mxu0
        %v3098 = vadd.f32 0.0, %v3097
        %v3099 = vpop.f32.mrf.mxu0
        %v3100 = vpop.f32.mrf.mxu0
        %v3101 = vadd.f32 0.0, %v3100
        %v3102 = vpop.f32.mrf.mxu0
        %3103 = vmatprep.mubr.bf16.mxu0 0
        %3104 = vmatmul.mubr.bf16.gmra.mxu0 %v3014
        %v3105 = vpop.f32.mrf.mxu0
        %v3106 = vadd.f32 0.0, %v3105
        %v3107 = vpop.f32.mrf.mxu0
        %v3108 = vpop.f32.mrf.mxu0
        %v3109 = vadd.f32 0.0, %v3108
        %v3110 = vpop.f32.mrf.mxu0
        %3111 = vmatprep.mubr.bf16.mxu0 0
        %3112 = vmatmul.mubr.bf16.gmra.mxu0 %v3017
        %v3113 = vpop.f32.mrf.mxu0
        %v3114 = vadd.f32 0.0, %v3113
        %v3115 = vpop.f32.mrf.mxu0
        %v3116 = vpop.f32.mrf.mxu0
        %v3117 = vadd.f32 0.0, %v3116
        %v3118 = vpop.f32.mrf.mxu0
        %3119 = vmatprep.mubr.bf16.mxu0 0
        %3120 = vmatmul.mubr.bf16.gmra.mxu0 %v3020
        %v3121 = vpop.f32.mrf.mxu0
        %v3122 = vadd.f32 0.0, %v3121
        %v3123 = vpop.f32.mrf.mxu0
        %v3124 = vpop.f32.mrf.mxu0
        %v3125 = vadd.f32 0.0, %v3124
        %v3126 = vpop.f32.mrf.mxu0
        %3127 = vmatprep.mubr.bf16.mxu0 0
        %3128 = vmatmul.mubr.bf16.gmra.mxu0 %v3023
        %v3129 = vpop.f32.mrf.mxu0
        %v3130 = vadd.f32 0.0, %v3129
        %v3131 = vpop.f32.mrf.mxu0
        %v3132 = vpop.f32.mrf.mxu0
        %v3133 = vadd.f32 0.0, %v3132
        %v3134 = vpop.f32.mrf.mxu0
        %3135 = vmatprep.mubr.bf16.mxu0 0
        %3136 = vmatmul.mubr.bf16.gmra.mxu0 %v3026
        %v3137 = vpop.f32.mrf.mxu0
        %v3138 = vadd.f32 0.0, %v3137
        %v3139 = vpop.f32.mrf.mxu0
        %v3140 = vpop.f32.mrf.mxu0
        %v3141 = vadd.f32 0.0, %v3140
        %v3142 = vpop.f32.mrf.mxu0
        %3143 = vmatprep.mubr.bf16.mxu0 0
        %3144 = vmatmul.mubr.bf16.gmra.mxu0 %v3029
        %v3145 = vpop.f32.mrf.mxu0
        %v3146 = vadd.f32 0.0, %v3145
        %v3147 = vpop.f32.mrf.mxu0
        %v3148 = vpop.f32.mrf.mxu0
        %v3149 = vadd.f32 0.0, %v3148
        %v3150 = vpop.f32.mrf.mxu0
        %3151 = vdwg.mxu0
        %3152 = vmax.xlane.f32.xlu0 %v3090
        %v3153 = vpop.xlane.xlu0 %3152
        %3154 = vmax.xlane.f32.xlu0 %v3093
        %v3155 = vpop.xlane.xlu0 %3154
        %3156 = vmax.xlane.f32.xlu0 %v3098
        %v3157 = vpop.xlane.xlu0 %3156
        %3158 = vmax.xlane.f32.xlu0 %v3101
        %v3159 = vpop.xlane.xlu0 %3158
        %3160 = vmax.xlane.f32.xlu0 %v3106
        %v3161 = vpop.xlane.xlu0 %3160
        %3162 = vmax.xlane.f32.xlu0 %v3109
        %v3163 = vpop.xlane.xlu0 %3162
        %3164 = vmax.xlane.f32.xlu0 %v3114
        %v3165 = vpop.xlane.xlu0 %3164
        %3166 = vmax.xlane.f32.xlu0 %v3117
        %v3167 = vpop.xlane.xlu0 %3166
        %3168 = vmax.xlane.f32.xlu0 %v3122
        %v3169 = vpop.xlane.xlu0 %3168
        %3170 = vmax.xlane.f32.xlu0 %v3125
        %v3171 = vpop.xlane.xlu0 %3170
        %3172 = vmax.xlane.f32.xlu0 %v3130
        %v3173 = vpop.xlane.xlu0 %3172
        %3174 = vmax.xlane.f32.xlu0 %v3133
        %v3175 = vpop.xlane.xlu0 %3174
        %3176 = vmax.xlane.f32.xlu0 %v3138
        %v3177 = vpop.xlane.xlu0 %3176
        %3178 = vmax.xlane.f32.xlu0 %v3141
        %v3179 = vpop.xlane.xlu0 %3178
        %3180 = vmax.xlane.f32.xlu0 %v3146
        %v3181 = vpop.xlane.xlu0 %3180
        %3182 = vmax.xlane.f32.xlu0 %v3149
        %v3183 = vpop.xlane.xlu0 %3182
        %v3184 = vsub.f32 %v3090, %v3153
        %v3185 = vsub.f32 %v3093, %v3155
        %v3186 = vsub.f32 %v3098, %v3157
        %v3187 = vsub.f32 %v3101, %v3159
        %v3188 = vsub.f32 %v3106, %v3161
        %v3189 = vsub.f32 %v3109, %v3163
        %v3190 = vsub.f32 %v3114, %v3165
        %v3191 = vsub.f32 %v3117, %v3167
        %v3192 = vsub.f32 %v3122, %v3169
        %v3193 = vsub.f32 %v3125, %v3171
        %v3194 = vsub.f32 %v3130, %v3173
        %v3195 = vsub.f32 %v3133, %v3175
        %v3196 = vsub.f32 %v3138, %v3177
        %v3197 = vsub.f32 %v3141, %v3179
        %v3198 = vsub.f32 %v3146, %v3181
        %v3199 = vsub.f32 %v3149, %v3183
        %v3200 = vmul.f32 %v3184, 1.442695
        %v3201 = vpow.pop %v3200
        %v3202 = vmul.f32 %v3185, 1.442695
        %v3203 = vpow.pop %v3202
        %v3204 = vmul.f32 %v3186, 1.442695
        %v3205 = vpow.pop %v3204
        %v3206 = vmul.f32 %v3187, 1.442695
        %v3207 = vpow.pop %v3206
        %v3208 = vmul.f32 %v3188, 1.442695
        %v3209 = vpow.pop %v3208
        %v3210 = vmul.f32 %v3189, 1.442695
        %v3211 = vpow.pop %v3210
        %v3212 = vmul.f32 %v3190, 1.442695
        %v3213 = vpow.pop %v3212
        %v3214 = vmul.f32 %v3191, 1.442695
        %v3215 = vpow.pop %v3214
        %v3216 = vmul.f32 %v3192, 1.442695
        %v3217 = vpow.pop %v3216
        %v3218 = vmul.f32 %v3193, 1.442695
        %v3219 = vpow.pop %v3218
        %v3220 = vmul.f32 %v3194, 1.442695
        %v3221 = vpow.pop %v3220
        %v3222 = vmul.f32 %v3195, 1.442695
        %v3223 = vpow.pop %v3222
        %v3224 = vmul.f32 %v3196, 1.442695
        %v3225 = vpow.pop %v3224
        %v3226 = vmul.f32 %v3197, 1.442695
        %v3227 = vpow.pop %v3226
        %v3228 = vmul.f32 %v3198, 1.442695
        %v3229 = vpow.pop %v3228
        %v3230 = vmul.f32 %v3199, 1.442695
        %v3231 = vpow.pop %v3230
        %3232 = vadd.xlane.f32.xlu0 %v3201
        %v3233 = vpop.xlane.xlu0 %3232
        %3234 = vadd.xlane.f32.xlu0 %v3203
        %v3235 = vpop.xlane.xlu0 %3234
        %3236 = vadd.xlane.f32.xlu0 %v3205
        %v3237 = vpop.xlane.xlu0 %3236
        %3238 = vadd.xlane.f32.xlu0 %v3207
        %v3239 = vpop.xlane.xlu0 %3238
        %3240 = vadd.xlane.f32.xlu0 %v3209
        %v3241 = vpop.xlane.xlu0 %3240
        %3242 = vadd.xlane.f32.xlu0 %v3211
        %v3243 = vpop.xlane.xlu0 %3242
        %3244 = vadd.xlane.f32.xlu0 %v3213
        %v3245 = vpop.xlane.xlu0 %3244
        %3246 = vadd.xlane.f32.xlu0 %v3215
        %v3247 = vpop.xlane.xlu0 %3246
        %3248 = vadd.xlane.f32.xlu0 %v3217
        %v3249 = vpop.xlane.xlu0 %3248
        %3250 = vadd.xlane.f32.xlu0 %v3219
        %v3251 = vpop.xlane.xlu0 %3250
        %3252 = vadd.xlane.f32.xlu0 %v3221
        %v3253 = vpop.xlane.xlu0 %3252
        %3254 = vadd.xlane.f32.xlu0 %v3223
        %v3255 = vpop.xlane.xlu0 %3254
        %3256 = vadd.xlane.f32.xlu0 %v3225
        %v3257 = vpop.xlane.xlu0 %3256
        %3258 = vadd.xlane.f32.xlu0 %v3227
        %v3259 = vpop.xlane.xlu0 %3258
        %3260 = vadd.xlane.f32.xlu0 %v3229
        %v3261 = vpop.xlane.xlu0 %3260
        %3262 = vadd.xlane.f32.xlu0 %v3231
        %v3263 = vpop.xlane.xlu0 %3262
        %v3264 = vrcp.pop %v3233
        %v3265 = vrcp.pop %v3235
        %v3266 = vrcp.pop %v3237
        %v3267 = vrcp.pop %v3239
        %v3268 = vrcp.pop %v3241
        %v3269 = vrcp.pop %v3243
        %v3270 = vrcp.pop %v3245
        %v3271 = vrcp.pop %v3247
        %v3272 = vrcp.pop %v3249
        %v3273 = vrcp.pop %v3251
        %v3274 = vrcp.pop %v3253
        %v3275 = vrcp.pop %v3255
        %v3276 = vrcp.pop %v3257
        %v3277 = vrcp.pop %v3259
        %v3278 = vrcp.pop %v3261
        %v3279 = vrcp.pop %v3263
        %v3280 = vmul.f32 %v3201, %v3264
        %v3281 = vmul.f32 %v3203, %v3265
        %v3282 = vmul.f32 %v3205, %v3266
        %v3283 = vmul.f32 %v3207, %v3267
        %v3284 = vmul.f32 %v3209, %v3268
        %v3285 = vmul.f32 %v3211, %v3269
        %v3286 = vmul.f32 %v3213, %v3270
        %v3287 = vmul.f32 %v3215, %v3271
        %v3288 = vmul.f32 %v3217, %v3272
        %v3289 = vmul.f32 %v3219, %v3273
        %v3290 = vmul.f32 %v3221, %v3274
        %v3291 = vmul.f32 %v3223, %v3275
        %v3292 = vmul.f32 %v3225, %v3276
        %v3293 = vmul.f32 %v3227, %v3277
        %v3294 = vmul.f32 %v3229, %v3278
        %v3295 = vmul.f32 %v3231, %v3279
        %v3296 = vpack.c.bf16 %v3281, %v3280
        %v3297 = vpack.c.bf16 %v3283, %v3282
        %v3298 = vpack.c.bf16 %v3285, %v3284
        %v3299 = vpack.c.bf16 %v3287, %v3286
        %v3300 = vpack.c.bf16 %v3289, %v3288
        %v3301 = vpack.c.bf16 %v3291, %v3290
        %v3302 = vpack.c.bf16 %v3293, %v3292
        %v3303 = vpack.c.bf16 %v3295, %v3294
        %3304 = vrot.lane.b32.xlu0 %v1197, 32
        %v3305 = vpop.permute.xlu0 %3304
        %3306 = vrot.lane.b32.xlu0 %v1198, 32
        %v3307 = vpop.permute.xlu0 %3306
        %3308 = vrot.lane.b32.xlu0 %v1199, 32
        %v3309 = vpop.permute.xlu0 %3308
        %3310 = vrot.lane.b32.xlu0 %v1200, 32
        %v3311 = vpop.permute.xlu0 %3310
        %3312 = vrot.lane.b32.xlu0 %v1201, 32
        %v3313 = vpop.permute.xlu0 %3312
        %3314 = vrot.lane.b32.xlu0 %v1202, 32
        %v3315 = vpop.permute.xlu0 %3314
        %3316 = vrot.lane.b32.xlu0 %v1203, 32
        %v3317 = vpop.permute.xlu0 %3316
        %3318 = vrot.lane.b32.xlu0 %v1204, 32
        %v3319 = vpop.permute.xlu0 %3318
        %3328 = vmatprep.subr.bf16.mxu0 0
        %3329 = vmatpush1.bf16.msra.mxu0 %v3319
        %3330 = vmatprep.subr.bf16.mxu0 0
        %3331 = vmatpush1.bf16.msra.mxu0 %v3317
        %3332 = vmatprep.subr.bf16.mxu0 0
        %3333 = vmatpush1.bf16.msra.mxu0 %v3315
        %3334 = vmatprep.subr.bf16.mxu0 0
        %3335 = vmatpush1.bf16.msra.mxu0 %v3313
        %3336 = vmatprep.subr.bf16.mxu0 0
        %3337 = vmatpush1.bf16.msra.mxu0 %v3311
        %3338 = vmatprep.subr.bf16.mxu0 0
        %3339 = vmatpush1.bf16.msra.mxu0 %v3309
        %3340 = vmatprep.subr.bf16.mxu0 0
        %3341 = vmatpush1.bf16.msra.mxu0 %v3307
        %3342 = vmatprep.subr.bf16.mxu0 0
        %3343 = vmatpush1.bf16.msra.mxu0 %v3305
        %3344 = vmatprep.subr.bf16.mxu0 0
        %3345 = vmatpush2.bf16.msra.mxu0 0
        %3346 = vmatprep.subr.bf16.mxu0 0
        %3347 = vmatpush2.bf16.msra.mxu0 0
        %3348 = vmatprep.subr.bf16.mxu0 0
        %3349 = vmatpush2.bf16.msra.mxu0 0
        %3350 = vmatprep.subr.bf16.mxu0 0
        %3351 = vmatpush2.bf16.msra.mxu0 0
        %3352 = vmatprep.subr.bf16.mxu0 0
        %3353 = vmatpush2.bf16.msra.mxu0 0
        %3354 = vmatprep.subr.bf16.mxu0 0
        %3355 = vmatpush2.bf16.msra.mxu0 0
        %3356 = vmatprep.subr.bf16.mxu0 0
        %3357 = vmatpush2.bf16.msra.mxu0 0
        %3358 = vmatprep.subr.bf16.mxu0 0
        %3359 = vmatpush2.bf16.msra.mxu0 0
        %3360 = vmatprep.mubr.bf16.mxu0 0
        %3361 = vmatmul.mubr.bf16.gmra.mxu0 %v3296
        %v3362 = vpop.f32.mrf.mxu0
        %v3363 = vadd.f32 0.0, %v3362
        %v3364 = vpop.f32.mrf.mxu0
        %v3365 = vpop.f32.mrf.mxu0
        %v3366 = vadd.f32 0.0, %v3365
        %v3367 = vpop.f32.mrf.mxu0
        %3368 = vmatprep.mubr.bf16.mxu0 0
        %3369 = vmatmul.mubr.bf16.gmra.mxu0 %v3297
        %v3370 = vpop.f32.mrf.mxu0
        %v3371 = vadd.f32 0.0, %v3370
        %v3372 = vpop.f32.mrf.mxu0
        %v3373 = vpop.f32.mrf.mxu0
        %v3374 = vadd.f32 0.0, %v3373
        %v3375 = vpop.f32.mrf.mxu0
        %3376 = vmatprep.mubr.bf16.mxu0 0
        %3377 = vmatmul.mubr.bf16.gmra.mxu0 %v3298
        %v3378 = vpop.f32.mrf.mxu0
        %v3379 = vadd.f32 0.0, %v3378
        %v3380 = vpop.f32.mrf.mxu0
        %v3381 = vpop.f32.mrf.mxu0
        %v3382 = vadd.f32 0.0, %v3381
        %v3383 = vpop.f32.mrf.mxu0
        %3384 = vmatprep.mubr.bf16.mxu0 0
        %3385 = vmatmul.mubr.bf16.gmra.mxu0 %v3299
        %v3386 = vpop.f32.mrf.mxu0
        %v3387 = vadd.f32 0.0, %v3386
        %v3388 = vpop.f32.mrf.mxu0
        %v3389 = vpop.f32.mrf.mxu0
        %v3390 = vadd.f32 0.0, %v3389
        %v3391 = vpop.f32.mrf.mxu0
        %3392 = vmatprep.mubr.bf16.mxu0 0
        %3393 = vmatmul.mubr.bf16.gmra.mxu0 %v3300
        %v3394 = vpop.f32.mrf.mxu0
        %v3395 = vadd.f32 0.0, %v3394
        %v3396 = vpop.f32.mrf.mxu0
        %v3397 = vpop.f32.mrf.mxu0
        %v3398 = vadd.f32 0.0, %v3397
        %v3399 = vpop.f32.mrf.mxu0
        %3400 = vmatprep.mubr.bf16.mxu0 0
        %3401 = vmatmul.mubr.bf16.gmra.mxu0 %v3301
        %v3402 = vpop.f32.mrf.mxu0
        %v3403 = vadd.f32 0.0, %v3402
        %v3404 = vpop.f32.mrf.mxu0
        %v3405 = vpop.f32.mrf.mxu0
        %v3406 = vadd.f32 0.0, %v3405
        %v3407 = vpop.f32.mrf.mxu0
        %3408 = vmatprep.mubr.bf16.mxu0 0
        %3409 = vmatmul.mubr.bf16.gmra.mxu0 %v3302
        %v3410 = vpop.f32.mrf.mxu0
        %v3411 = vadd.f32 0.0, %v3410
        %v3412 = vpop.f32.mrf.mxu0
        %v3413 = vpop.f32.mrf.mxu0
        %v3414 = vadd.f32 0.0, %v3413
        %v3415 = vpop.f32.mrf.mxu0
        %3416 = vmatprep.mubr.bf16.mxu0 0
        %3417 = vmatmul.mubr.bf16.gmra.mxu0 %v3303
        %v3418 = vpop.f32.mrf.mxu0
        %v3419 = vadd.f32 0.0, %v3418
        %v3420 = vpop.f32.mrf.mxu0
        %v3421 = vpop.f32.mrf.mxu0
        %v3422 = vadd.f32 0.0, %v3421
        %v3423 = vpop.f32.mrf.mxu0
        %3424 = vdwg.mxu0
        %v3425 = vpack.c.bf16 %v3366, %v3363
        %v3426 = vpack.c.bf16 %v3374, %v3371
        %v3427 = vpack.c.bf16 %v3382, %v3379
        %v3428 = vpack.c.bf16 %v3390, %v3387
        %v3429 = vpack.c.bf16 %v3398, %v3395
        %v3430 = vpack.c.bf16 %v3406, %v3403
        %v3431 = vpack.c.bf16 %v3414, %v3411
        %v3432 = vpack.c.bf16 %v3422, %v3419
        %v3433 = vld [vmem:[#allocation11 + $0x30] sm:$0xf]
        %v3434 = vld [vmem:[#allocation11 + $0x34] sm:$0xf]
        %v3435 = vld [vmem:[#allocation11 + $0x38] sm:$0xf]
        %v3436 = vld [vmem:[#allocation11 + $0x3c] sm:$0xf]
        %v3441 = vunpack.c.l.b16 %v3433
        %v3442 = vunpack.c.l.b16 %v3434
        %v3443 = vunpack.c.l.b16 %v3435
        %v3444 = vunpack.c.l.b16 %v3436
        %v3445 = vpack.c.b16 %v3442, %v3441
        %v3446 = vpack.c.b16 %v3444, %v3443
        %v3450 = vsel %vm1205, %v3425, 0
        %v3453 = vsel %vm1205, %v3426, 0
        %v3456 = vsel %vm1205, %v3427, 0
        %v3459 = vsel %vm1205, %v3428, 0
        %v3462 = vsel %vm1205, %v3429, 0
        %v3465 = vsel %vm1205, %v3430, 0
        %v3468 = vsel %vm1205, %v3431, 0
        %v3471 = vsel %vm1205, %v3432, 0
        %3473 = vmatprep.subr.bf16.mxu0 0
        %3474 = vmatpush1.bf16.msra.mxu0 0
        %3475 = vmatprep.subr.bf16.mxu0 0
        %3476 = vmatpush1.bf16.msra.mxu0 0
        %3477 = vmatprep.subr.bf16.mxu0 0
        %3478 = vmatpush1.bf16.msra.mxu0 0
        %3479 = vmatprep.subr.bf16.mxu0 0
        %3480 = vmatpush1.bf16.msra.mxu0 0
        %3481 = vmatprep.subr.bf16.mxu0 0
        %3482 = vmatpush1.bf16.msra.mxu0 0
        %3483 = vmatprep.subr.bf16.mxu0 0
        %3484 = vmatpush1.bf16.msra.mxu0 0
        %3485 = vmatprep.subr.bf16.mxu0 0
        %3486 = vmatpush1.bf16.msra.mxu0 %v3446
        %3487 = vmatprep.subr.bf16.mxu0 0
        %3488 = vmatpush1.bf16.msra.mxu0 %v3445
        %3489 = vmatprep.subr.bf16.mxu0 0
        %3490 = vmatpush2.bf16.msra.mxu0 0
        %3491 = vmatprep.subr.bf16.mxu0 0
        %3492 = vmatpush2.bf16.msra.mxu0 0
        %3493 = vmatprep.subr.bf16.mxu0 0
        %3494 = vmatpush2.bf16.msra.mxu0 0
        %3495 = vmatprep.subr.bf16.mxu0 0
        %3496 = vmatpush2.bf16.msra.mxu0 0
        %3497 = vmatprep.subr.bf16.mxu0 0
        %3498 = vmatpush2.bf16.msra.mxu0 0
        %3499 = vmatprep.subr.bf16.mxu0 0
        %3500 = vmatpush2.bf16.msra.mxu0 0
        %3501 = vmatprep.subr.bf16.mxu0 0
        %3502 = vmatpush2.bf16.msra.mxu0 0
        %3503 = vmatprep.subr.bf16.mxu0 0
        %3504 = vmatpush2.bf16.msra.mxu0 0
        %3505 = vmatprep.mubr.bf16.mxu0 0
        %3506 = vmatmul.mubr.bf16.gmra.mxu0 %v3450
        %v3507 = vpop.f32.mrf.mxu0
        %v3508 = vadd.f32 0.0, %v3507
        %v3509 = vpop.f32.mrf.mxu0
        %v3510 = vpop.f32.mrf.mxu0
        %v3511 = vadd.f32 0.0, %v3510
        %v3512 = vpop.f32.mrf.mxu0
        %3513 = vmatprep.mubr.bf16.mxu0 0
        %3514 = vmatmul.mubr.bf16.gmra.mxu0 %v3453
        %v3515 = vpop.f32.mrf.mxu0
        %v3516 = vadd.f32 0.0, %v3515
        %v3517 = vpop.f32.mrf.mxu0
        %v3518 = vpop.f32.mrf.mxu0
        %v3519 = vadd.f32 0.0, %v3518
        %v3520 = vpop.f32.mrf.mxu0
        %3521 = vmatprep.mubr.bf16.mxu0 0
        %3522 = vmatmul.mubr.bf16.gmra.mxu0 %v3456
        %v3523 = vpop.f32.mrf.mxu0
        %v3524 = vadd.f32 0.0, %v3523
        %v3525 = vpop.f32.mrf.mxu0
        %v3526 = vpop.f32.mrf.mxu0
        %v3527 = vadd.f32 0.0, %v3526
        %v3528 = vpop.f32.mrf.mxu0
        %3529 = vmatprep.mubr.bf16.mxu0 0
        %3530 = vmatmul.mubr.bf16.gmra.mxu0 %v3459
        %v3531 = vpop.f32.mrf.mxu0
        %v3532 = vadd.f32 0.0, %v3531
        %v3533 = vpop.f32.mrf.mxu0
        %v3534 = vpop.f32.mrf.mxu0
        %v3535 = vadd.f32 0.0, %v3534
        %v3536 = vpop.f32.mrf.mxu0
        %3537 = vmatprep.mubr.bf16.mxu0 0
        %3538 = vmatmul.mubr.bf16.gmra.mxu0 %v3462
        %v3539 = vpop.f32.mrf.mxu0
        %v3540 = vadd.f32 0.0, %v3539
        %v3541 = vpop.f32.mrf.mxu0
        %v3542 = vpop.f32.mrf.mxu0
        %v3543 = vadd.f32 0.0, %v3542
        %v3544 = vpop.f32.mrf.mxu0
        %3545 = vmatprep.mubr.bf16.mxu0 0
        %3546 = vmatmul.mubr.bf16.gmra.mxu0 %v3465
        %v3547 = vpop.f32.mrf.mxu0
        %v3548 = vadd.f32 0.0, %v3547
        %v3549 = vpop.f32.mrf.mxu0
        %v3550 = vpop.f32.mrf.mxu0
        %v3551 = vadd.f32 0.0, %v3550
        %v3552 = vpop.f32.mrf.mxu0
        %3553 = vmatprep.mubr.bf16.mxu0 0
        %3554 = vmatmul.mubr.bf16.gmra.mxu0 %v3468
        %v3555 = vpop.f32.mrf.mxu0
        %v3556 = vadd.f32 0.0, %v3555
        %v3557 = vpop.f32.mrf.mxu0
        %v3558 = vpop.f32.mrf.mxu0
        %v3559 = vadd.f32 0.0, %v3558
        %v3560 = vpop.f32.mrf.mxu0
        %3561 = vmatprep.mubr.bf16.mxu0 0
        %3562 = vmatmul.mubr.bf16.gmra.mxu0 %v3471
        %v3563 = vpop.f32.mrf.mxu0
        %v3564 = vadd.f32 0.0, %v3563
        %v3565 = vpop.f32.mrf.mxu0
        %v3566 = vpop.f32.mrf.mxu0
        %v3567 = vadd.f32 0.0, %v3566
        %v3568 = vpop.f32.mrf.mxu0
        %3569 = vdwg.mxu0
        %v3570 = vadd.f32 %v2959, %v3508
        %v3571 = vadd.f32 %v2960, %v3511
        %v3572 = vadd.f32 %v2961, %v3516
        %v3573 = vadd.f32 %v2962, %v3519
        %v3574 = vadd.f32 %v2963, %v3524
        %v3575 = vadd.f32 %v2964, %v3527
        %v3576 = vadd.f32 %v2965, %v3532
        %v3577 = vadd.f32 %v2966, %v3535
        %v3578 = vadd.f32 %v2967, %v3540
        %v3579 = vadd.f32 %v2968, %v3543
        %v3580 = vadd.f32 %v2969, %v3548
        %v3581 = vadd.f32 %v2970, %v3551
        %v3582 = vadd.f32 %v2971, %v3556
        %v3583 = vadd.f32 %v2972, %v3559
        %v3584 = vadd.f32 %v2973, %v3564
        %v3585 = vadd.f32 %v2974, %v3567
        %v3586 = vadd.f32 %v634, %v3570
        %v3587 = vadd.f32 %v635, %v3571
        %v3588 = vadd.f32 %v636, %v3572
        %v3589 = vadd.f32 %v637, %v3573
        %v3590 = vadd.f32 %v638, %v3574
        %v3591 = vadd.f32 %v639, %v3575
        %v3592 = vadd.f32 %v640, %v3576
        %v3593 = vadd.f32 %v641, %v3577
        %v3594 = vadd.f32 %v642, %v3578
        %v3595 = vadd.f32 %v643, %v3579
        %v3596 = vadd.f32 %v644, %v3580
        %v3597 = vadd.f32 %v645, %v3581
        %v3598 = vadd.f32 %v646, %v3582
        %v3599 = vadd.f32 %v647, %v3583
        %v3600 = vadd.f32 %v648, %v3584
        %v3601 = vadd.f32 %v649, %v3585
        %3602 = vadd.xlane.f32.xlu0 %v3586
        %v3603 = vpop.xlane.xlu0 %3602
        %3604 = vadd.xlane.f32.xlu0 %v3587
        %v3605 = vpop.xlane.xlu0 %3604
        %3606 = vadd.xlane.f32.xlu0 %v3588
        %v3607 = vpop.xlane.xlu0 %3606
        %3608 = vadd.xlane.f32.xlu0 %v3589
        %v3609 = vpop.xlane.xlu0 %3608
        %3610 = vadd.xlane.f32.xlu0 %v3590
        %v3611 = vpop.xlane.xlu0 %3610
        %3612 = vadd.xlane.f32.xlu0 %v3591
        %v3613 = vpop.xlane.xlu0 %3612
        %3614 = vadd.xlane.f32.xlu0 %v3592
        %v3615 = vpop.xlane.xlu0 %3614
        %3616 = vadd.xlane.f32.xlu0 %v3593
        %v3617 = vpop.xlane.xlu0 %3616
        %3618 = vadd.xlane.f32.xlu0 %v3594
        %v3619 = vpop.xlane.xlu0 %3618
        %3620 = vadd.xlane.f32.xlu0 %v3595
        %v3621 = vpop.xlane.xlu0 %3620
        %3622 = vadd.xlane.f32.xlu0 %v3596
        %v3623 = vpop.xlane.xlu0 %3622
        %3624 = vadd.xlane.f32.xlu0 %v3597
        %v3625 = vpop.xlane.xlu0 %3624
        %3626 = vadd.xlane.f32.xlu0 %v3598
        %v3627 = vpop.xlane.xlu0 %3626
        %3628 = vadd.xlane.f32.xlu0 %v3599
        %v3629 = vpop.xlane.xlu0 %3628
        %3630 = vadd.xlane.f32.xlu0 %v3600
        %v3631 = vpop.xlane.xlu0 %3630
        %3632 = vadd.xlane.f32.xlu0 %v3601
        %v3633 = vpop.xlane.xlu0 %3632
        %v3634 = vrcp.pop 128.0
        %v3635 = vmul.f32 %v3603, %v3634
        %v3636 = vmul.f32 %v3605, %v3634
        %v3637 = vmul.f32 %v3607, %v3634
        %v3638 = vmul.f32 %v3609, %v3634
        %v3639 = vmul.f32 %v3611, %v3634
        %v3640 = vmul.f32 %v3613, %v3634
        %v3641 = vmul.f32 %v3615, %v3634
        %v3642 = vmul.f32 %v3617, %v3634
        %v3643 = vmul.f32 %v3619, %v3634
        %v3644 = vmul.f32 %v3621, %v3634
        %v3645 = vmul.f32 %v3623, %v3634
        %v3646 = vmul.f32 %v3625, %v3634
        %v3647 = vmul.f32 %v3627, %v3634
        %v3648 = vmul.f32 %v3629, %v3634
        %v3649 = vmul.f32 %v3631, %v3634
        %v3650 = vmul.f32 %v3633, %v3634
        %v3651 = vsub.f32 %v3586, %v3635
        %v3652 = vsub.f32 %v3587, %v3636
        %v3653 = vsub.f32 %v3588, %v3637
        %v3654 = vsub.f32 %v3589, %v3638
        %v3655 = vsub.f32 %v3590, %v3639
        %v3656 = vsub.f32 %v3591, %v3640
        %v3657 = vsub.f32 %v3592, %v3641
        %v3658 = vsub.f32 %v3593, %v3642
        %v3659 = vsub.f32 %v3594, %v3643
        %v3660 = vsub.f32 %v3595, %v3644
        %v3661 = vsub.f32 %v3596, %v3645
        %v3662 = vsub.f32 %v3597, %v3646
        %v3663 = vsub.f32 %v3598, %v3647
        %v3664 = vsub.f32 %v3599, %v3648
        %v3665 = vsub.f32 %v3600, %v3649
        %v3666 = vsub.f32 %v3601, %v3650
        %v3667 = vmul.f32 %v3651, %v3651
        %v3668 = vmul.f32 %v3652, %v3652
        %v3669 = vmul.f32 %v3653, %v3653
        %v3670 = vmul.f32 %v3654, %v3654
        %v3671 = vmul.f32 %v3655, %v3655
        %v3672 = vmul.f32 %v3656, %v3656
        %v3673 = vmul.f32 %v3657, %v3657
        %v3674 = vmul.f32 %v3658, %v3658
        %v3675 = vmul.f32 %v3659, %v3659
        %v3676 = vmul.f32 %v3660, %v3660
        %v3677 = vmul.f32 %v3661, %v3661
        %v3678 = vmul.f32 %v3662, %v3662
        %v3679 = vmul.f32 %v3663, %v3663
        %v3680 = vmul.f32 %v3664, %v3664
        %v3681 = vmul.f32 %v3665, %v3665
        %v3682 = vmul.f32 %v3666, %v3666
        %3683 = vadd.xlane.f32.xlu0 %v3667
        %v3684 = vpop.xlane.xlu0 %3683
        %3685 = vadd.xlane.f32.xlu0 %v3668
        %v3686 = vpop.xlane.xlu0 %3685
        %3687 = vadd.xlane.f32.xlu0 %v3669
        %v3688 = vpop.xlane.xlu0 %3687
        %3689 = vadd.xlane.f32.xlu0 %v3670
        %v3690 = vpop.xlane.xlu0 %3689
        %3691 = vadd.xlane.f32.xlu0 %v3671
        %v3692 = vpop.xlane.xlu0 %3691
        %3693 = vadd.xlane.f32.xlu0 %v3672
        %v3694 = vpop.xlane.xlu0 %3693
        %3695 = vadd.xlane.f32.xlu0 %v3673
        %v3696 = vpop.xlane.xlu0 %3695
        %3697 = vadd.xlane.f32.xlu0 %v3674
        %v3698 = vpop.xlane.xlu0 %3697
        %3699 = vadd.xlane.f32.xlu0 %v3675
        %v3700 = vpop.xlane.xlu0 %3699
        %3701 = vadd.xlane.f32.xlu0 %v3676
        %v3702 = vpop.xlane.xlu0 %3701
        %3703 = vadd.xlane.f32.xlu0 %v3677
        %v3704 = vpop.xlane.xlu0 %3703
        %3705 = vadd.xlane.f32.xlu0 %v3678
        %v3706 = vpop.xlane.xlu0 %3705
        %3707 = vadd.xlane.f32.xlu0 %v3679
        %v3708 = vpop.xlane.xlu0 %3707
        %3709 = vadd.xlane.f32.xlu0 %v3680
        %v3710 = vpop.xlane.xlu0 %3709
        %3711 = vadd.xlane.f32.xlu0 %v3681
        %v3712 = vpop.xlane.xlu0 %3711
        %3713 = vadd.xlane.f32.xlu0 %v3682
        %v3714 = vpop.xlane.xlu0 %3713
        %v3715 = vmul.f32 %v3684, %v3634
        %v3716 = vmul.f32 %v3686, %v3634
        %v3717 = vmul.f32 %v3688, %v3634
        %v3718 = vmul.f32 %v3690, %v3634
        %v3719 = vmul.f32 %v3692, %v3634
        %v3720 = vmul.f32 %v3694, %v3634
        %v3721 = vmul.f32 %v3696, %v3634
        %v3722 = vmul.f32 %v3698, %v3634
        %v3723 = vmul.f32 %v3700, %v3634
        %v3724 = vmul.f32 %v3702, %v3634
        %v3725 = vmul.f32 %v3704, %v3634
        %v3726 = vmul.f32 %v3706, %v3634
        %v3727 = vmul.f32 %v3708, %v3634
        %v3728 = vmul.f32 %v3710, %v3634
        %v3729 = vmul.f32 %v3712, %v3634
        %v3730 = vmul.f32 %v3714, %v3634
        %v3731 = vadd.f32 %v3715, 1e-05
        %v3732 = vadd.f32 %v3716, 1e-05
        %v3733 = vadd.f32 %v3717, 1e-05
        %v3734 = vadd.f32 %v3718, 1e-05
        %v3735 = vadd.f32 %v3719, 1e-05
        %v3736 = vadd.f32 %v3720, 1e-05
        %v3737 = vadd.f32 %v3721, 1e-05
        %v3738 = vadd.f32 %v3722, 1e-05
        %v3739 = vadd.f32 %v3723, 1e-05
        %v3740 = vadd.f32 %v3724, 1e-05
        %v3741 = vadd.f32 %v3725, 1e-05
        %v3742 = vadd.f32 %v3726, 1e-05
        %v3743 = vadd.f32 %v3727, 1e-05
        %v3744 = vadd.f32 %v3728, 1e-05
        %v3745 = vadd.f32 %v3729, 1e-05
        %v3746 = vadd.f32 %v3730, 1e-05
        %v3747 = vrsqrt.pop %v3731
        %v3748 = vrsqrt.pop %v3732
        %v3749 = vrsqrt.pop %v3733
        %v3750 = vrsqrt.pop %v3734
        %v3751 = vrsqrt.pop %v3735
        %v3752 = vrsqrt.pop %v3736
        %v3753 = vrsqrt.pop %v3737
        %v3754 = vrsqrt.pop %v3738
        %v3755 = vrsqrt.pop %v3739
        %v3756 = vrsqrt.pop %v3740
        %v3757 = vrsqrt.pop %v3741
        %v3758 = vrsqrt.pop %v3742
        %v3759 = vrsqrt.pop %v3743
        %v3760 = vrsqrt.pop %v3744
        %v3761 = vrsqrt.pop %v3745
        %v3762 = vrsqrt.pop %v3746
        %v3763 = vmul.f32 %v3651, %v3747
        %v3764 = vmul.f32 %v3652, %v3748
        %v3765 = vmul.f32 %v3653, %v3749
        %v3766 = vmul.f32 %v3654, %v3750
        %v3767 = vmul.f32 %v3655, %v3751
        %v3768 = vmul.f32 %v3656, %v3752
        %v3769 = vmul.f32 %v3657, %v3753
        %v3770 = vmul.f32 %v3658, %v3754
        %v3771 = vmul.f32 %v3659, %v3755
        %v3772 = vmul.f32 %v3660, %v3756
        %v3773 = vmul.f32 %v3661, %v3757
        %v3774 = vmul.f32 %v3662, %v3758
        %v3775 = vmul.f32 %v3663, %v3759
        %v3776 = vmul.f32 %v3664, %v3760
        %v3777 = vmul.f32 %v3665, %v3761
        %v3778 = vmul.f32 %v3666, %v3762
        %v3779 = vld [vmem:[%s6] sm:$0x1]
        %v3781 = vlaneseq
        %v3782 = vshrl.u32 %v3781, 7
        %v3783 = vsub.s32 0, %v3782
        %v3784 = vrot.slane %v3779, %v3783
        %v3786 = vmul.f32 %v3763, %v3784
        %v3787 = vmul.f32 %v3764, %v3784
        %v3788 = vmul.f32 %v3765, %v3784
        %v3789 = vmul.f32 %v3766, %v3784
        %v3790 = vmul.f32 %v3767, %v3784
        %v3791 = vmul.f32 %v3768, %v3784
        %v3792 = vmul.f32 %v3769, %v3784
        %v3793 = vmul.f32 %v3770, %v3784
        %v3794 = vmul.f32 %v3771, %v3784
        %v3795 = vmul.f32 %v3772, %v3784
        %v3796 = vmul.f32 %v3773, %v3784
        %v3797 = vmul.f32 %v3774, %v3784
        %v3798 = vmul.f32 %v3775, %v3784
        %v3799 = vmul.f32 %v3776, %v3784
        %v3800 = vmul.f32 %v3777, %v3784
        %v3801 = vmul.f32 %v3778, %v3784
        %v3802 = vld [vmem:[%s7] sm:$0x1]
        %v3804 = vlaneseq
        %v3805 = vshrl.u32 %v3804, 7
        %v3806 = vsub.s32 0, %v3805
        %v3807 = vrot.slane %v3802, %v3806
        %v3809 = vadd.f32 %v3786, %v3807
        %v3810 = vadd.f32 %v3787, %v3807
        %v3811 = vadd.f32 %v3788, %v3807
        %v3812 = vadd.f32 %v3789, %v3807
        %v3813 = vadd.f32 %v3790, %v3807
        %v3814 = vadd.f32 %v3791, %v3807
        %v3815 = vadd.f32 %v3792, %v3807
        %v3816 = vadd.f32 %v3793, %v3807
        %v3817 = vadd.f32 %v3794, %v3807
        %v3818 = vadd.f32 %v3795, %v3807
        %v3819 = vadd.f32 %v3796, %v3807
        %v3820 = vadd.f32 %v3797, %v3807
        %v3821 = vadd.f32 %v3798, %v3807
        %v3822 = vadd.f32 %v3799, %v3807
        %v3823 = vadd.f32 %v3800, %v3807
        %v3824 = vadd.f32 %v3801, %v3807
        %v3825 = vpack.c.bf16 %v3810, %v3809
        %v3826 = vpack.c.bf16 %v3812, %v3811
        %v3827 = vpack.c.bf16 %v3814, %v3813
        %v3828 = vpack.c.bf16 %v3816, %v3815
        %v3829 = vpack.c.bf16 %v3818, %v3817
        %v3830 = vpack.c.bf16 %v3820, %v3819
        %v3831 = vpack.c.bf16 %v3822, %v3821
        %v3832 = vpack.c.bf16 %v3824, %v3823
        %v3833 = vld [vmem:[#allocation13] sm:$0xff]
        %v3834 = vld [vmem:[#allocation13 + $0x8] sm:$0xff]
        %v3835 = vld [vmem:[#allocation13 + $0x10] sm:$0xff]
        %v3836 = vld [vmem:[#allocation13 + $0x18] sm:$0xff]
        %v3837 = vld [vmem:[#allocation13 + $0x20] sm:$0xff]
        %v3838 = vld [vmem:[#allocation13 + $0x28] sm:$0xff]
        %v3839 = vld [vmem:[#allocation13 + $0x30] sm:$0xff]
        %v3840 = vld [vmem:[#allocation13 + $0x38] sm:$0xff]
        %v3841 = vld [vmem:[#allocation13 + $0x40] sm:$0xff]
        %v3842 = vld [vmem:[#allocation13 + $0x48] sm:$0xff]
        %v3843 = vld [vmem:[#allocation13 + $0x50] sm:$0xff]
        %v3844 = vld [vmem:[#allocation13 + $0x58] sm:$0xff]
        %v3845 = vld [vmem:[#allocation13 + $0x60] sm:$0xff]
        %v3846 = vld [vmem:[#allocation13 + $0x68] sm:$0xff]
        %v3847 = vld [vmem:[#allocation13 + $0x70] sm:$0xff]
        %v3848 = vld [vmem:[#allocation13 + $0x78] sm:$0xff]
        %v3849 = vld [vmem:[%s9] sm:$0x3]
        %v3851 = vlaneseq
        %v3852 = vshrl.u32 %v3851, 7
        %v3853 = vsub.s32 0, %v3852
        %v3854 = vrot.slane %v3849, %v3853
        %v3855 = vlaneseq
        %v3856 = vshrl.u32 %v3855, 7
        %v3857 = vsub.s32 1, %v3856
        %v3858 = vrot.slane %v3849, %v3857
        %v3877 = vunpack.c.l.b16 %v3833
        %v3878 = vunpack.c.h.b16 %v3833
        %v3879 = vunpack.c.l.b16 %v3834
        %v3880 = vunpack.c.h.b16 %v3834
        %v3881 = vunpack.c.l.b16 %v3835
        %v3882 = vunpack.c.h.b16 %v3835
        %v3883 = vunpack.c.l.b16 %v3836
        %v3884 = vunpack.c.h.b16 %v3836
        %v3885 = vunpack.c.l.b16 %v3837
        %v3886 = vunpack.c.h.b16 %v3837
        %v3887 = vunpack.c.l.b16 %v3838
        %v3888 = vunpack.c.h.b16 %v3838
        %v3889 = vunpack.c.l.b16 %v3839
        %v3890 = vunpack.c.h.b16 %v3839
        %v3891 = vunpack.c.l.b16 %v3840
        %v3892 = vunpack.c.h.b16 %v3840
        %v3893 = vunpack.c.l.b16 %v3841
        %v3894 = vunpack.c.h.b16 %v3841
        %v3895 = vunpack.c.l.b16 %v3842
        %v3896 = vunpack.c.h.b16 %v3842
        %v3897 = vunpack.c.l.b16 %v3843
        %v3898 = vunpack.c.h.b16 %v3843
        %v3899 = vunpack.c.l.b16 %v3844
        %v3900 = vunpack.c.h.b16 %v3844
        %v3901 = vunpack.c.l.b16 %v3845
        %v3902 = vunpack.c.h.b16 %v3845
        %v3903 = vunpack.c.l.b16 %v3846
        %v3904 = vunpack.c.h.b16 %v3846
        %v3905 = vunpack.c.l.b16 %v3847
        %v3906 = vunpack.c.h.b16 %v3847
        %v3907 = vunpack.c.l.b16 %v3848
        %v3908 = vunpack.c.h.b16 %v3848
        %v3909 = vpack.c.b16 %v3879, %v3877
        %v3910 = vpack.c.b16 %v3880, %v3878
        %v3911 = vpack.c.b16 %v3883, %v3881
        %v3912 = vpack.c.b16 %v3884, %v3882
        %v3913 = vpack.c.b16 %v3887, %v3885
        %v3914 = vpack.c.b16 %v3888, %v3886
        %v3915 = vpack.c.b16 %v3891, %v3889
        %v3916 = vpack.c.b16 %v3892, %v3890
        %v3917 = vpack.c.b16 %v3895, %v3893
        %v3918 = vpack.c.b16 %v3896, %v3894
        %v3919 = vpack.c.b16 %v3899, %v3897
        %v3920 = vpack.c.b16 %v3900, %v3898
        %v3921 = vpack.c.b16 %v3903, %v3901
        %v3922 = vpack.c.b16 %v3904, %v3902
        %v3923 = vpack.c.b16 %v3907, %v3905
        %v3924 = vpack.c.b16 %v3908, %v3906
        %3941 = vmatprep.subr.bf16.mxu0 %v3924
        %3942 = vmatpush1.bf16.msra.mxu0 %v3923
        %3943 = vmatprep.subr.bf16.mxu0 %v3922
        %3944 = vmatpush1.bf16.msra.mxu0 %v3921
        %3945 = vmatprep.subr.bf16.mxu0 %v3920
        %3946 = vmatpush1.bf16.msra.mxu0 %v3919
        %3947 = vmatprep.subr.bf16.mxu0 %v3918
        %3948 = vmatpush1.bf16.msra.mxu0 %v3917
        %3949 = vmatprep.subr.bf16.mxu0 %v3916
        %3950 = vmatpush1.bf16.msra.mxu0 %v3915
        %3951 = vmatprep.subr.bf16.mxu0 %v3914
        %3952 = vmatpush1.bf16.msra.mxu0 %v3913
        %3953 = vmatprep.subr.bf16.mxu0 %v3912
        %3954 = vmatpush1.bf16.msra.mxu0 %v3911
        %3955 = vmatprep.subr.bf16.mxu0 %v3910
        %3956 = vmatpush1.bf16.msra.mxu0 %v3909
        %3957 = vmatprep.subr.bf16.mxu0 0
        %3958 = vmatpush2.bf16.msra.mxu0 0
        %3959 = vmatprep.subr.bf16.mxu0 0
        %3960 = vmatpush2.bf16.msra.mxu0 0
        %3961 = vmatprep.subr.bf16.mxu0 0
        %3962 = vmatpush2.bf16.msra.mxu0 0
        %3963 = vmatprep.subr.bf16.mxu0 0
        %3964 = vmatpush2.bf16.msra.mxu0 0
        %3965 = vmatprep.subr.bf16.mxu0 0
        %3966 = vmatpush2.bf16.msra.mxu0 0
        %3967 = vmatprep.subr.bf16.mxu0 0
        %3968 = vmatpush2.bf16.msra.mxu0 0
        %3969 = vmatprep.subr.bf16.mxu0 0
        %3970 = vmatpush2.bf16.msra.mxu0 0
        %3971 = vmatprep.subr.bf16.mxu0 0
        %3972 = vmatpush2.bf16.msra.mxu0 0
        %3973 = vmatprep.mubr.bf16.mxu0 0
        %3974 = vmatmul.mubr.bf16.gmra.mxu0 %v3825
        %v3975 = vpop.f32.mrf.mxu0
        %v3976 = vadd.f32 %v3854, %v3975
        %v3977 = vpop.f32.mrf.mxu0
        %v3978 = vadd.f32 %v3858, %v3977
        %v3979 = vpop.f32.mrf.mxu0
        %v3980 = vadd.f32 %v3854, %v3979
        %v3981 = vpop.f32.mrf.mxu0
        %v3982 = vadd.f32 %v3858, %v3981
        %3983 = vmatprep.mubr.bf16.mxu0 0
        %3984 = vmatmul.mubr.bf16.gmra.mxu0 %v3826
        %v3985 = vpop.f32.mrf.mxu0
        %v3986 = vadd.f32 %v3854, %v3985
        %v3987 = vpop.f32.mrf.mxu0
        %v3988 = vadd.f32 %v3858, %v3987
        %v3989 = vpop.f32.mrf.mxu0
        %v3990 = vadd.f32 %v3854, %v3989
        %v3991 = vpop.f32.mrf.mxu0
        %v3992 = vadd.f32 %v3858, %v3991
        %3993 = vmatprep.mubr.bf16.mxu0 0
        %3994 = vmatmul.mubr.bf16.gmra.mxu0 %v3827
        %v3995 = vpop.f32.mrf.mxu0
        %v3996 = vadd.f32 %v3854, %v3995
        %v3997 = vpop.f32.mrf.mxu0
        %v3998 = vadd.f32 %v3858, %v3997
        %v3999 = vpop.f32.mrf.mxu0
        %v4000 = vadd.f32 %v3854, %v3999
        %v4001 = vpop.f32.mrf.mxu0
        %v4002 = vadd.f32 %v3858, %v4001
        %4003 = vmatprep.mubr.bf16.mxu0 0
        %4004 = vmatmul.mubr.bf16.gmra.mxu0 %v3828
        %v4005 = vpop.f32.mrf.mxu0
        %v4006 = vadd.f32 %v3854, %v4005
        %v4007 = vpop.f32.mrf.mxu0
        %v4008 = vadd.f32 %v3858, %v4007
        %v4009 = vpop.f32.mrf.mxu0
        %v4010 = vadd.f32 %v3854, %v4009
        %v4011 = vpop.f32.mrf.mxu0
        %v4012 = vadd.f32 %v3858, %v4011
        %4013 = vmatprep.mubr.bf16.mxu0 0
        %4014 = vmatmul.mubr.bf16.gmra.mxu0 %v3829
        %v4015 = vpop.f32.mrf.mxu0
        %v4016 = vadd.f32 %v3854, %v4015
        %v4017 = vpop.f32.mrf.mxu0
        %v4018 = vadd.f32 %v3858, %v4017
        %v4019 = vpop.f32.mrf.mxu0
        %v4020 = vadd.f32 %v3854, %v4019
        %v4021 = vpop.f32.mrf.mxu0
        %v4022 = vadd.f32 %v3858, %v4021
        %4023 = vmatprep.mubr.bf16.mxu0 0
        %4024 = vmatmul.mubr.bf16.gmra.mxu0 %v3830
        %v4025 = vpop.f32.mrf.mxu0
        %v4026 = vadd.f32 %v3854, %v4025
        %v4027 = vpop.f32.mrf.mxu0
        %v4028 = vadd.f32 %v3858, %v4027
        %v4029 = vpop.f32.mrf.mxu0
        %v4030 = vadd.f32 %v3854, %v4029
        %v4031 = vpop.f32.mrf.mxu0
        %v4032 = vadd.f32 %v3858, %v4031
        %4033 = vmatprep.mubr.bf16.mxu0 0
        %4034 = vmatmul.mubr.bf16.gmra.mxu0 %v3831
        %v4035 = vpop.f32.mrf.mxu0
        %v4036 = vadd.f32 %v3854, %v4035
        %v4037 = vpop.f32.mrf.mxu0
        %v4038 = vadd.f32 %v3858, %v4037
        %v4039 = vpop.f32.mrf.mxu0
        %v4040 = vadd.f32 %v3854, %v4039
        %v4041 = vpop.f32.mrf.mxu0
        %v4042 = vadd.f32 %v3858, %v4041
        %4043 = vmatprep.mubr.bf16.mxu0 0
        %4044 = vmatmul.mubr.bf16.gmra.mxu0 %v3832
        %v4045 = vpop.f32.mrf.mxu0
        %v4046 = vadd.f32 %v3854, %v4045
        %v4047 = vpop.f32.mrf.mxu0
        %v4048 = vadd.f32 %v3858, %v4047
        %v4049 = vpop.f32.mrf.mxu0
        %v4050 = vadd.f32 %v3854, %v4049
        %v4051 = vpop.f32.mrf.mxu0
        %v4052 = vadd.f32 %v3858, %v4051
        %4053 = vdwg.mxu0
        %v4054 = vmax.f32 %v3976, 0.0
        %v4055 = vmax.f32 %v3978, 0.0
        %v4056 = vmax.f32 %v3980, 0.0
        %v4057 = vmax.f32 %v3982, 0.0
        %v4058 = vmax.f32 %v3986, 0.0
        %v4059 = vmax.f32 %v3988, 0.0
        %v4060 = vmax.f32 %v3990, 0.0
        %v4061 = vmax.f32 %v3992, 0.0
        %v4062 = vmax.f32 %v3996, 0.0
        %v4063 = vmax.f32 %v3998, 0.0
        %v4064 = vmax.f32 %v4000, 0.0
        %v4065 = vmax.f32 %v4002, 0.0
        %v4066 = vmax.f32 %v4006, 0.0
        %v4067 = vmax.f32 %v4008, 0.0
        %v4068 = vmax.f32 %v4010, 0.0
        %v4069 = vmax.f32 %v4012, 0.0
        %v4070 = vmax.f32 %v4016, 0.0
        %v4071 = vmax.f32 %v4018, 0.0
        %v4072 = vmax.f32 %v4020, 0.0
        %v4073 = vmax.f32 %v4022, 0.0
        %v4074 = vmax.f32 %v4026, 0.0
        %v4075 = vmax.f32 %v4028, 0.0
        %v4076 = vmax.f32 %v4030, 0.0
        %v4077 = vmax.f32 %v4032, 0.0
        %v4078 = vmax.f32 %v4036, 0.0
        %v4079 = vmax.f32 %v4038, 0.0
        %v4080 = vmax.f32 %v4040, 0.0
        %v4081 = vmax.f32 %v4042, 0.0
        %v4082 = vmax.f32 %v4046, 0.0
        %v4083 = vmax.f32 %v4048, 0.0
        %v4084 = vmax.f32 %v4050, 0.0
        %v4085 = vmax.f32 %v4052, 0.0
        %v4086 = vpack.c.bf16 %v4056, %v4054
        %v4087 = vpack.c.bf16 %v4057, %v4055
        %v4088 = vpack.c.bf16 %v4060, %v4058
        %v4089 = vpack.c.bf16 %v4061, %v4059
        %v4090 = vpack.c.bf16 %v4064, %v4062
        %v4091 = vpack.c.bf16 %v4065, %v4063
        %v4092 = vpack.c.bf16 %v4068, %v4066
        %v4093 = vpack.c.bf16 %v4069, %v4067
        %v4094 = vpack.c.bf16 %v4072, %v4070
        %v4095 = vpack.c.bf16 %v4073, %v4071
        %v4096 = vpack.c.bf16 %v4076, %v4074
        %v4097 = vpack.c.bf16 %v4077, %v4075
        %v4098 = vpack.c.bf16 %v4080, %v4078
        %v4099 = vpack.c.bf16 %v4081, %v4079
        %v4100 = vpack.c.bf16 %v4084, %v4082
        %v4101 = vpack.c.bf16 %v4085, %v4083
        %v4102 = vld [vmem:[#allocation14] sm:$0xf]
        %v4103 = vld [vmem:[#allocation14 + $0x4] sm:$0xf]
        %v4104 = vld [vmem:[#allocation14 + $0x8] sm:$0xf]
        %v4105 = vld [vmem:[#allocation14 + $0xc] sm:$0xf]
        %v4106 = vld [vmem:[#allocation14 + $0x10] sm:$0xf]
        %v4107 = vld [vmem:[#allocation14 + $0x14] sm:$0xf]
        %v4108 = vld [vmem:[#allocation14 + $0x18] sm:$0xf]
        %v4109 = vld [vmem:[#allocation14 + $0x1c] sm:$0xf]
        %v4110 = vld [vmem:[#allocation14 + $0x20] sm:$0xf]
        %v4111 = vld [vmem:[#allocation14 + $0x24] sm:$0xf]
        %v4112 = vld [vmem:[#allocation14 + $0x28] sm:$0xf]
        %v4113 = vld [vmem:[#allocation14 + $0x2c] sm:$0xf]
        %v4114 = vld [vmem:[#allocation14 + $0x30] sm:$0xf]
        %v4115 = vld [vmem:[#allocation14 + $0x34] sm:$0xf]
        %v4116 = vld [vmem:[#allocation14 + $0x38] sm:$0xf]
        %v4117 = vld [vmem:[#allocation14 + $0x3c] sm:$0xf]
        %v4118 = vld [vmem:[#allocation14 + $0x40] sm:$0xf]
        %v4119 = vld [vmem:[#allocation14 + $0x44] sm:$0xf]
        %v4120 = vld [vmem:[#allocation14 + $0x48] sm:$0xf]
        %v4121 = vld [vmem:[#allocation14 + $0x4c] sm:$0xf]
        %v4122 = vld [vmem:[#allocation14 + $0x50] sm:$0xf]
        %v4123 = vld [vmem:[#allocation14 + $0x54] sm:$0xf]
        %v4124 = vld [vmem:[#allocation14 + $0x58] sm:$0xf]
        %v4125 = vld [vmem:[#allocation14 + $0x5c] sm:$0xf]
        %v4126 = vld [vmem:[#allocation14 + $0x60] sm:$0xf]
        %v4127 = vld [vmem:[#allocation14 + $0x64] sm:$0xf]
        %v4128 = vld [vmem:[#allocation14 + $0x68] sm:$0xf]
        %v4129 = vld [vmem:[#allocation14 + $0x6c] sm:$0xf]
        %v4130 = vld [vmem:[#allocation14 + $0x70] sm:$0xf]
        %v4131 = vld [vmem:[#allocation14 + $0x74] sm:$0xf]
        %v4132 = vld [vmem:[#allocation14 + $0x78] sm:$0xf]
        %v4133 = vld [vmem:[#allocation14 + $0x7c] sm:$0xf]
        %v4134 = vld [vmem:[%s11] sm:$0x1]
        %v4136 = vlaneseq
        %v4137 = vshrl.u32 %v4136, 7
        %v4138 = vsub.s32 0, %v4137
        %v4139 = vrot.slane %v4134, %v4138
        %v4173 = vunpack.c.l.b16 %v4102
        %v4174 = vunpack.c.l.b16 %v4103
        %v4175 = vunpack.c.l.b16 %v4104
        %v4176 = vunpack.c.l.b16 %v4105
        %v4177 = vunpack.c.l.b16 %v4106
        %v4178 = vunpack.c.l.b16 %v4107
        %v4179 = vunpack.c.l.b16 %v4108
        %v4180 = vunpack.c.l.b16 %v4109
        %v4181 = vunpack.c.l.b16 %v4110
        %v4182 = vunpack.c.l.b16 %v4111
        %v4183 = vunpack.c.l.b16 %v4112
        %v4184 = vunpack.c.l.b16 %v4113
        %v4185 = vunpack.c.l.b16 %v4114
        %v4186 = vunpack.c.l.b16 %v4115
        %v4187 = vunpack.c.l.b16 %v4116
        %v4188 = vunpack.c.l.b16 %v4117
        %v4189 = vunpack.c.l.b16 %v4118
        %v4190 = vunpack.c.l.b16 %v4119
        %v4191 = vunpack.c.l.b16 %v4120
        %v4192 = vunpack.c.l.b16 %v4121
        %v4193 = vunpack.c.l.b16 %v4122
        %v4194 = vunpack.c.l.b16 %v4123
        %v4195 = vunpack.c.l.b16 %v4124
        %v4196 = vunpack.c.l.b16 %v4125
        %v4197 = vunpack.c.l.b16 %v4126
        %v4198 = vunpack.c.l.b16 %v4127
        %v4199 = vunpack.c.l.b16 %v4128
        %v4200 = vunpack.c.l.b16 %v4129
        %v4201 = vunpack.c.l.b16 %v4130
        %v4202 = vunpack.c.l.b16 %v4131
        %v4203 = vunpack.c.l.b16 %v4132
        %v4204 = vunpack.c.l.b16 %v4133
        %v4205 = vpack.c.b16 %v4174, %v4173
        %v4206 = vpack.c.b16 %v4176, %v4175
        %v4207 = vpack.c.b16 %v4178, %v4177
        %v4208 = vpack.c.b16 %v4180, %v4179
        %v4209 = vpack.c.b16 %v4182, %v4181
        %v4210 = vpack.c.b16 %v4184, %v4183
        %v4211 = vpack.c.b16 %v4186, %v4185
        %v4212 = vpack.c.b16 %v4188, %v4187
        %v4213 = vpack.c.b16 %v4190, %v4189
        %v4214 = vpack.c.b16 %v4192, %v4191
        %v4215 = vpack.c.b16 %v4194, %v4193
        %v4216 = vpack.c.b16 %v4196, %v4195
        %v4217 = vpack.c.b16 %v4198, %v4197
        %v4218 = vpack.c.b16 %v4200, %v4199
        %v4219 = vpack.c.b16 %v4202, %v4201
        %v4220 = vpack.c.b16 %v4204, %v4203
        %4237 = vmatprep.subr.bf16.mxu0 0
        %4238 = vmatpush1.bf16.msra.mxu0 %v4212
        %4239 = vmatprep.subr.bf16.mxu0 0
        %4240 = vmatpush1.bf16.msra.mxu0 %v4211
        %4241 = vmatprep.subr.bf16.mxu0 0
        %4242 = vmatpush1.bf16.msra.mxu0 %v4210
        %4243 = vmatprep.subr.bf16.mxu0 0
        %4244 = vmatpush1.bf16.msra.mxu0 %v4209
        %4245 = vmatprep.subr.bf16.mxu0 0
        %4246 = vmatpush1.bf16.msra.mxu0 %v4208
        %4247 = vmatprep.subr.bf16.mxu0 0
        %4248 = vmatpush1.bf16.msra.mxu0 %v4207
        %4249 = vmatprep.subr.bf16.mxu0 0
        %4250 = vmatpush1.bf16.msra.mxu0 %v4206
        %4251 = vmatprep.subr.bf16.mxu0 0
        %4252 = vmatpush1.bf16.msra.mxu0 %v4205
        %4253 = vmatprep.subr.bf16.mxu0 0
        %4254 = vmatpush2.bf16.msra.mxu0 %v4220
        %4255 = vmatprep.subr.bf16.mxu0 0
        %4256 = vmatpush2.bf16.msra.mxu0 %v4219
        %4257 = vmatprep.subr.bf16.mxu0 0
        %4258 = vmatpush2.bf16.msra.mxu0 %v4218
        %4259 = vmatprep.subr.bf16.mxu0 0
        %4260 = vmatpush2.bf16.msra.mxu0 %v4217
        %4261 = vmatprep.subr.bf16.mxu0 0
        %4262 = vmatpush2.bf16.msra.mxu0 %v4216
        %4263 = vmatprep.subr.bf16.mxu0 0
        %4264 = vmatpush2.bf16.msra.mxu0 %v4215
        %4265 = vmatprep.subr.bf16.mxu0 0
        %4266 = vmatpush2.bf16.msra.mxu0 %v4214
        %4267 = vmatprep.subr.bf16.mxu0 0
        %4268 = vmatpush2.bf16.msra.mxu0 %v4213
        %4269 = vmatprep.mubr.bf16.mxu0 %v4087
        %4270 = vmatmul.mubr.bf16.gmra.mxu0 %v4086
        %v4271 = vpop.f32.mrf.mxu0
        %v4272 = vadd.f32 %v4139, %v4271
        %v4273 = vpop.f32.mrf.mxu0
        %v4274 = vpop.f32.mrf.mxu0
        %v4275 = vadd.f32 %v4139, %v4274
        %v4276 = vpop.f32.mrf.mxu0
        %4277 = vmatprep.mubr.bf16.mxu0 %v4089
        %4278 = vmatmul.mubr.bf16.gmra.mxu0 %v4088
        %v4279 = vpop.f32.mrf.mxu0
        %v4280 = vadd.f32 %v4139, %v4279
        %v4281 = vpop.f32.mrf.mxu0
        %v4282 = vpop.f32.mrf.mxu0
        %v4283 = vadd.f32 %v4139, %v4282
        %v4284 = vpop.f32.mrf.mxu0
        %4285 = vmatprep.mubr.bf16.mxu0 %v4091
        %4286 = vmatmul.mubr.bf16.gmra.mxu0 %v4090
        %v4287 = vpop.f32.mrf.mxu0
        %v4288 = vadd.f32 %v4139, %v4287
        %v4289 = vpop.f32.mrf.mxu0
        %v4290 = vpop.f32.mrf.mxu0
        %v4291 = vadd.f32 %v4139, %v4290
        %v4292 = vpop.f32.mrf.mxu0
        %4293 = vmatprep.mubr.bf16.mxu0 %v4093
        %4294 = vmatmul.mubr.bf16.gmra.mxu0 %v4092
        %v4295 = vpop.f32.mrf.mxu0
        %v4296 = vadd.f32 %v4139, %v4295
        %v4297 = vpop.f32.mrf.mxu0
        %v4298 = vpop.f32.mrf.mxu0
        %v4299 = vadd.f32 %v4139, %v4298
        %v4300 = vpop.f32.mrf.mxu0
        %4301 = vmatprep.mubr.bf16.mxu0 %v4095
        %4302 = vmatmul.mubr.bf16.gmra.mxu0 %v4094
        %v4303 = vpop.f32.mrf.mxu0
        %v4304 = vadd.f32 %v4139, %v4303
        %v4305 = vpop.f32.mrf.mxu0
        %v4306 = vpop.f32.mrf.mxu0
        %v4307 = vadd.f32 %v4139, %v4306
        %v4308 = vpop.f32.mrf.mxu0
        %4309 = vmatprep.mubr.bf16.mxu0 %v4097
        %4310 = vmatmul.mubr.bf16.gmra.mxu0 %v4096
        %v4311 = vpop.f32.mrf.mxu0
        %v4312 = vadd.f32 %v4139, %v4311
        %v4313 = vpop.f32.mrf.mxu0
        %v4314 = vpop.f32.mrf.mxu0
        %v4315 = vadd.f32 %v4139, %v4314
        %v4316 = vpop.f32.mrf.mxu0
        %4317 = vmatprep.mubr.bf16.mxu0 %v4099
        %4318 = vmatmul.mubr.bf16.gmra.mxu0 %v4098
        %v4319 = vpop.f32.mrf.mxu0
        %v4320 = vadd.f32 %v4139, %v4319
        %v4321 = vpop.f32.mrf.mxu0
        %v4322 = vpop.f32.mrf.mxu0
        %v4323 = vadd.f32 %v4139, %v4322
        %v4324 = vpop.f32.mrf.mxu0
        %4325 = vmatprep.mubr.bf16.mxu0 %v4101
        %4326 = vmatmul.mubr.bf16.gmra.mxu0 %v4100
        %v4327 = vpop.f32.mrf.mxu0
        %v4328 = vadd.f32 %v4139, %v4327
        %v4329 = vpop.f32.mrf.mxu0
        %v4330 = vpop.f32.mrf.mxu0
        %v4331 = vadd.f32 %v4139, %v4330
        %v4332 = vpop.f32.mrf.mxu0
        %4333 = vdwg.mxu0
        %v4334 = vadd.f32 %v3809, %v4272
        %v4335 = vadd.f32 %v3810, %v4275
        %v4336 = vadd.f32 %v3811, %v4280
        %v4337 = vadd.f32 %v3812, %v4283
        %v4338 = vadd.f32 %v3813, %v4288
        %v4339 = vadd.f32 %v3814, %v4291
        %v4340 = vadd.f32 %v3815, %v4296
        %v4341 = vadd.f32 %v3816, %v4299
        %v4342 = vadd.f32 %v3817, %v4304
        %v4343 = vadd.f32 %v3818, %v4307
        %v4344 = vadd.f32 %v3819, %v4312
        %v4345 = vadd.f32 %v3820, %v4315
        %v4346 = vadd.f32 %v3821, %v4320
        %v4347 = vadd.f32 %v3822, %v4323
        %v4348 = vadd.f32 %v3823, %v4328
        %v4349 = vadd.f32 %v3824, %v4331
        %4350 = vadd.xlane.f32.xlu0 %v4334
        %v4351 = vpop.xlane.xlu0 %4350
        %4352 = vadd.xlane.f32.xlu0 %v4335
        %v4353 = vpop.xlane.xlu0 %4352
        %4354 = vadd.xlane.f32.xlu0 %v4336
        %v4355 = vpop.xlane.xlu0 %4354
        %4356 = vadd.xlane.f32.xlu0 %v4337
        %v4357 = vpop.xlane.xlu0 %4356
        %4358 = vadd.xlane.f32.xlu0 %v4338
        %v4359 = vpop.xlane.xlu0 %4358
        %4360 = vadd.xlane.f32.xlu0 %v4339
        %v4361 = vpop.xlane.xlu0 %4360
        %4362 = vadd.xlane.f32.xlu0 %v4340
        %v4363 = vpop.xlane.xlu0 %4362
        %4364 = vadd.xlane.f32.xlu0 %v4341
        %v4365 = vpop.xlane.xlu0 %4364
        %4366 = vadd.xlane.f32.xlu0 %v4342
        %v4367 = vpop.xlane.xlu0 %4366
        %4368 = vadd.xlane.f32.xlu0 %v4343
        %v4369 = vpop.xlane.xlu0 %4368
        %4370 = vadd.xlane.f32.xlu0 %v4344
        %v4371 = vpop.xlane.xlu0 %4370
        %4372 = vadd.xlane.f32.xlu0 %v4345
        %v4373 = vpop.xlane.xlu0 %4372
        %4374 = vadd.xlane.f32.xlu0 %v4346
        %v4375 = vpop.xlane.xlu0 %4374
        %4376 = vadd.xlane.f32.xlu0 %v4347
        %v4377 = vpop.xlane.xlu0 %4376
        %4378 = vadd.xlane.f32.xlu0 %v4348
        %v4379 = vpop.xlane.xlu0 %4378
        %4380 = vadd.xlane.f32.xlu0 %v4349
        %v4381 = vpop.xlane.xlu0 %4380
        %v4382 = vmul.f32 %v4351, %v3634
        %v4383 = vmul.f32 %v4353, %v3634
        %v4384 = vmul.f32 %v4355, %v3634
        %v4385 = vmul.f32 %v4357, %v3634
        %v4386 = vmul.f32 %v4359, %v3634
        %v4387 = vmul.f32 %v4361, %v3634
        %v4388 = vmul.f32 %v4363, %v3634
        %v4389 = vmul.f32 %v4365, %v3634
        %v4390 = vmul.f32 %v4367, %v3634
        %v4391 = vmul.f32 %v4369, %v3634
        %v4392 = vmul.f32 %v4371, %v3634
        %v4393 = vmul.f32 %v4373, %v3634
        %v4394 = vmul.f32 %v4375, %v3634
        %v4395 = vmul.f32 %v4377, %v3634
        %v4396 = vmul.f32 %v4379, %v3634
        %v4397 = vmul.f32 %v4381, %v3634
        %v4398 = vsub.f32 %v4334, %v4382
        %v4399 = vsub.f32 %v4335, %v4383
        %v4400 = vsub.f32 %v4336, %v4384
        %v4401 = vsub.f32 %v4337, %v4385
        %v4402 = vsub.f32 %v4338, %v4386
        %v4403 = vsub.f32 %v4339, %v4387
        %v4404 = vsub.f32 %v4340, %v4388
        %v4405 = vsub.f32 %v4341, %v4389
        %v4406 = vsub.f32 %v4342, %v4390
        %v4407 = vsub.f32 %v4343, %v4391
        %v4408 = vsub.f32 %v4344, %v4392
        %v4409 = vsub.f32 %v4345, %v4393
        %v4410 = vsub.f32 %v4346, %v4394
        %v4411 = vsub.f32 %v4347, %v4395
        %v4412 = vsub.f32 %v4348, %v4396
        %v4413 = vsub.f32 %v4349, %v4397
        %v4414 = vmul.f32 %v4398, %v4398
        %v4415 = vmul.f32 %v4399, %v4399
        %v4416 = vmul.f32 %v4400, %v4400
        %v4417 = vmul.f32 %v4401, %v4401
        %v4418 = vmul.f32 %v4402, %v4402
        %v4419 = vmul.f32 %v4403, %v4403
        %v4420 = vmul.f32 %v4404, %v4404
        %v4421 = vmul.f32 %v4405, %v4405
        %v4422 = vmul.f32 %v4406, %v4406
        %v4423 = vmul.f32 %v4407, %v4407
        %v4424 = vmul.f32 %v4408, %v4408
        %v4425 = vmul.f32 %v4409, %v4409
        %v4426 = vmul.f32 %v4410, %v4410
        %v4427 = vmul.f32 %v4411, %v4411
        %v4428 = vmul.f32 %v4412, %v4412
        %v4429 = vmul.f32 %v4413, %v4413
        %4430 = vadd.xlane.f32.xlu0 %v4414
        %v4431 = vpop.xlane.xlu0 %4430
        %4432 = vadd.xlane.f32.xlu0 %v4415
        %v4433 = vpop.xlane.xlu0 %4432
        %4434 = vadd.xlane.f32.xlu0 %v4416
        %v4435 = vpop.xlane.xlu0 %4434
        %4436 = vadd.xlane.f32.xlu0 %v4417
        %v4437 = vpop.xlane.xlu0 %4436
        %4438 = vadd.xlane.f32.xlu0 %v4418
        %v4439 = vpop.xlane.xlu0 %4438
        %4440 = vadd.xlane.f32.xlu0 %v4419
        %v4441 = vpop.xlane.xlu0 %4440
        %4442 = vadd.xlane.f32.xlu0 %v4420
        %v4443 = vpop.xlane.xlu0 %4442
        %4444 = vadd.xlane.f32.xlu0 %v4421
        %v4445 = vpop.xlane.xlu0 %4444
        %4446 = vadd.xlane.f32.xlu0 %v4422
        %v4447 = vpop.xlane.xlu0 %4446
        %4448 = vadd.xlane.f32.xlu0 %v4423
        %v4449 = vpop.xlane.xlu0 %4448
        %4450 = vadd.xlane.f32.xlu0 %v4424
        %v4451 = vpop.xlane.xlu0 %4450
        %4452 = vadd.xlane.f32.xlu0 %v4425
        %v4453 = vpop.xlane.xlu0 %4452
        %4454 = vadd.xlane.f32.xlu0 %v4426
        %v4455 = vpop.xlane.xlu0 %4454
        %4456 = vadd.xlane.f32.xlu0 %v4427
        %v4457 = vpop.xlane.xlu0 %4456
        %4458 = vadd.xlane.f32.xlu0 %v4428
        %v4459 = vpop.xlane.xlu0 %4458
        %4460 = vadd.xlane.f32.xlu0 %v4429
        %v4461 = vpop.xlane.xlu0 %4460
        %v4462 = vmul.f32 %v4431, %v3634
        %v4463 = vmul.f32 %v4433, %v3634
        %v4464 = vmul.f32 %v4435, %v3634
        %v4465 = vmul.f32 %v4437, %v3634
        %v4466 = vmul.f32 %v4439, %v3634
        %v4467 = vmul.f32 %v4441, %v3634
        %v4468 = vmul.f32 %v4443, %v3634
        %v4469 = vmul.f32 %v4445, %v3634
        %v4470 = vmul.f32 %v4447, %v3634
        %v4471 = vmul.f32 %v4449, %v3634
        %v4472 = vmul.f32 %v4451, %v3634
        %v4473 = vmul.f32 %v4453, %v3634
        %v4474 = vmul.f32 %v4455, %v3634
        %v4475 = vmul.f32 %v4457, %v3634
        %v4476 = vmul.f32 %v4459, %v3634
        %v4477 = vmul.f32 %v4461, %v3634
        %v4478 = vadd.f32 %v4462, 1e-05
        %v4479 = vadd.f32 %v4463, 1e-05
        %v4480 = vadd.f32 %v4464, 1e-05
        %v4481 = vadd.f32 %v4465, 1e-05
        %v4482 = vadd.f32 %v4466, 1e-05
        %v4483 = vadd.f32 %v4467, 1e-05
        %v4484 = vadd.f32 %v4468, 1e-05
        %v4485 = vadd.f32 %v4469, 1e-05
        %v4486 = vadd.f32 %v4470, 1e-05
        %v4487 = vadd.f32 %v4471, 1e-05
        %v4488 = vadd.f32 %v4472, 1e-05
        %v4489 = vadd.f32 %v4473, 1e-05
        %v4490 = vadd.f32 %v4474, 1e-05
        %v4491 = vadd.f32 %v4475, 1e-05
        %v4492 = vadd.f32 %v4476, 1e-05
        %v4493 = vadd.f32 %v4477, 1e-05
        %v4494 = vrsqrt.pop %v4478
        %v4495 = vrsqrt.pop %v4479
        %v4496 = vrsqrt.pop %v4480
        %v4497 = vrsqrt.pop %v4481
        %v4498 = vrsqrt.pop %v4482
        %v4499 = vrsqrt.pop %v4483
        %v4500 = vrsqrt.pop %v4484
        %v4501 = vrsqrt.pop %v4485
        %v4502 = vrsqrt.pop %v4486
        %v4503 = vrsqrt.pop %v4487
        %v4504 = vrsqrt.pop %v4488
        %v4505 = vrsqrt.pop %v4489
        %v4506 = vrsqrt.pop %v4490
        %v4507 = vrsqrt.pop %v4491
        %v4508 = vrsqrt.pop %v4492
        %v4509 = vrsqrt.pop %v4493
        %v4510 = vmul.f32 %v4398, %v4494
        %v4511 = vmul.f32 %v4399, %v4495
        %v4512 = vmul.f32 %v4400, %v4496
        %v4513 = vmul.f32 %v4401, %v4497
        %v4514 = vmul.f32 %v4402, %v4498
        %v4515 = vmul.f32 %v4403, %v4499
        %v4516 = vmul.f32 %v4404, %v4500
        %v4517 = vmul.f32 %v4405, %v4501
        %v4518 = vmul.f32 %v4406, %v4502
        %v4519 = vmul.f32 %v4407, %v4503
        %v4520 = vmul.f32 %v4408, %v4504
        %v4521 = vmul.f32 %v4409, %v4505
        %v4522 = vmul.f32 %v4410, %v4506
        %v4523 = vmul.f32 %v4411, %v4507
        %v4524 = vmul.f32 %v4412, %v4508
        %v4525 = vmul.f32 %v4413, %v4509
        %v4526 = vld [vmem:[%s12] sm:$0x1]
        %v4528 = vlaneseq
        %v4529 = vshrl.u32 %v4528, 7
        %v4530 = vsub.s32 0, %v4529
        %v4531 = vrot.slane %v4526, %v4530
        %v4533 = vmul.f32 %v4510, %v4531
        %v4534 = vmul.f32 %v4511, %v4531
        %v4535 = vmul.f32 %v4512, %v4531
        %v4536 = vmul.f32 %v4513, %v4531
        %v4537 = vmul.f32 %v4514, %v4531
        %v4538 = vmul.f32 %v4515, %v4531
        %v4539 = vmul.f32 %v4516, %v4531
        %v4540 = vmul.f32 %v4517, %v4531
        %v4541 = vmul.f32 %v4518, %v4531
        %v4542 = vmul.f32 %v4519, %v4531
        %v4543 = vmul.f32 %v4520, %v4531
        %v4544 = vmul.f32 %v4521, %v4531
        %v4545 = vmul.f32 %v4522, %v4531
        %v4546 = vmul.f32 %v4523, %v4531
        %v4547 = vmul.f32 %v4524, %v4531
        %v4548 = vmul.f32 %v4525, %v4531
        %v4549 = vld [vmem:[%s13] sm:$0x1]
        %v4551 = vlaneseq
        %v4552 = vshrl.u32 %v4551, 7
        %v4553 = vsub.s32 0, %v4552
        %v4554 = vrot.slane %v4549, %v4553
        %v4556 = vadd.f32 %v4533, %v4554
        %v4557 = vadd.f32 %v4534, %v4554
        %v4558 = vadd.f32 %v4535, %v4554
        %v4559 = vadd.f32 %v4536, %v4554
        %v4560 = vadd.f32 %v4537, %v4554
        %v4561 = vadd.f32 %v4538, %v4554
        %v4562 = vadd.f32 %v4539, %v4554
        %v4563 = vadd.f32 %v4540, %v4554
        %v4564 = vadd.f32 %v4541, %v4554
        %v4565 = vadd.f32 %v4542, %v4554
        %v4566 = vadd.f32 %v4543, %v4554
        %v4567 = vadd.f32 %v4544, %v4554
        %v4568 = vadd.f32 %v4545, %v4554
        %v4569 = vadd.f32 %v4546, %v4554
        %v4570 = vadd.f32 %v4547, %v4554
        %v4571 = vadd.f32 %v4548, %v4554
        %4572 = vst [vmem:[%s630] sm:$0xff] %v4556
        %4573 = vst [vmem:[%s630 + $0x8] sm:$0xff] %v4557
        %4574 = vst [vmem:[%s630 + $0x10] sm:$0xff] %v4558
        %4575 = vst [vmem:[%s630 + $0x18] sm:$0xff] %v4559
        %4576 = vst [vmem:[%s630 + $0x20] sm:$0xff] %v4560
        %4577 = vst [vmem:[%s630 + $0x28] sm:$0xff] %v4561
        %4578 = vst [vmem:[%s630 + $0x30] sm:$0xff] %v4562
        %4579 = vst [vmem:[%s630 + $0x38] sm:$0xff] %v4563
        %4580 = vst [vmem:[%s630 + $0x40] sm:$0xff] %v4564
        %4581 = vst [vmem:[%s630 + $0x48] sm:$0xff] %v4565
        %4582 = vst [vmem:[%s630 + $0x50] sm:$0xff] %v4566
        %4583 = vst [vmem:[%s630 + $0x58] sm:$0xff] %v4567
        %4584 = vst [vmem:[%s630 + $0x60] sm:$0xff] %v4568
        %4585 = vst [vmem:[%s630 + $0x68] sm:$0xff] %v4569
        %4586 = vst [vmem:[%s630 + $0x70] sm:$0xff] %v4570
        %4587 = vst [vmem:[%s630 + $0x78] sm:$0xff] %v4571
        %s4588 = sand.u32 %s365, 1
        %s4589 = scalar_lea.sflag [#allocation4], %s4588
        %s4590 = sand.u32 %s365, 1
        %s4591 = smul.addr %s4590, 128
        %s4592 = scalar_lea.vmem [#allocation16], %s4591
        // Predicated region
        $region109: #{tpu_custom_call.1} parent=75 // pred_check
          %p4593 = pneg %p375
        $region110: #{tpu_custom_call.1} parent=75 // pred_check_branch
          %4595 = sbr.rel (%p4593) target = $region112
        $region111: #{tpu_custom_call.1} parent=75 // pred_region
          %s4596 = smul.u32 16, %s42
          %s4598 = ssub.s32 2048, 2048
          %4599 = vsyncadd %s4589, %s4598
          %s4600 = smul.addr %s41, 16
          %s4601 = sadd.s32 %s4596, %s4600
          %s4602 = smul.addr %s4601, 128
          %s4603 = scalar_lea.hbm %s14, %s4602
          %s4604 = sshll.u32 %s4592, 4
          %s4605 = int_to_ptr.vmem [resolvable:$true] %s4604
          %4610 = dma.vmem_to_hbm [thread:$0]  %s4605, 2048, %s4603, %s4589, 128, 128, 8
        $region112: #{tpu_custom_call.1} parent=75 // pred_fallthru
          _
      $region76: #{tpu_custom_call.1} parent=5 // pred_fallthru
        _
      %p4611 = scmp.le.s32.totalorder 2, %s32
      // Predicated region
      $region113: #{tpu_custom_call.1} parent=5 // pred_check
        %p4612 = pneg %p4611
      $region114: #{tpu_custom_call.1} parent=5 // pred_check_branch
        %4614 = sbr.rel (%p4612) target = $region116
      $region115: #{tpu_custom_call.1} parent=5 // pred_region
        %s4615 = ssub.s32 %s32, 2
        // Predicated region
        $region117: #{tpu_custom_call.1} parent=115 // pred_check
          %p4616 = pneg %p381
        $region118: #{tpu_custom_call.1} parent=115 // pred_check_branch
          %4618 = sbr.rel (%p4616) target = $region120
        $region119: #{tpu_custom_call.1} parent=115 // pred_region
          %s4619 = sand.u32 %s366, 1
          %s4620 = scalar_lea.sflag [#allocation4], %s4619
          %s4621 = sand.u32 %s366, 1
          %s4622 = smul.addr %s4621, 128
          %s4623 = scalar_lea.vmem [#allocation16], %s4622
          %4624 = dma.done %s4620, 2048
        $region120: #{tpu_custom_call.1} parent=115 // pred_fallthru
          _
      $region116: #{tpu_custom_call.1} parent=5 // pred_fallthru
        _
    $region6: #{tpu_custom_call.1} parent=1 // loop_footer
      %s36 = sadd.s32 1, %s32
    $region7: #{tpu_custom_call.1} parent=1 // loop_footer_branch
      %31 = sbr.rel target = $region3
    $region8: #{tpu_custom_call.1} parent=1 // loop_exit
      _
    %4625 = vsyncpa [#allocation3], 1
    %s4626 = scalar_lea.sflag [#allocation3], 1
    %4627 = vsyncpa %s4626, 1
    %4628 = vsyncpa [#allocation6], 1
    %s4629 = scalar_lea.sflag [#allocation6], 1
    %4630 = vsyncpa %s4629, 1
    %4631 = vsyncpa [#allocation9], 1
    %4632 = vsyncpa [#allocation12], 1
    %4633 = vsyncpa [#allocation15], 1
    %4634 = vsyncpa [#allocation4], 1
    %s4635 = scalar_lea.sflag [#allocation4], 1
    %4636 = vsyncpa %s4635, 1

</llo_original>
